<compile_context>
chip_gen: v7x
topology: tpu7x:2x2x1
jax: 0.10.0
libtpu: 0.0.40
codegen_flags: <defaults>
</compile_context>

<pallas_src>
import functools

import jax
import jax.numpy as jnp
import numpy as np
from jax.experimental import pallas as pl
from jax.experimental.pallas import tpu as pltpu

# Per the perf review: set to jnp.bfloat16 on v6e/v7x to halve weight/activation
# traffic and run the MXU at native bf16 rate (accumulation, BN/ReLU epilogue and
# the residual add stay f32).  Default f32 = exact parity with PyTorch.
MATMUL_DTYPE = jnp.float32
_BN_EPS = 1e-5


# ---------------------------------------------------------------------------
# Fused Pallas kernel
# ---------------------------------------------------------------------------
def _basic_res_kernel(x_ref, w_ref, aff_ref, mask_ref, o_ref, *, width):
    """Fused BasicResLayer for one batch block.

    x_ref    : (BT, C, P)     lane-dense input block (P = H*W)
    w_ref    : (2, 9, C, C)   per-tap conv weights: [conv_a/b, kh*3+kw, cout, cin]
    aff_ref  : (C, 3)         [:,0]=BN scale, [:,1]=BN shift (conva bias folded),
                              [:,2]=convb bias
    mask_ref : (9, 1, P)      per-tap border masks (1 inside, 0 where the shifted
                              source pixel falls in the zero padding)
    o_ref    : (BT, C, P)     lane-dense output block
    width    : W (static)     needed for the per-tap flat roll amounts
    """
    BT, C, P = x_ref.shape

    # Per-channel affine (BN + conva bias) and convb bias — loaded once.
    scale = aff_ref[:, 0:1]            # (C, 1)
    shift = aff_ref[:, 1:2]
    bias_b = aff_ref[:, 2:3]

    # Per-tap weights / masks / roll amounts, hoisted out of all loops.
    wa = [w_ref[0, t] for t in range(9)]               # 9 x (C, C)
    wb = [w_ref[1, t] for t in range(9)]
    masks = [mask_ref[t] for t in range(9)]            # 9 x (1, P)
    # Tap (kh, kw) needs x shifted by (dh, dw) = (kh-1, kw-1); on the flat
    # (C, P) layout that is a lane roll by -(dh*W + dw) (mod P), with the border
    # mask zeroing the positions whose source pixel lies in the padding.
    shifts = [(-((t // 3 - 1) * width + (t % 3 - 1))) % P for t in range(9)]

    def conv3x3(v, w_taps):
        # v: (C, P) activation in MATMUL_DTYPE.  3x3 same-padding conv as nine
        # accumulated (C,C)@(C,P) MXU matmuls; tap inputs are lane rolls (XLU)
        # of the flat activation, masked at the image border (VPU).
        acc = jnp.zeros((C, P), jnp.float32)
        for t in range(9):
            if t == 4:                                  # centre tap: identity
                src = v
            else:
                src = pltpu.roll(v, shifts[t], 1) * masks[t]
            acc = acc + jnp.dot(w_taps[t], src,
                                preferred_element_type=jnp.float32)
        return acc

    for b in range(BT):                                 # static unroll over block
        xb = x_ref[b]                                   # (C, P) f32
        # ---- conva + folded BN(eval) + ReLU (f32 epilogue) ------------------
        y = conv3x3(xb.astype(MATMUL_DTYPE), wa)
        y = jnp.maximum(y * scale + shift, 0.0)
        # ---- convb + bias + residual add, lane-dense store ------------------
        z = conv3x3(y.astype(MATMUL_DTYPE), wb)
        o_ref[b] = (xb + z + bias_b).astype(o_ref.dtype)


# ---------------------------------------------------------------------------
# Wrapper
# ---------------------------------------------------------------------------
def _pick_block_batch(batch, max_bt=8):
    """Largest divisor of `batch` that keeps the grid at >= 4 steps (if possible)."""
    cap = max(1, min(max_bt, batch // 4))
    for bt in range(cap, 0, -1):
        if batch % bt == 0:
            return bt
    return 1


def basic_res_layer(x, params):
    """x: (B, C, H, W) f32 -> (B, C, H, W) f32 (NCHW)."""
    B, C, H, W = x.shape
    P = H * W
    # Lane-dense output / aligned tap math assumptions (see perf review).
    assert P % 128 == 0, f"H*W={P} must be a multiple of 128 (pad spatially)"
    min_c = 8 if MATMUL_DTYPE == jnp.float32 else 16
    assert C % min_c == 0, f"C={C} must be a multiple of {min_c} for {MATMUL_DTYPE}"

    wa, ba = params["conva"]
    wb, bb = params["convb"]
    gamma, beta, rmean, rvar = params["bn"]

    # Fold conva bias + eval-mode BatchNorm into a per-channel affine.
    scale = gamma / jnp.sqrt(rvar + _BN_EPS)
    shift = beta + (ba - rmean) * scale

    # Pack PyTorch (Cout, Cin, 3, 3) weights as per-tap (C, C) matrices:
    # w_taps[conv, kh*3 + kw, co, ci] = w[co, ci, kh, kw]
    wa_t = jnp.transpose(wa, (2, 3, 0, 1)).reshape(9, C, C)
    wb_t = jnp.transpose(wb, (2, 3, 0, 1)).reshape(9, C, C)
    w_taps = jnp.stack([wa_t, wb_t], axis=0).astype(MATMUL_DTYPE)      # (2, 9, C, C)
    aff = jnp.stack([scale, shift, bb], axis=1).astype(jnp.float32)    # (C, 3)

    # Per-tap border masks (constant, tiny): valid iff the (dh, dw)-shifted source
    # pixel is inside the image.
    hh, ww = np.arange(H), np.arange(W)
    m = []
    for kh in range(3):
        for kw in range(3):
            dh, dw = kh - 1, kw - 1
            vh = (hh + dh >= 0) & (hh + dh < H)
            vw = (ww + dw >= 0) & (ww + dw < W)
            m.append(np.outer(vh, vw).reshape(-1))
    masks = jnp.asarray(np.stack(m)[:, None, :], dtype=MATMUL_DTYPE)   # (9, 1, P)

    # Free metadata reshape of contiguous NCHW -> lane-dense (B, C, H*W).
    x2 = x.reshape(B, C, P)
    BT = _pick_block_batch(B)
    grid = (B // BT,)

    out = pl.pallas_call(
        functools.partial(_basic_res_kernel, width=W),
        out_shape=jax.ShapeDtypeStruct((B, C, P), x.dtype),
        grid=grid,
        in_specs=[
            pl.BlockSpec((BT, C, P), lambda i: (i, 0, 0)),
            pl.BlockSpec((2, 9, C, C), lambda i: (0, 0, 0, 0)),
            pl.BlockSpec((C, 3), lambda i: (0, 0)),
            pl.BlockSpec((9, 1, P), lambda i: (0, 0, 0)),
        ],
        out_specs=pl.BlockSpec((BT, C, P), lambda i: (i, 0, 0)),
        compiler_params=pltpu.CompilerParams(
            dimension_semantics=("parallel",),
            # Tiny footprint (few hundred KiB); explicit limit keeps us well inside
            # v7x's 64 MiB physical / 32 MiB default scoped VMEM.
            vmem_limit_bytes=32 * 1024 * 1024,
        ),
    )(x2, w_taps, aff, masks)
    return out.reshape(B, C, H, W)


# ---------------------------------------------------------------------------
# Pure-JAX reference (for correctness check)
# ---------------------------------------------------------------------------
def _reference_forward(x, params):
    wa, ba = params["conva"]
    wb, bb = params["convb"]
    gamma, beta, rmean, rvar = params["bn"]
    dn = ("NCHW", "OIHW", "NCHW")
    y = jax.lax.conv_general_dilated(
        x, wa, (1, 1), ((1, 1), (1, 1)), dimension_numbers=dn,
        precision=jax.lax.Precision.HIGHEST) + ba.reshape(1, -1, 1, 1)
    y = ((y - rmean.reshape(1, -1, 1, 1)) / jnp.sqrt(rvar.reshape(1, -1, 1, 1) + _BN_EPS)
         * gamma.reshape(1, -1, 1, 1) + beta.reshape(1, -1, 1, 1))
    y = jnp.maximum(y, 0.0)
    z = jax.lax.conv_general_dilated(
        y, wb, (1, 1), ((1, 1), (1, 1)), dimension_numbers=dn,
        precision=jax.lax.Precision.HIGHEST) + bb.reshape(1, -1, 1, 1)
    return x + z


# ---------------------------------------------------------------------------
if __name__ == "__main__":
    # feats=8 -> 8 sublanes (f32); H*W=256 -> lane-dense; B=8 -> BT=2, grid of 4.
    B, C, H, W = 8, 8, 16, 16

    key = jax.random.PRNGKey(0)
    kx, kwa, kba, kwb, kbb, kg, kbe, krm, krv = jax.random.split(key, 9)

    x = jax.random.normal(kx, (B, C, H, W), jnp.float32)
    params = {
        "conva": (jax.random.normal(kwa, (C, C, 3, 3), jnp.float32) * (9 * C) ** -0.5,
                  0.05 * jax.random.normal(kba, (C,), jnp.float32)),
        "convb": (jax.random.normal(kwb, (C, C, 3, 3), jnp.float32) * (9 * C) ** -0.5,
                  0.05 * jax.random.normal(kbb, (C,), jnp.float32)),
        "bn": (1.0 + 0.1 * jax.random.normal(kg, (C,), jnp.float32),
               0.1 * jax.random.normal(kbe, (C,), jnp.float32),
               0.1 * jax.random.normal(krm, (C,), jnp.float32),
               0.5 + jax.random.uniform(krv, (C,), jnp.float32)),
    }

    fwd = jax.jit(lambda x_: basic_res_layer(x_, params))
    out = fwd(x)
    jax.block_until_ready(out)

    assert out.shape == (B, C, H, W), out.shape
    assert out.dtype == jnp.float32

    ref = _reference_forward(x, params)
    # f32 path matches tightly; tolerance left at 2e-2 so the bf16 switch
    # (MATMUL_DTYPE) remains usable without editing the test.
    np.testing.assert_allclose(np.asarray(out), np.asarray(ref), rtol=2e-2, atol=2e-2)

    print("KERNEL_OK")
</pallas_src>

<mosaic_0001>
module attributes {stable_mosaic.version = 11 : i64} {
  func.func @_basic_res_kernel(%arg0: i32, %arg1: memref<2x8x256xf32, #tpu.memory_space<vmem>>, %arg2: memref<2x9x8x8xf32, #tpu.memory_space<vmem>>, %arg3: memref<8x3xf32, #tpu.memory_space<vmem>>, %arg4: memref<9x1x256xf32, #tpu.memory_space<vmem>>, %arg5: memref<2x8x256xf32, #tpu.memory_space<vmem>>) attributes {dimension_semantics = [#tpu.dimension_semantics<parallel>], iteration_bounds = array<i64: 4>, scalar_prefetch = 0 : i64, scratch_operands = 0 : i64, tpu.core_type = #tpu.core_type<tc>, window_params = [{transform_indices = @transform_0, window_bounds = array<i64: 2, 8, 256>}, {pipeline_mode = #tpu.pipeline_mode<synchronous>, transform_indices = @transform_1, window_bounds = array<i64: 2, 9, 8, 8>}, {pipeline_mode = #tpu.pipeline_mode<synchronous>, transform_indices = @transform_2, window_bounds = array<i64: 8, 3>}, {pipeline_mode = #tpu.pipeline_mode<synchronous>, transform_indices = @transform_3, window_bounds = array<i64: 9, 1, 256>}, {transform_indices = @transform_4, window_bounds = array<i64: 2, 8, 256>}]} {
    %c0 = arith.constant 0 : index
    %c0_0 = arith.constant 0 : index
    %0 = vector.load %arg3[%c0, %c0_0] : memref<8x3xf32, #tpu.memory_space<vmem>>, vector<8x1xf32>
    %c0_1 = arith.constant 0 : index
    %c1 = arith.constant 1 : index
    %1 = vector.load %arg3[%c0_1, %c1] : memref<8x3xf32, #tpu.memory_space<vmem>>, vector<8x1xf32>
    %c0_2 = arith.constant 0 : index
    %c2 = arith.constant 2 : index
    %2 = vector.load %arg3[%c0_2, %c2] : memref<8x3xf32, #tpu.memory_space<vmem>>, vector<8x1xf32>
    %c0_3 = arith.constant 0 : index
    %c0_4 = arith.constant 0 : index
    %c0_5 = arith.constant 0 : index
    %c0_6 = arith.constant 0 : index
    %3 = vector.load %arg2[%c0_3, %c0_4, %c0_5, %c0_6] : memref<2x9x8x8xf32, #tpu.memory_space<vmem>>, vector<1x1x8x8xf32>
    %4 = vector.shape_cast %3 : vector<1x1x8x8xf32> to vector<8x8xf32>
    %c0_7 = arith.constant 0 : index
    %c1_8 = arith.constant 1 : index
    %c0_9 = arith.constant 0 : index
    %c0_10 = arith.constant 0 : index
    %5 = vector.load %arg2[%c0_7, %c1_8, %c0_9, %c0_10] : memref<2x9x8x8xf32, #tpu.memory_space<vmem>>, vector<1x1x8x8xf32>
    %6 = vector.shape_cast %5 : vector<1x1x8x8xf32> to vector<8x8xf32>
    %c0_11 = arith.constant 0 : index
    %c2_12 = arith.constant 2 : index
    %c0_13 = arith.constant 0 : index
    %c0_14 = arith.constant 0 : index
    %7 = vector.load %arg2[%c0_11, %c2_12, %c0_13, %c0_14] : memref<2x9x8x8xf32, #tpu.memory_space<vmem>>, vector<1x1x8x8xf32>
    %8 = vector.shape_cast %7 : vector<1x1x8x8xf32> to vector<8x8xf32>
    %c0_15 = arith.constant 0 : index
    %c3 = arith.constant 3 : index
    %c0_16 = arith.constant 0 : index
    %c0_17 = arith.constant 0 : index
    %9 = vector.load %arg2[%c0_15, %c3, %c0_16, %c0_17] : memref<2x9x8x8xf32, #tpu.memory_space<vmem>>, vector<1x1x8x8xf32>
    %10 = vector.shape_cast %9 : vector<1x1x8x8xf32> to vector<8x8xf32>
    %c0_18 = arith.constant 0 : index
    %c4 = arith.constant 4 : index
    %c0_19 = arith.constant 0 : index
    %c0_20 = arith.constant 0 : index
    %11 = vector.load %arg2[%c0_18, %c4, %c0_19, %c0_20] : memref<2x9x8x8xf32, #tpu.memory_space<vmem>>, vector<1x1x8x8xf32>
    %12 = vector.shape_cast %11 : vector<1x1x8x8xf32> to vector<8x8xf32>
    %c0_21 = arith.constant 0 : index
    %c5 = arith.constant 5 : index
    %c0_22 = arith.constant 0 : index
    %c0_23 = arith.constant 0 : index
    %13 = vector.load %arg2[%c0_21, %c5, %c0_22, %c0_23] : memref<2x9x8x8xf32, #tpu.memory_space<vmem>>, vector<1x1x8x8xf32>
    %14 = vector.shape_cast %13 : vector<1x1x8x8xf32> to vector<8x8xf32>
    %c0_24 = arith.constant 0 : index
    %c6 = arith.constant 6 : index
    %c0_25 = arith.constant 0 : index
    %c0_26 = arith.constant 0 : index
    %15 = vector.load %arg2[%c0_24, %c6, %c0_25, %c0_26] : memref<2x9x8x8xf32, #tpu.memory_space<vmem>>, vector<1x1x8x8xf32>
    %16 = vector.shape_cast %15 : vector<1x1x8x8xf32> to vector<8x8xf32>
    %c0_27 = arith.constant 0 : index
    %c7 = arith.constant 7 : index
    %c0_28 = arith.constant 0 : index
    %c0_29 = arith.constant 0 : index
    %17 = vector.load %arg2[%c0_27, %c7, %c0_28, %c0_29] : memref<2x9x8x8xf32, #tpu.memory_space<vmem>>, vector<1x1x8x8xf32>
    %18 = vector.shape_cast %17 : vector<1x1x8x8xf32> to vector<8x8xf32>
    %c0_30 = arith.constant 0 : index
    %c8 = arith.constant 8 : index
    %c0_31 = arith.constant 0 : index
    %c0_32 = arith.constant 0 : index
    %19 = vector.load %arg2[%c0_30, %c8, %c0_31, %c0_32] : memref<2x9x8x8xf32, #tpu.memory_space<vmem>>, vector<1x1x8x8xf32>
    %20 = vector.shape_cast %19 : vector<1x1x8x8xf32> to vector<8x8xf32>
    %c1_33 = arith.constant 1 : index
    %c0_34 = arith.constant 0 : index
    %c0_35 = arith.constant 0 : index
    %c0_36 = arith.constant 0 : index
    %21 = vector.load %arg2[%c1_33, %c0_34, %c0_35, %c0_36] : memref<2x9x8x8xf32, #tpu.memory_space<vmem>>, vector<1x1x8x8xf32>
    %22 = vector.shape_cast %21 : vector<1x1x8x8xf32> to vector<8x8xf32>
    %c1_37 = arith.constant 1 : index
    %c1_38 = arith.constant 1 : index
    %c0_39 = arith.constant 0 : index
    %c0_40 = arith.constant 0 : index
    %23 = vector.load %arg2[%c1_37, %c1_38, %c0_39, %c0_40] : memref<2x9x8x8xf32, #tpu.memory_space<vmem>>, vector<1x1x8x8xf32>
    %24 = vector.shape_cast %23 : vector<1x1x8x8xf32> to vector<8x8xf32>
    %c1_41 = arith.constant 1 : index
    %c2_42 = arith.constant 2 : index
    %c0_43 = arith.constant 0 : index
    %c0_44 = arith.constant 0 : index
    %25 = vector.load %arg2[%c1_41, %c2_42, %c0_43, %c0_44] : memref<2x9x8x8xf32, #tpu.memory_space<vmem>>, vector<1x1x8x8xf32>
    %26 = vector.shape_cast %25 : vector<1x1x8x8xf32> to vector<8x8xf32>
    %c1_45 = arith.constant 1 : index
    %c3_46 = arith.constant 3 : index
    %c0_47 = arith.constant 0 : index
    %c0_48 = arith.constant 0 : index
    %27 = vector.load %arg2[%c1_45, %c3_46, %c0_47, %c0_48] : memref<2x9x8x8xf32, #tpu.memory_space<vmem>>, vector<1x1x8x8xf32>
    %28 = vector.shape_cast %27 : vector<1x1x8x8xf32> to vector<8x8xf32>
    %c1_49 = arith.constant 1 : index
    %c4_50 = arith.constant 4 : index
    %c0_51 = arith.constant 0 : index
    %c0_52 = arith.constant 0 : index
    %29 = vector.load %arg2[%c1_49, %c4_50, %c0_51, %c0_52] : memref<2x9x8x8xf32, #tpu.memory_space<vmem>>, vector<1x1x8x8xf32>
    %30 = vector.shape_cast %29 : vector<1x1x8x8xf32> to vector<8x8xf32>
    %c1_53 = arith.constant 1 : index
    %c5_54 = arith.constant 5 : index
    %c0_55 = arith.constant 0 : index
    %c0_56 = arith.constant 0 : index
    %31 = vector.load %arg2[%c1_53, %c5_54, %c0_55, %c0_56] : memref<2x9x8x8xf32, #tpu.memory_space<vmem>>, vector<1x1x8x8xf32>
    %32 = vector.shape_cast %31 : vector<1x1x8x8xf32> to vector<8x8xf32>
    %c1_57 = arith.constant 1 : index
    %c6_58 = arith.constant 6 : index
    %c0_59 = arith.constant 0 : index
    %c0_60 = arith.constant 0 : index
    %33 = vector.load %arg2[%c1_57, %c6_58, %c0_59, %c0_60] : memref<2x9x8x8xf32, #tpu.memory_space<vmem>>, vector<1x1x8x8xf32>
    %34 = vector.shape_cast %33 : vector<1x1x8x8xf32> to vector<8x8xf32>
    %c1_61 = arith.constant 1 : index
    %c7_62 = arith.constant 7 : index
    %c0_63 = arith.constant 0 : index
    %c0_64 = arith.constant 0 : index
    %35 = vector.load %arg2[%c1_61, %c7_62, %c0_63, %c0_64] : memref<2x9x8x8xf32, #tpu.memory_space<vmem>>, vector<1x1x8x8xf32>
    %36 = vector.shape_cast %35 : vector<1x1x8x8xf32> to vector<8x8xf32>
    %c1_65 = arith.constant 1 : index
    %c8_66 = arith.constant 8 : index
    %c0_67 = arith.constant 0 : index
    %c0_68 = arith.constant 0 : index
    %37 = vector.load %arg2[%c1_65, %c8_66, %c0_67, %c0_68] : memref<2x9x8x8xf32, #tpu.memory_space<vmem>>, vector<1x1x8x8xf32>
    %38 = vector.shape_cast %37 : vector<1x1x8x8xf32> to vector<8x8xf32>
    %c0_69 = arith.constant 0 : index
    %c0_70 = arith.constant 0 : index
    %c0_71 = arith.constant 0 : index
    %39 = vector.load %arg4[%c0_69, %c0_70, %c0_71] : memref<9x1x256xf32, #tpu.memory_space<vmem>>, vector<1x1x256xf32>
    %40 = vector.shape_cast %39 : vector<1x1x256xf32> to vector<1x256xf32>
    %c1_72 = arith.constant 1 : index
    %c0_73 = arith.constant 0 : index
    %c0_74 = arith.constant 0 : index
    %41 = vector.load %arg4[%c1_72, %c0_73, %c0_74] : memref<9x1x256xf32, #tpu.memory_space<vmem>>, vector<1x1x256xf32>
    %42 = vector.shape_cast %41 : vector<1x1x256xf32> to vector<1x256xf32>
    %c2_75 = arith.constant 2 : index
    %c0_76 = arith.constant 0 : index
    %c0_77 = arith.constant 0 : index
    %43 = vector.load %arg4[%c2_75, %c0_76, %c0_77] : memref<9x1x256xf32, #tpu.memory_space<vmem>>, vector<1x1x256xf32>
    %44 = vector.shape_cast %43 : vector<1x1x256xf32> to vector<1x256xf32>
    %c3_78 = arith.constant 3 : index
    %c0_79 = arith.constant 0 : index
    %c0_80 = arith.constant 0 : index
    %45 = vector.load %arg4[%c3_78, %c0_79, %c0_80] : memref<9x1x256xf32, #tpu.memory_space<vmem>>, vector<1x1x256xf32>
    %46 = vector.shape_cast %45 : vector<1x1x256xf32> to vector<1x256xf32>
    %c5_81 = arith.constant 5 : index
    %c0_82 = arith.constant 0 : index
    %c0_83 = arith.constant 0 : index
    %47 = vector.load %arg4[%c5_81, %c0_82, %c0_83] : memref<9x1x256xf32, #tpu.memory_space<vmem>>, vector<1x1x256xf32>
    %48 = vector.shape_cast %47 : vector<1x1x256xf32> to vector<1x256xf32>
    %c6_84 = arith.constant 6 : index
    %c0_85 = arith.constant 0 : index
    %c0_86 = arith.constant 0 : index
    %49 = vector.load %arg4[%c6_84, %c0_85, %c0_86] : memref<9x1x256xf32, #tpu.memory_space<vmem>>, vector<1x1x256xf32>
    %50 = vector.shape_cast %49 : vector<1x1x256xf32> to vector<1x256xf32>
    %c7_87 = arith.constant 7 : index
    %c0_88 = arith.constant 0 : index
    %c0_89 = arith.constant 0 : index
    %51 = vector.load %arg4[%c7_87, %c0_88, %c0_89] : memref<9x1x256xf32, #tpu.memory_space<vmem>>, vector<1x1x256xf32>
    %52 = vector.shape_cast %51 : vector<1x1x256xf32> to vector<1x256xf32>
    %c8_90 = arith.constant 8 : index
    %c0_91 = arith.constant 0 : index
    %c0_92 = arith.constant 0 : index
    %53 = vector.load %arg4[%c8_90, %c0_91, %c0_92] : memref<9x1x256xf32, #tpu.memory_space<vmem>>, vector<1x1x256xf32>
    %54 = vector.shape_cast %53 : vector<1x1x256xf32> to vector<1x256xf32>
    %c0_93 = arith.constant 0 : index
    %c0_94 = arith.constant 0 : index
    %c0_95 = arith.constant 0 : index
    %55 = vector.load %arg1[%c0_93, %c0_94, %c0_95] : memref<2x8x256xf32, #tpu.memory_space<vmem>>, vector<1x8x256xf32>
    %56 = vector.shape_cast %55 : vector<1x8x256xf32> to vector<8x256xf32>
    %cst = arith.constant 0.000000e+00 : f32
    %57 = vector.broadcast %cst : f32 to vector<8x256xf32>
    %c17_i32 = arith.constant 17 : i32
    %58 = tpu.dynamic_rotate %56 by %c17_i32 dim 1 : vector<8x256xf32>, i32 -> vector<8x256xf32>
    %59 = vector.broadcast %40 : vector<1x256xf32> to vector<8x256xf32>
    %60 = arith.mulf %58, %59 : vector<8x256xf32>
    %cst_96 = arith.constant dense<0.000000e+00> : vector<8x256xf32>
    %61 = tpu.matmul %4, %60, %cst_96 {dimension_numbers = #tpu.dot_dimension_numbers<[1], [0], [0], [1], [0, 0, 1, 1], [], []>} : vector<8x8xf32>, vector<8x256xf32>, vector<8x256xf32> -> vector<8x256xf32>
    %62 = arith.addf %57, %61 : vector<8x256xf32>
    %c16_i32 = arith.constant 16 : i32
    %63 = tpu.dynamic_rotate %56 by %c16_i32 dim 1 : vector<8x256xf32>, i32 -> vector<8x256xf32>
    %64 = vector.broadcast %42 : vector<1x256xf32> to vector<8x256xf32>
    %65 = arith.mulf %63, %64 : vector<8x256xf32>
    %cst_97 = arith.constant dense<0.000000e+00> : vector<8x256xf32>
    %66 = tpu.matmul %6, %65, %cst_97 {dimension_numbers = #tpu.dot_dimension_numbers<[1], [0], [0], [1], [0, 0, 1, 1], [], []>} : vector<8x8xf32>, vector<8x256xf32>, vector<8x256xf32> -> vector<8x256xf32>
    %67 = arith.addf %62, %66 : vector<8x256xf32>
    %c15_i32 = arith.constant 15 : i32
    %68 = tpu.dynamic_rotate %56 by %c15_i32 dim 1 : vector<8x256xf32>, i32 -> vector<8x256xf32>
    %69 = vector.broadcast %44 : vector<1x256xf32> to vector<8x256xf32>
    %70 = arith.mulf %68, %69 : vector<8x256xf32>
    %cst_98 = arith.constant dense<0.000000e+00> : vector<8x256xf32>
    %71 = tpu.matmul %8, %70, %cst_98 {dimension_numbers = #tpu.dot_dimension_numbers<[1], [0], [0], [1], [0, 0, 1, 1], [], []>} : vector<8x8xf32>, vector<8x256xf32>, vector<8x256xf32> -> vector<8x256xf32>
    %72 = arith.addf %67, %71 : vector<8x256xf32>
    %c1_i32 = arith.constant 1 : i32
    %73 = tpu.dynamic_rotate %56 by %c1_i32 dim 1 : vector<8x256xf32>, i32 -> vector<8x256xf32>
    %74 = vector.broadcast %46 : vector<1x256xf32> to vector<8x256xf32>
    %75 = arith.mulf %73, %74 : vector<8x256xf32>
    %cst_99 = arith.constant dense<0.000000e+00> : vector<8x256xf32>
    %76 = tpu.matmul %10, %75, %cst_99 {dimension_numbers = #tpu.dot_dimension_numbers<[1], [0], [0], [1], [0, 0, 1, 1], [], []>} : vector<8x8xf32>, vector<8x256xf32>, vector<8x256xf32> -> vector<8x256xf32>
    %77 = arith.addf %72, %76 : vector<8x256xf32>
    %cst_100 = arith.constant dense<0.000000e+00> : vector<8x256xf32>
    %78 = tpu.matmul %12, %56, %cst_100 {dimension_numbers = #tpu.dot_dimension_numbers<[1], [0], [0], [1], [0, 0, 1, 1], [], []>} : vector<8x8xf32>, vector<8x256xf32>, vector<8x256xf32> -> vector<8x256xf32>
    %79 = arith.addf %77, %78 : vector<8x256xf32>
    %c255_i32 = arith.constant 255 : i32
    %80 = tpu.dynamic_rotate %56 by %c255_i32 dim 1 : vector<8x256xf32>, i32 -> vector<8x256xf32>
    %81 = vector.broadcast %48 : vector<1x256xf32> to vector<8x256xf32>
    %82 = arith.mulf %80, %81 : vector<8x256xf32>
    %cst_101 = arith.constant dense<0.000000e+00> : vector<8x256xf32>
    %83 = tpu.matmul %14, %82, %cst_101 {dimension_numbers = #tpu.dot_dimension_numbers<[1], [0], [0], [1], [0, 0, 1, 1], [], []>} : vector<8x8xf32>, vector<8x256xf32>, vector<8x256xf32> -> vector<8x256xf32>
    %84 = arith.addf %79, %83 : vector<8x256xf32>
    %c241_i32 = arith.constant 241 : i32
    %85 = tpu.dynamic_rotate %56 by %c241_i32 dim 1 : vector<8x256xf32>, i32 -> vector<8x256xf32>
    %86 = vector.broadcast %50 : vector<1x256xf32> to vector<8x256xf32>
    %87 = arith.mulf %85, %86 : vector<8x256xf32>
    %cst_102 = arith.constant dense<0.000000e+00> : vector<8x256xf32>
    %88 = tpu.matmul %16, %87, %cst_102 {dimension_numbers = #tpu.dot_dimension_numbers<[1], [0], [0], [1], [0, 0, 1, 1], [], []>} : vector<8x8xf32>, vector<8x256xf32>, vector<8x256xf32> -> vector<8x256xf32>
    %89 = arith.addf %84, %88 : vector<8x256xf32>
    %c240_i32 = arith.constant 240 : i32
    %90 = tpu.dynamic_rotate %56 by %c240_i32 dim 1 : vector<8x256xf32>, i32 -> vector<8x256xf32>
    %91 = vector.broadcast %52 : vector<1x256xf32> to vector<8x256xf32>
    %92 = arith.mulf %90, %91 : vector<8x256xf32>
    %cst_103 = arith.constant dense<0.000000e+00> : vector<8x256xf32>
    %93 = tpu.matmul %18, %92, %cst_103 {dimension_numbers = #tpu.dot_dimension_numbers<[1], [0], [0], [1], [0, 0, 1, 1], [], []>} : vector<8x8xf32>, vector<8x256xf32>, vector<8x256xf32> -> vector<8x256xf32>
    %94 = arith.addf %89, %93 : vector<8x256xf32>
    %c239_i32 = arith.constant 239 : i32
    %95 = tpu.dynamic_rotate %56 by %c239_i32 dim 1 : vector<8x256xf32>, i32 -> vector<8x256xf32>
    %96 = vector.broadcast %54 : vector<1x256xf32> to vector<8x256xf32>
    %97 = arith.mulf %95, %96 : vector<8x256xf32>
    %cst_104 = arith.constant dense<0.000000e+00> : vector<8x256xf32>
    %98 = tpu.matmul %20, %97, %cst_104 {dimension_numbers = #tpu.dot_dimension_numbers<[1], [0], [0], [1], [0, 0, 1, 1], [], []>} : vector<8x8xf32>, vector<8x256xf32>, vector<8x256xf32> -> vector<8x256xf32>
    %99 = arith.addf %94, %98 : vector<8x256xf32>
    %100 = vector.broadcast %0 : vector<8x1xf32> to vector<8x256xf32>
    %101 = arith.mulf %99, %100 : vector<8x256xf32>
    %102 = vector.broadcast %1 : vector<8x1xf32> to vector<8x256xf32>
    %103 = arith.addf %101, %102 : vector<8x256xf32>
    %cst_105 = arith.constant 0.000000e+00 : f32
    %104 = vector.broadcast %cst_105 : f32 to vector<8x256xf32>
    %105 = arith.maximumf %103, %104 : vector<8x256xf32>
    %cst_106 = arith.constant 0.000000e+00 : f32
    %106 = vector.broadcast %cst_106 : f32 to vector<8x256xf32>
    %c17_i32_107 = arith.constant 17 : i32
    %107 = tpu.dynamic_rotate %105 by %c17_i32_107 dim 1 : vector<8x256xf32>, i32 -> vector<8x256xf32>
    %108 = vector.broadcast %40 : vector<1x256xf32> to vector<8x256xf32>
    %109 = arith.mulf %107, %108 : vector<8x256xf32>
    %cst_108 = arith.constant dense<0.000000e+00> : vector<8x256xf32>
    %110 = tpu.matmul %22, %109, %cst_108 {dimension_numbers = #tpu.dot_dimension_numbers<[1], [0], [0], [1], [0, 0, 1, 1], [], []>} : vector<8x8xf32>, vector<8x256xf32>, vector<8x256xf32> -> vector<8x256xf32>
    %111 = arith.addf %106, %110 : vector<8x256xf32>
    %c16_i32_109 = arith.constant 16 : i32
    %112 = tpu.dynamic_rotate %105 by %c16_i32_109 dim 1 : vector<8x256xf32>, i32 -> vector<8x256xf32>
    %113 = vector.broadcast %42 : vector<1x256xf32> to vector<8x256xf32>
    %114 = arith.mulf %112, %113 : vector<8x256xf32>
    %cst_110 = arith.constant dense<0.000000e+00> : vector<8x256xf32>
    %115 = tpu.matmul %24, %114, %cst_110 {dimension_numbers = #tpu.dot_dimension_numbers<[1], [0], [0], [1], [0, 0, 1, 1], [], []>} : vector<8x8xf32>, vector<8x256xf32>, vector<8x256xf32> -> vector<8x256xf32>
    %116 = arith.addf %111, %115 : vector<8x256xf32>
    %c15_i32_111 = arith.constant 15 : i32
    %117 = tpu.dynamic_rotate %105 by %c15_i32_111 dim 1 : vector<8x256xf32>, i32 -> vector<8x256xf32>
    %118 = vector.broadcast %44 : vector<1x256xf32> to vector<8x256xf32>
    %119 = arith.mulf %117, %118 : vector<8x256xf32>
    %cst_112 = arith.constant dense<0.000000e+00> : vector<8x256xf32>
    %120 = tpu.matmul %26, %119, %cst_112 {dimension_numbers = #tpu.dot_dimension_numbers<[1], [0], [0], [1], [0, 0, 1, 1], [], []>} : vector<8x8xf32>, vector<8x256xf32>, vector<8x256xf32> -> vector<8x256xf32>
    %121 = arith.addf %116, %120 : vector<8x256xf32>
    %c1_i32_113 = arith.constant 1 : i32
    %122 = tpu.dynamic_rotate %105 by %c1_i32_113 dim 1 : vector<8x256xf32>, i32 -> vector<8x256xf32>
    %123 = vector.broadcast %46 : vector<1x256xf32> to vector<8x256xf32>
    %124 = arith.mulf %122, %123 : vector<8x256xf32>
    %cst_114 = arith.constant dense<0.000000e+00> : vector<8x256xf32>
    %125 = tpu.matmul %28, %124, %cst_114 {dimension_numbers = #tpu.dot_dimension_numbers<[1], [0], [0], [1], [0, 0, 1, 1], [], []>} : vector<8x8xf32>, vector<8x256xf32>, vector<8x256xf32> -> vector<8x256xf32>
    %126 = arith.addf %121, %125 : vector<8x256xf32>
    %cst_115 = arith.constant dense<0.000000e+00> : vector<8x256xf32>
    %127 = tpu.matmul %30, %105, %cst_115 {dimension_numbers = #tpu.dot_dimension_numbers<[1], [0], [0], [1], [0, 0, 1, 1], [], []>} : vector<8x8xf32>, vector<8x256xf32>, vector<8x256xf32> -> vector<8x256xf32>
    %128 = arith.addf %126, %127 : vector<8x256xf32>
    %c255_i32_116 = arith.constant 255 : i32
    %129 = tpu.dynamic_rotate %105 by %c255_i32_116 dim 1 : vector<8x256xf32>, i32 -> vector<8x256xf32>
    %130 = vector.broadcast %48 : vector<1x256xf32> to vector<8x256xf32>
    %131 = arith.mulf %129, %130 : vector<8x256xf32>
    %cst_117 = arith.constant dense<0.000000e+00> : vector<8x256xf32>
    %132 = tpu.matmul %32, %131, %cst_117 {dimension_numbers = #tpu.dot_dimension_numbers<[1], [0], [0], [1], [0, 0, 1, 1], [], []>} : vector<8x8xf32>, vector<8x256xf32>, vector<8x256xf32> -> vector<8x256xf32>
    %133 = arith.addf %128, %132 : vector<8x256xf32>
    %c241_i32_118 = arith.constant 241 : i32
    %134 = tpu.dynamic_rotate %105 by %c241_i32_118 dim 1 : vector<8x256xf32>, i32 -> vector<8x256xf32>
    %135 = vector.broadcast %50 : vector<1x256xf32> to vector<8x256xf32>
    %136 = arith.mulf %134, %135 : vector<8x256xf32>
    %cst_119 = arith.constant dense<0.000000e+00> : vector<8x256xf32>
    %137 = tpu.matmul %34, %136, %cst_119 {dimension_numbers = #tpu.dot_dimension_numbers<[1], [0], [0], [1], [0, 0, 1, 1], [], []>} : vector<8x8xf32>, vector<8x256xf32>, vector<8x256xf32> -> vector<8x256xf32>
    %138 = arith.addf %133, %137 : vector<8x256xf32>
    %c240_i32_120 = arith.constant 240 : i32
    %139 = tpu.dynamic_rotate %105 by %c240_i32_120 dim 1 : vector<8x256xf32>, i32 -> vector<8x256xf32>
    %140 = vector.broadcast %52 : vector<1x256xf32> to vector<8x256xf32>
    %141 = arith.mulf %139, %140 : vector<8x256xf32>
    %cst_121 = arith.constant dense<0.000000e+00> : vector<8x256xf32>
    %142 = tpu.matmul %36, %141, %cst_121 {dimension_numbers = #tpu.dot_dimension_numbers<[1], [0], [0], [1], [0, 0, 1, 1], [], []>} : vector<8x8xf32>, vector<8x256xf32>, vector<8x256xf32> -> vector<8x256xf32>
    %143 = arith.addf %138, %142 : vector<8x256xf32>
    %c239_i32_122 = arith.constant 239 : i32
    %144 = tpu.dynamic_rotate %105 by %c239_i32_122 dim 1 : vector<8x256xf32>, i32 -> vector<8x256xf32>
    %145 = vector.broadcast %54 : vector<1x256xf32> to vector<8x256xf32>
    %146 = arith.mulf %144, %145 : vector<8x256xf32>
    %cst_123 = arith.constant dense<0.000000e+00> : vector<8x256xf32>
    %147 = tpu.matmul %38, %146, %cst_123 {dimension_numbers = #tpu.dot_dimension_numbers<[1], [0], [0], [1], [0, 0, 1, 1], [], []>} : vector<8x8xf32>, vector<8x256xf32>, vector<8x256xf32> -> vector<8x256xf32>
    %148 = arith.addf %143, %147 : vector<8x256xf32>
    %149 = arith.addf %56, %148 : vector<8x256xf32>
    %150 = vector.broadcast %2 : vector<8x1xf32> to vector<8x256xf32>
    %151 = arith.addf %149, %150 : vector<8x256xf32>
    %c0_124 = arith.constant 0 : index
    %c0_125 = arith.constant 0 : index
    %c0_126 = arith.constant 0 : index
    %152 = vector.load %arg5[%c0_124, %c0_125, %c0_126] : memref<2x8x256xf32, #tpu.memory_space<vmem>>, vector<1x8x256xf32>
    %153 = vector.shape_cast %152 : vector<1x8x256xf32> to vector<8x256xf32>
    %154 = vector.shape_cast %151 : vector<8x256xf32> to vector<1x8x256xf32>
    tpu.vector_store %arg5[%c0_124, %c0_125, %c0_126], %154 {strides = array<i32>} : memref<2x8x256xf32, #tpu.memory_space<vmem>>, vector<1x8x256xf32>,
    %c1_127 = arith.constant 1 : index
    %c0_128 = arith.constant 0 : index
    %c0_129 = arith.constant 0 : index
    %155 = vector.load %arg1[%c1_127, %c0_128, %c0_129] : memref<2x8x256xf32, #tpu.memory_space<vmem>>, vector<1x8x256xf32>
    %156 = vector.shape_cast %155 : vector<1x8x256xf32> to vector<8x256xf32>
    %cst_130 = arith.constant 0.000000e+00 : f32
    %157 = vector.broadcast %cst_130 : f32 to vector<8x256xf32>
    %c17_i32_131 = arith.constant 17 : i32
    %158 = tpu.dynamic_rotate %156 by %c17_i32_131 dim 1 : vector<8x256xf32>, i32 -> vector<8x256xf32>
    %159 = vector.broadcast %40 : vector<1x256xf32> to vector<8x256xf32>
    %160 = arith.mulf %158, %159 : vector<8x256xf32>
    %cst_132 = arith.constant dense<0.000000e+00> : vector<8x256xf32>
    %161 = tpu.matmul %4, %160, %cst_132 {dimension_numbers = #tpu.dot_dimension_numbers<[1], [0], [0], [1], [0, 0, 1, 1], [], []>} : vector<8x8xf32>, vector<8x256xf32>, vector<8x256xf32> -> vector<8x256xf32>
    %162 = arith.addf %157, %161 : vector<8x256xf32>
    %c16_i32_133 = arith.constant 16 : i32
    %163 = tpu.dynamic_rotate %156 by %c16_i32_133 dim 1 : vector<8x256xf32>, i32 -> vector<8x256xf32>
    %164 = vector.broadcast %42 : vector<1x256xf32> to vector<8x256xf32>
    %165 = arith.mulf %163, %164 : vector<8x256xf32>
    %cst_134 = arith.constant dense<0.000000e+00> : vector<8x256xf32>
    %166 = tpu.matmul %6, %165, %cst_134 {dimension_numbers = #tpu.dot_dimension_numbers<[1], [0], [0], [1], [0, 0, 1, 1], [], []>} : vector<8x8xf32>, vector<8x256xf32>, vector<8x256xf32> -> vector<8x256xf32>
    %167 = arith.addf %162, %166 : vector<8x256xf32>
    %c15_i32_135 = arith.constant 15 : i32
    %168 = tpu.dynamic_rotate %156 by %c15_i32_135 dim 1 : vector<8x256xf32>, i32 -> vector<8x256xf32>
    %169 = vector.broadcast %44 : vector<1x256xf32> to vector<8x256xf32>
    %170 = arith.mulf %168, %169 : vector<8x256xf32>
    %cst_136 = arith.constant dense<0.000000e+00> : vector<8x256xf32>
    %171 = tpu.matmul %8, %170, %cst_136 {dimension_numbers = #tpu.dot_dimension_numbers<[1], [0], [0], [1], [0, 0, 1, 1], [], []>} : vector<8x8xf32>, vector<8x256xf32>, vector<8x256xf32> -> vector<8x256xf32>
    %172 = arith.addf %167, %171 : vector<8x256xf32>
    %c1_i32_137 = arith.constant 1 : i32
    %173 = tpu.dynamic_rotate %156 by %c1_i32_137 dim 1 : vector<8x256xf32>, i32 -> vector<8x256xf32>
    %174 = vector.broadcast %46 : vector<1x256xf32> to vector<8x256xf32>
    %175 = arith.mulf %173, %174 : vector<8x256xf32>
    %cst_138 = arith.constant dense<0.000000e+00> : vector<8x256xf32>
    %176 = tpu.matmul %10, %175, %cst_138 {dimension_numbers = #tpu.dot_dimension_numbers<[1], [0], [0], [1], [0, 0, 1, 1], [], []>} : vector<8x8xf32>, vector<8x256xf32>, vector<8x256xf32> -> vector<8x256xf32>
    %177 = arith.addf %172, %176 : vector<8x256xf32>
    %cst_139 = arith.constant dense<0.000000e+00> : vector<8x256xf32>
    %178 = tpu.matmul %12, %156, %cst_139 {dimension_numbers = #tpu.dot_dimension_numbers<[1], [0], [0], [1], [0, 0, 1, 1], [], []>} : vector<8x8xf32>, vector<8x256xf32>, vector<8x256xf32> -> vector<8x256xf32>
    %179 = arith.addf %177, %178 : vector<8x256xf32>
    %c255_i32_140 = arith.constant 255 : i32
    %180 = tpu.dynamic_rotate %156 by %c255_i32_140 dim 1 : vector<8x256xf32>, i32 -> vector<8x256xf32>
    %181 = vector.broadcast %48 : vector<1x256xf32> to vector<8x256xf32>
    %182 = arith.mulf %180, %181 : vector<8x256xf32>
    %cst_141 = arith.constant dense<0.000000e+00> : vector<8x256xf32>
    %183 = tpu.matmul %14, %182, %cst_141 {dimension_numbers = #tpu.dot_dimension_numbers<[1], [0], [0], [1], [0, 0, 1, 1], [], []>} : vector<8x8xf32>, vector<8x256xf32>, vector<8x256xf32> -> vector<8x256xf32>
    %184 = arith.addf %179, %183 : vector<8x256xf32>
    %c241_i32_142 = arith.constant 241 : i32
    %185 = tpu.dynamic_rotate %156 by %c241_i32_142 dim 1 : vector<8x256xf32>, i32 -> vector<8x256xf32>
    %186 = vector.broadcast %50 : vector<1x256xf32> to vector<8x256xf32>
    %187 = arith.mulf %185, %186 : vector<8x256xf32>
    %cst_143 = arith.constant dense<0.000000e+00> : vector<8x256xf32>
    %188 = tpu.matmul %16, %187, %cst_143 {dimension_numbers = #tpu.dot_dimension_numbers<[1], [0], [0], [1], [0, 0, 1, 1], [], []>} : vector<8x8xf32>, vector<8x256xf32>, vector<8x256xf32> -> vector<8x256xf32>
    %189 = arith.addf %184, %188 : vector<8x256xf32>
    %c240_i32_144 = arith.constant 240 : i32
    %190 = tpu.dynamic_rotate %156 by %c240_i32_144 dim 1 : vector<8x256xf32>, i32 -> vector<8x256xf32>
    %191 = vector.broadcast %52 : vector<1x256xf32> to vector<8x256xf32>
    %192 = arith.mulf %190, %191 : vector<8x256xf32>
    %cst_145 = arith.constant dense<0.000000e+00> : vector<8x256xf32>
    %193 = tpu.matmul %18, %192, %cst_145 {dimension_numbers = #tpu.dot_dimension_numbers<[1], [0], [0], [1], [0, 0, 1, 1], [], []>} : vector<8x8xf32>, vector<8x256xf32>, vector<8x256xf32> -> vector<8x256xf32>
    %194 = arith.addf %189, %193 : vector<8x256xf32>
    %c239_i32_146 = arith.constant 239 : i32
    %195 = tpu.dynamic_rotate %156 by %c239_i32_146 dim 1 : vector<8x256xf32>, i32 -> vector<8x256xf32>
    %196 = vector.broadcast %54 : vector<1x256xf32> to vector<8x256xf32>
    %197 = arith.mulf %195, %196 : vector<8x256xf32>
    %cst_147 = arith.constant dense<0.000000e+00> : vector<8x256xf32>
    %198 = tpu.matmul %20, %197, %cst_147 {dimension_numbers = #tpu.dot_dimension_numbers<[1], [0], [0], [1], [0, 0, 1, 1], [], []>} : vector<8x8xf32>, vector<8x256xf32>, vector<8x256xf32> -> vector<8x256xf32>
    %199 = arith.addf %194, %198 : vector<8x256xf32>
    %200 = vector.broadcast %0 : vector<8x1xf32> to vector<8x256xf32>
    %201 = arith.mulf %199, %200 : vector<8x256xf32>
    %202 = vector.broadcast %1 : vector<8x1xf32> to vector<8x256xf32>
    %203 = arith.addf %201, %202 : vector<8x256xf32>
    %cst_148 = arith.constant 0.000000e+00 : f32
    %204 = vector.broadcast %cst_148 : f32 to vector<8x256xf32>
    %205 = arith.maximumf %203, %204 : vector<8x256xf32>
    %cst_149 = arith.constant 0.000000e+00 : f32
    %206 = vector.broadcast %cst_149 : f32 to vector<8x256xf32>
    %c17_i32_150 = arith.constant 17 : i32
    %207 = tpu.dynamic_rotate %205 by %c17_i32_150 dim 1 : vector<8x256xf32>, i32 -> vector<8x256xf32>
    %208 = vector.broadcast %40 : vector<1x256xf32> to vector<8x256xf32>
    %209 = arith.mulf %207, %208 : vector<8x256xf32>
    %cst_151 = arith.constant dense<0.000000e+00> : vector<8x256xf32>
    %210 = tpu.matmul %22, %209, %cst_151 {dimension_numbers = #tpu.dot_dimension_numbers<[1], [0], [0], [1], [0, 0, 1, 1], [], []>} : vector<8x8xf32>, vector<8x256xf32>, vector<8x256xf32> -> vector<8x256xf32>
    %211 = arith.addf %206, %210 : vector<8x256xf32>
    %c16_i32_152 = arith.constant 16 : i32
    %212 = tpu.dynamic_rotate %205 by %c16_i32_152 dim 1 : vector<8x256xf32>, i32 -> vector<8x256xf32>
    %213 = vector.broadcast %42 : vector<1x256xf32> to vector<8x256xf32>
    %214 = arith.mulf %212, %213 : vector<8x256xf32>
    %cst_153 = arith.constant dense<0.000000e+00> : vector<8x256xf32>
    %215 = tpu.matmul %24, %214, %cst_153 {dimension_numbers = #tpu.dot_dimension_numbers<[1], [0], [0], [1], [0, 0, 1, 1], [], []>} : vector<8x8xf32>, vector<8x256xf32>, vector<8x256xf32> -> vector<8x256xf32>
    %216 = arith.addf %211, %215 : vector<8x256xf32>
    %c15_i32_154 = arith.constant 15 : i32
    %217 = tpu.dynamic_rotate %205 by %c15_i32_154 dim 1 : vector<8x256xf32>, i32 -> vector<8x256xf32>
    %218 = vector.broadcast %44 : vector<1x256xf32> to vector<8x256xf32>
    %219 = arith.mulf %217, %218 : vector<8x256xf32>
    %cst_155 = arith.constant dense<0.000000e+00> : vector<8x256xf32>
    %220 = tpu.matmul %26, %219, %cst_155 {dimension_numbers = #tpu.dot_dimension_numbers<[1], [0], [0], [1], [0, 0, 1, 1], [], []>} : vector<8x8xf32>, vector<8x256xf32>, vector<8x256xf32> -> vector<8x256xf32>
    %221 = arith.addf %216, %220 : vector<8x256xf32>
    %c1_i32_156 = arith.constant 1 : i32
    %222 = tpu.dynamic_rotate %205 by %c1_i32_156 dim 1 : vector<8x256xf32>, i32 -> vector<8x256xf32>
    %223 = vector.broadcast %46 : vector<1x256xf32> to vector<8x256xf32>
    %224 = arith.mulf %222, %223 : vector<8x256xf32>
    %cst_157 = arith.constant dense<0.000000e+00> : vector<8x256xf32>
    %225 = tpu.matmul %28, %224, %cst_157 {dimension_numbers = #tpu.dot_dimension_numbers<[1], [0], [0], [1], [0, 0, 1, 1], [], []>} : vector<8x8xf32>, vector<8x256xf32>, vector<8x256xf32> -> vector<8x256xf32>
    %226 = arith.addf %221, %225 : vector<8x256xf32>
    %cst_158 = arith.constant dense<0.000000e+00> : vector<8x256xf32>
    %227 = tpu.matmul %30, %205, %cst_158 {dimension_numbers = #tpu.dot_dimension_numbers<[1], [0], [0], [1], [0, 0, 1, 1], [], []>} : vector<8x8xf32>, vector<8x256xf32>, vector<8x256xf32> -> vector<8x256xf32>
    %228 = arith.addf %226, %227 : vector<8x256xf32>
    %c255_i32_159 = arith.constant 255 : i32
    %229 = tpu.dynamic_rotate %205 by %c255_i32_159 dim 1 : vector<8x256xf32>, i32 -> vector<8x256xf32>
    %230 = vector.broadcast %48 : vector<1x256xf32> to vector<8x256xf32>
    %231 = arith.mulf %229, %230 : vector<8x256xf32>
    %cst_160 = arith.constant dense<0.000000e+00> : vector<8x256xf32>
    %232 = tpu.matmul %32, %231, %cst_160 {dimension_numbers = #tpu.dot_dimension_numbers<[1], [0], [0], [1], [0, 0, 1, 1], [], []>} : vector<8x8xf32>, vector<8x256xf32>, vector<8x256xf32> -> vector<8x256xf32>
    %233 = arith.addf %228, %232 : vector<8x256xf32>
    %c241_i32_161 = arith.constant 241 : i32
    %234 = tpu.dynamic_rotate %205 by %c241_i32_161 dim 1 : vector<8x256xf32>, i32 -> vector<8x256xf32>
    %235 = vector.broadcast %50 : vector<1x256xf32> to vector<8x256xf32>
    %236 = arith.mulf %234, %235 : vector<8x256xf32>
    %cst_162 = arith.constant dense<0.000000e+00> : vector<8x256xf32>
    %237 = tpu.matmul %34, %236, %cst_162 {dimension_numbers = #tpu.dot_dimension_numbers<[1], [0], [0], [1], [0, 0, 1, 1], [], []>} : vector<8x8xf32>, vector<8x256xf32>, vector<8x256xf32> -> vector<8x256xf32>
    %238 = arith.addf %233, %237 : vector<8x256xf32>
    %c240_i32_163 = arith.constant 240 : i32
    %239 = tpu.dynamic_rotate %205 by %c240_i32_163 dim 1 : vector<8x256xf32>, i32 -> vector<8x256xf32>
    %240 = vector.broadcast %52 : vector<1x256xf32> to vector<8x256xf32>
    %241 = arith.mulf %239, %240 : vector<8x256xf32>
    %cst_164 = arith.constant dense<0.000000e+00> : vector<8x256xf32>
    %242 = tpu.matmul %36, %241, %cst_164 {dimension_numbers = #tpu.dot_dimension_numbers<[1], [0], [0], [1], [0, 0, 1, 1], [], []>} : vector<8x8xf32>, vector<8x256xf32>, vector<8x256xf32> -> vector<8x256xf32>
    %243 = arith.addf %238, %242 : vector<8x256xf32>
    %c239_i32_165 = arith.constant 239 : i32
    %244 = tpu.dynamic_rotate %205 by %c239_i32_165 dim 1 : vector<8x256xf32>, i32 -> vector<8x256xf32>
    %245 = vector.broadcast %54 : vector<1x256xf32> to vector<8x256xf32>
    %246 = arith.mulf %244, %245 : vector<8x256xf32>
    %cst_166 = arith.constant dense<0.000000e+00> : vector<8x256xf32>
    %247 = tpu.matmul %38, %246, %cst_166 {dimension_numbers = #tpu.dot_dimension_numbers<[1], [0], [0], [1], [0, 0, 1, 1], [], []>} : vector<8x8xf32>, vector<8x256xf32>, vector<8x256xf32> -> vector<8x256xf32>
    %248 = arith.addf %243, %247 : vector<8x256xf32>
    %249 = arith.addf %156, %248 : vector<8x256xf32>
    %250 = vector.broadcast %2 : vector<8x1xf32> to vector<8x256xf32>
    %251 = arith.addf %249, %250 : vector<8x256xf32>
    %c1_167 = arith.constant 1 : index
    %c0_168 = arith.constant 0 : index
    %c0_169 = arith.constant 0 : index
    %252 = vector.load %arg5[%c1_167, %c0_168, %c0_169] : memref<2x8x256xf32, #tpu.memory_space<vmem>>, vector<1x8x256xf32>
    %253 = vector.shape_cast %252 : vector<1x8x256xf32> to vector<8x256xf32>
    %254 = vector.shape_cast %251 : vector<8x256xf32> to vector<1x8x256xf32>
    tpu.vector_store %arg5[%c1_167, %c0_168, %c0_169], %254 {strides = array<i32>} : memref<2x8x256xf32, #tpu.memory_space<vmem>>, vector<1x8x256xf32>,
    return
  }
  func.func @transform_0(%arg0: i32) -> (i32, i32, i32) {
    %c0_i32 = arith.constant 0 : i32
    %c0_i32_0 = arith.constant 0 : i32
    %c0_i32_1 = arith.constant 0 : i32
    return %arg0, %c0_i32, %c0_i32_0 : i32, i32, i32
  }
  func.func @transform_1(%arg0: i32) -> (i32, i32, i32, i32) {
    %c0_i32 = arith.constant 0 : i32
    %c0_i32_0 = arith.constant 0 : i32
    %c0_i32_1 = arith.constant 0 : i32
    %c0_i32_2 = arith.constant 0 : i32
    %c0_i32_3 = arith.constant 0 : i32
    return %c0_i32, %c0_i32_0, %c0_i32_1, %c0_i32_2 : i32, i32, i32, i32
  }
  func.func @transform_2(%arg0: i32) -> (i32, i32) {
    %c0_i32 = arith.constant 0 : i32
    %c0_i32_0 = arith.constant 0 : i32
    %c0_i32_1 = arith.constant 0 : i32
    return %c0_i32, %c0_i32_0 : i32, i32
  }
  func.func @transform_3(%arg0: i32) -> (i32, i32, i32) {
    %c0_i32 = arith.constant 0 : i32
    %c0_i32_0 = arith.constant 0 : i32
    %c0_i32_1 = arith.constant 0 : i32
    %c0_i32_2 = arith.constant 0 : i32
    return %c0_i32, %c0_i32_0, %c0_i32_1 : i32, i32, i32
  }
  func.func @transform_4(%arg0: i32) -> (i32, i32, i32) {
    %c0_i32 = arith.constant 0 : i32
    %c0_i32_0 = arith.constant 0 : i32
    %c0_i32_1 = arith.constant 0 : i32
    return %arg0, %c0_i32, %c0_i32_0 : i32, i32, i32
  }
}

</mosaic_0001>

<llo_original>
// kernel: _lambda_.1
$region0: #{_lambda_.1}
  #allocation0 [shape = 'u32[]', space=smem, size = 0x4, offset = 0x4, fixed_abs, tag = 'smem constant byte address 0x4 - core index']
  #allocation1 [shape = 'u32[144,128]{1,0:T(1,128)}', space=vmem, size = 0x12000, scoped, tag = 'internal scratch']
  %s0 = inlined_call_operand.vmem [shape: f32[8,8,256], index: 0, kind: input, shape index: {}]
  %s1 = inlined_call_operand.vmem [shape: f32[2,9,8,8], index: 1, kind: input, shape index: {}]
  %s2 = inlined_call_operand.vmem [shape: f32[8,3], index: 2, kind: input, shape index: {}]
  %s3 = inlined_call_operand.vmem [shape: f32[9,1,256], index: 3, kind: input, shape index: {}]
  %s4 = inlined_call_operand.vmem [shape: f32[8,8,256], index: 4, kind: output, shape index: {}]
  %s5 = sld [smem:[#allocation0]]
  $region49: #{_lambda_.1} parent=0
    _
  %s7 = ssub.s32 1, %s5
  %s8 = scalar_select 0, %s7, %s5
  loop: start=0, step=1, limit=6
  $region2: #{_lambda_.1} parent=0 // loop_pre_header
    _
  $region3: #{_lambda_.1} parent=0 // loop_header
    %s10 = sphi 0, %s14
    %p11 = scmp.ge.s32.totalorder %s10, 6
    %s20 = sphi 0, %s22
    %s23 = sphi 0, %s20
    %s24 = sphi 0, %s23
    %s40 = sphi 0, %s24
    %s44 = sphi 0, %s44
    %s46 = sphi 0, %s44
    %s47 = sphi 0, %s46
    %s61 = sphi 0, %s47
    %s65 = sphi 0, %s65
    %s67 = sphi 0, %s65
    %s68 = sphi 0, %s67
    %s82 = sphi 0, %s68
    %s86 = sphi 0, %s86
    %s88 = sphi 0, %s86
    %s89 = sphi 0, %s88
    %s103 = sphi 0, %s89
    %s109 = sphi 0, %s111
    %s112 = sphi 0, %s109
    %s113 = sphi 0, %s112
    %s129 = sphi 0, %s113
  $region4: #{_lambda_.1} parent=0 // loop_header_branch
    %13 = sbr.rel (%p11) target = $region8
  $region5: #{_lambda_.1} parent=0 // loop_body
    %s15 = ssub.s32 %s10, 1
    %s16 = ssub.s32 %s10, 2
    %s17 = sadd.s32 %s10, 1
    %s18 = ssub.s32 %s10, %s17
    %p19 = scmp.eq.s32.totalorder %s18, 0
    %s21 = sadd.s32 %s20, 1
    %s22 = scalar_select %p19, %s20, %s21
    %p25 = pneg %p19
    %p26 = scmp.eq.s32.totalorder %s10, 3
    %p27 = por %p25, %p26
    %p28 = scmp.ne.s32.totalorder %s20, %s23
    %p29 = scmp.eq.s32.totalorder %s10, 0
    %p30 = por %p28, %p29
    %p31 = scmp.ne.s32.totalorder %s20, %s23
    %p32 = scmp.eq.s32.totalorder %s15, 3
    %p33 = por %p31, %p32
    %p34 = scmp.ne.s32.totalorder %s23, %s24
    %p35 = scmp.eq.s32.totalorder %s15, 0
    %p36 = por %p34, %p35
    %p37 = scmp.ne.s32.totalorder %s23, %s24
    %p38 = scmp.eq.s32.totalorder %s16, 3
    %p39 = por %p37, %p38
    %p41 = scmp.ne.s32.totalorder %s24, %s40
    %p42 = scmp.eq.s32.totalorder %s16, 0
    %p43 = por %p41, %p42
    %s45 = sadd.s32 %s44, 1
    %p48 = scmp.eq.s32.totalorder %s10, 3
    %p49 = scmp.ne.s32.totalorder %s44, %s46
    %p50 = scmp.eq.s32.totalorder %s10, 0
    %p51 = por %p49, %p50
    %p52 = scmp.ne.s32.totalorder %s44, %s46
    %p53 = scmp.eq.s32.totalorder %s15, 3
    %p54 = por %p52, %p53
    %p55 = scmp.ne.s32.totalorder %s46, %s47
    %p56 = scmp.eq.s32.totalorder %s15, 0
    %p57 = por %p55, %p56
    %p58 = scmp.ne.s32.totalorder %s46, %s47
    %p59 = scmp.eq.s32.totalorder %s16, 3
    %p60 = por %p58, %p59
    %p62 = scmp.ne.s32.totalorder %s47, %s61
    %p63 = scmp.eq.s32.totalorder %s16, 0
    %p64 = por %p62, %p63
    %s66 = sadd.s32 %s65, 1
    %p69 = scmp.eq.s32.totalorder %s10, 3
    %p70 = scmp.ne.s32.totalorder %s65, %s67
    %p71 = scmp.eq.s32.totalorder %s10, 0
    %p72 = por %p70, %p71
    %p73 = scmp.ne.s32.totalorder %s65, %s67
    %p74 = scmp.eq.s32.totalorder %s15, 3
    %p75 = por %p73, %p74
    %p76 = scmp.ne.s32.totalorder %s67, %s68
    %p77 = scmp.eq.s32.totalorder %s15, 0
    %p78 = por %p76, %p77
    %p79 = scmp.ne.s32.totalorder %s67, %s68
    %p80 = scmp.eq.s32.totalorder %s16, 3
    %p81 = por %p79, %p80
    %p83 = scmp.ne.s32.totalorder %s68, %s82
    %p84 = scmp.eq.s32.totalorder %s16, 0
    %p85 = por %p83, %p84
    %s87 = sadd.s32 %s86, 1
    %p90 = scmp.eq.s32.totalorder %s10, 3
    %p91 = scmp.ne.s32.totalorder %s86, %s88
    %p92 = scmp.eq.s32.totalorder %s10, 0
    %p93 = por %p91, %p92
    %p94 = scmp.ne.s32.totalorder %s86, %s88
    %p95 = scmp.eq.s32.totalorder %s15, 3
    %p96 = por %p94, %p95
    %p97 = scmp.ne.s32.totalorder %s88, %s89
    %p98 = scmp.eq.s32.totalorder %s15, 0
    %p99 = por %p97, %p98
    %p100 = scmp.ne.s32.totalorder %s88, %s89
    %p101 = scmp.eq.s32.totalorder %s16, 3
    %p102 = por %p100, %p101
    %p104 = scmp.ne.s32.totalorder %s89, %s103
    %p105 = scmp.eq.s32.totalorder %s16, 0
    %p106 = por %p104, %p105
    %s107 = ssub.s32 %s10, %s17
    %p108 = scmp.eq.s32.totalorder %s107, 0
    %s110 = sadd.s32 %s109, 1
    %s111 = scalar_select %p108, %s109, %s110
    %p114 = pneg %p108
    %p115 = scmp.eq.s32.totalorder %s10, 3
    %p116 = por %p114, %p115
    %p117 = scmp.ne.s32.totalorder %s109, %s112
    %p118 = scmp.eq.s32.totalorder %s10, 0
    %p119 = por %p117, %p118
    %p120 = scmp.ne.s32.totalorder %s109, %s112
    %p121 = scmp.eq.s32.totalorder %s15, 3
    %p122 = por %p120, %p121
    %p123 = scmp.ne.s32.totalorder %s112, %s113
    %p124 = scmp.eq.s32.totalorder %s15, 0
    %p125 = por %p123, %p124
    %p126 = scmp.ne.s32.totalorder %s112, %s113
    %p127 = scmp.eq.s32.totalorder %s16, 3
    %p128 = por %p126, %p127
    %p130 = scmp.ne.s32.totalorder %s113, %s129
    %p131 = scmp.eq.s32.totalorder %s16, 0
    %p132 = por %p130, %p131
    %p133 = scmp.le.s32.totalorder 1, %s10
    %p134 = scmp.lt.s32.totalorder %s10, 5
    %p135 = pnand %p133, %p134
    %p136 = pneg %p135
    // Predicated region
    $region9: #{_lambda_.1} parent=5 // pred_check
      _
    $region10: #{_lambda_.1} parent=5 // pred_check_branch
      %138 = sbr.rel (%p135) target = $region12
    $region11: #{_lambda_.1} parent=5 // pred_region
      %s139 = ssub.s32 %s10, 1
      // Predicated region
      $region13: #{_lambda_.1} parent=11 // pred_check
        %p140 = pneg %p57
      $region14: #{_lambda_.1} parent=11 // pred_check_branch
        %142 = sbr.rel (%p140) target = $region16
      $region15: #{_lambda_.1} parent=11 // pred_region
        _
      $region16: #{_lambda_.1} parent=11 // pred_fallthru
        _
      // Predicated region
      $region17: #{_lambda_.1} parent=11 // pred_check
        %p143 = pneg %p78
      $region18: #{_lambda_.1} parent=11 // pred_check_branch
        %145 = sbr.rel (%p143) target = $region20
      $region19: #{_lambda_.1} parent=11 // pred_region
        _
      $region20: #{_lambda_.1} parent=11 // pred_fallthru
        _
      // Predicated region
      $region21: #{_lambda_.1} parent=11 // pred_check
        %p146 = pneg %p99
      $region22: #{_lambda_.1} parent=11 // pred_check_branch
        %148 = sbr.rel (%p146) target = $region24
      $region23: #{_lambda_.1} parent=11 // pred_region
        _
      $region24: #{_lambda_.1} parent=11 // pred_fallthru
        _
    $region12: #{_lambda_.1} parent=5 // pred_fallthru
      _
    %p149 = scmp.lt.s32.totalorder %s10, 4
    // Predicated region
    $region25: #{_lambda_.1} parent=5 // pred_check
      %p150 = pneg %p149
    $region26: #{_lambda_.1} parent=5 // pred_check_branch
      %152 = sbr.rel (%p150) target = $region28
    $region27: #{_lambda_.1} parent=5 // pred_region
      // Predicated region
      $region29: #{_lambda_.1} parent=27 // pred_check
        %p153 = pneg %p30
      $region30: #{_lambda_.1} parent=27 // pred_check_branch
        %155 = sbr.rel (%p153) target = $region32
      $region31: #{_lambda_.1} parent=27 // pred_region
        %s156 = smul.u32 2, %s10
        %p157 = scmp.lt.s32.totalorder %s156, 7
        %s158 = scalar_select %p157, %s156, 7
        %s159 = smul.addr %s158, 2
        %s160 = smul.addr %s159, 8
        %s161 = scalar_lea.vmem %s0, %s160
        %s162 = smul.u32 2, %s10
      $region32: #{_lambda_.1} parent=27 // pred_fallthru
        _
    $region28: #{_lambda_.1} parent=5 // pred_fallthru
      _
    %p163 = scmp.le.s32.totalorder 1, %s10
    %p164 = scmp.lt.s32.totalorder %s10, 5
    %p165 = pnand %p163, %p164
    %p166 = pneg %p165
    // Predicated region
    $region33: #{_lambda_.1} parent=5 // pred_check
      _
    $region34: #{_lambda_.1} parent=5 // pred_check_branch
      %168 = sbr.rel (%p165) target = $region36
    $region35: #{_lambda_.1} parent=5 // pred_region
      %s169 = ssub.s32 %s10, 1
      %s170 = smul.u32 2, %s15
      %p171 = scmp.lt.s32.totalorder %s170, 7
      %s172 = scalar_select %p171, %s170, 7
      %s173 = smul.addr %s172, 2
      %s174 = smul.addr %s173, 8
      %s175 = scalar_lea.vmem %s0, %s174
      %p176 = pneg %p36
      %p177 = pneg %p33
      %p178 = pneg %p57
      %p179 = pneg %p54
      %p180 = pneg %p78
      %p181 = pneg %p75
      %p182 = pneg %p99
      %p183 = pneg %p96
      %p184 = pneg %p125
      %p185 = pneg %p122
      %s186 = smul.u32 2, %s15
      %p187 = scmp.lt.s32.totalorder %s186, 7
      %s188 = scalar_select %p187, %s186, 7
      %s189 = smul.addr %s188, 2
      %s190 = smul.addr %s189, 8
      %s191 = scalar_lea.vmem %s4, %s190
      %s192 = smul.u32 2, %s15
      %p193 = scmp.lt.s32.totalorder %s192, 7
      %s194 = scalar_select %p193, %s192, 7
      %s195 = smul.addr %s194, 2
      %s196 = smul.addr %s195, 8
      %s197 = scalar_lea.vmem %s0, %s196
      %s198 = smul.u32 2, %s15
      %s199 = smul.u32 2, %s15
      %p200 = scmp.lt.s32.totalorder %s199, 7
      %s201 = scalar_select %p200, %s199, 7
      %s202 = smul.addr %s201, 2
      %s203 = smul.addr %s202, 8
      %s204 = scalar_lea.vmem %s4, %s203
      %s205 = smul.u32 2, %s15
      %v206 = vld [vmem:[%s2] sm:$0xff]
      %v207 = vld [vmem:[%s1] sm:$0xff]
      %s208 = scalar_lea.vmem %s1, 8
      %v209 = vld [vmem:[%s208] sm:$0xff]
      %s210 = scalar_lea.vmem %s1, 16
      %v211 = vld [vmem:[%s210] sm:$0xff]
      %s212 = scalar_lea.vmem %s1, 24
      %v213 = vld [vmem:[%s212] sm:$0xff]
      %s214 = scalar_lea.vmem %s1, 32
      %v215 = vld [vmem:[%s214] sm:$0xff]
      %s216 = scalar_lea.vmem %s1, 40
      %v217 = vld [vmem:[%s216] sm:$0xff]
      %s218 = scalar_lea.vmem %s1, 48
      %v219 = vld [vmem:[%s218] sm:$0xff]
      %s220 = scalar_lea.vmem %s1, 56
      %v221 = vld [vmem:[%s220] sm:$0xff]
      %s222 = scalar_lea.vmem %s1, 64
      %v223 = vld [vmem:[%s222] sm:$0xff]
      %s224 = scalar_lea.vmem %s1, 72
      %v225 = vld [vmem:[%s224] sm:$0xff]
      %s226 = scalar_lea.vmem %s1, 80
      %v227 = vld [vmem:[%s226] sm:$0xff]
      %s228 = scalar_lea.vmem %s1, 88
      %v229 = vld [vmem:[%s228] sm:$0xff]
      %s230 = scalar_lea.vmem %s1, 96
      %v231 = vld [vmem:[%s230] sm:$0xff]
      %s232 = scalar_lea.vmem %s1, 104
      %v233 = vld [vmem:[%s232] sm:$0xff]
      %s234 = scalar_lea.vmem %s1, 112
      %v235 = vld [vmem:[%s234] sm:$0xff]
      %s236 = scalar_lea.vmem %s1, 120
      %v237 = vld [vmem:[%s236] sm:$0xff]
      %s238 = scalar_lea.vmem %s1, 128
      %v239 = vld [vmem:[%s238] sm:$0xff]
      %s240 = scalar_lea.vmem %s1, 136
      %v241 = vld [vmem:[%s240] sm:$0xff]
      %v242 = vld [vmem:[%s3] sm:$0x3]
      %s243 = scalar_lea.vmem %s3, 2
      %v244 = vld [vmem:[%s243] sm:$0x3]
      %s245 = scalar_lea.vmem %s3, 4
      %v246 = vld [vmem:[%s245] sm:$0x3]
      %s247 = scalar_lea.vmem %s3, 6
      %v248 = vld [vmem:[%s247] sm:$0x3]
      %s249 = scalar_lea.vmem %s3, 10
      %v250 = vld [vmem:[%s249] sm:$0x3]
      %s251 = scalar_lea.vmem %s3, 12
      %v252 = vld [vmem:[%s251] sm:$0x3]
      %s253 = scalar_lea.vmem %s3, 14
      %v254 = vld [vmem:[%s253] sm:$0x3]
      %s255 = scalar_lea.vmem %s3, 16
      %v256 = vld [vmem:[%s255] sm:$0x3]
      %v257 = vld [vmem:[%s197] sm:$0xff]
      %v258 = vld [vmem:[%s197 + $0x8] sm:$0xff]
      %259 = vrot.lane.b32.xlu0 %v257, 17
      %v260 = vpop.permute.xlu0 %259
      %261 = vrot.lane.b32.xlu0 %v258, 17
      %v262 = vpop.permute.xlu0 %261
      %v263 = vlaneseq
      %v264 = vand.u32 %v263, 127
      %vm265 = vcmp.lt.s32.totalorder %v264, 17
      %v266 = vsel %vm265, %v260, %v262
      %v267 = vsel %vm265, %v262, %v260
      %v269 = vlaneseq
      %v270 = vshrl.u32 %v269, 7
      %v271 = vsub.s32 0, %v270
      %v272 = vrot.slane %v242, %v271
      %v273 = vlaneseq
      %v274 = vshrl.u32 %v273, 7
      %v275 = vsub.s32 1, %v274
      %v276 = vrot.slane %v242, %v275
      %v279 = vmul.f32 %v267, %v272
      %v280 = vmul.f32 %v266, %v276
      %281 = vrot.lane.b32.xlu0 %v257, 16
      %v282 = vpop.permute.xlu0 %281
      %283 = vrot.lane.b32.xlu0 %v258, 16
      %v284 = vpop.permute.xlu0 %283
      %vm285 = vcmp.lt.s32.totalorder %v264, 16
      %v286 = vsel %vm285, %v282, %v284
      %v287 = vsel %vm285, %v284, %v282
      %v289 = vlaneseq
      %v290 = vshrl.u32 %v289, 7
      %v291 = vsub.s32 0, %v290
      %v292 = vrot.slane %v244, %v291
      %v293 = vlaneseq
      %v294 = vshrl.u32 %v293, 7
      %v295 = vsub.s32 1, %v294
      %v296 = vrot.slane %v244, %v295
      %v299 = vmul.f32 %v287, %v292
      %v300 = vmul.f32 %v286, %v296
      %vm301 = vcmask 64512
      %v303 = vsel %vm301, %v209, 0
      %305 = vmatprep.subr.mxu0 %v300
      %306 = vmatpush1.msra.mxu0 %v299
      %307 = vmatprep.subr.mxu0 0.0
      %308 = vmatpush1.msra.mxu0 0.0
      %309 = vmatprep.subr.mxu0 0.0
      %310 = vmatpush1.msra.mxu0 0.0
      %311 = vmatprep.subr.mxu0 0.0
      %312 = vmatpush1.msra.mxu0 0.0
      %313 = vmatprep.subr.mxu0 0.0
      %314 = vmatpush1.msra.mxu0 0.0
      %315 = vmatprep.subr.mxu0 0.0
      %316 = vmatpush1.msra.mxu0 0.0
      %317 = vmatprep.subr.mxu0 0.0
      %318 = vmatpush1.msra.mxu0 0.0
      %319 = vmatprep.subr.mxu0 0.0
      %320 = vmatpush1.msra.mxu0 0.0
      %321 = vmatprep.subr.mxu0 0.0
      %322 = vmatpush1.msra.mxu0 0.0
      %323 = vmatprep.subr.mxu0 0.0
      %324 = vmatpush1.msra.mxu0 0.0
      %325 = vmatprep.subr.mxu0 0.0
      %326 = vmatpush1.msra.mxu0 0.0
      %327 = vmatprep.subr.mxu0 0.0
      %328 = vmatpush1.msra.mxu0 0.0
      %329 = vmatprep.subr.mxu0 0.0
      %330 = vmatpush1.msra.mxu0 0.0
      %331 = vmatprep.subr.mxu0 0.0
      %332 = vmatpush1.msra.mxu0 0.0
      %333 = vmatprep.subr.mxu0 0.0
      %334 = vmatpush1.msra.mxu0 0.0
      %335 = vmatprep.subr.mxu0 0.0
      %336 = vmatpush1.msra.mxu0 0.0
      %337 = vmatprep.subr.mxu0 0.0
      %338 = vmatpush1.msra.mxu0 0.0
      %339 = vmatprep.subr.mxu0 0.0
      %340 = vmatpush1.msra.mxu0 0.0
      %341 = vmatprep.subr.mxu0 0.0
      %342 = vmatpush1.msra.mxu0 0.0
      %343 = vmatprep.subr.mxu0 0.0
      %344 = vmatpush1.msra.mxu0 0.0
      %345 = vmatprep.subr.mxu0 0.0
      %346 = vmatpush1.msra.mxu0 0.0
      %347 = vmatprep.subr.mxu0 0.0
      %348 = vmatpush1.msra.mxu0 0.0
      %349 = vmatprep.subr.mxu0 0.0
      %350 = vmatpush1.msra.mxu0 0.0
      %351 = vmatprep.subr.mxu0 0.0
      %352 = vmatpush1.msra.mxu0 0.0
      %353 = vmatprep.subr.mxu0 0.0
      %354 = vmatpush1.msra.mxu0 0.0
      %355 = vmatprep.subr.mxu0 0.0
      %356 = vmatpush1.msra.mxu0 0.0
      %357 = vmatprep.subr.mxu0 0.0
      %358 = vmatpush1.msra.mxu0 0.0
      %359 = vmatprep.subr.mxu0 0.0
      %360 = vmatpush1.msra.mxu0 0.0
      %361 = vmatprep.subr.mxu0 0.0
      %362 = vmatpush1.msra.mxu0 0.0
      %363 = vmatprep.subr.mxu0 0.0
      %364 = vmatpush1.msra.mxu0 0.0
      %365 = vmatprep.subr.mxu0 0.0
      %366 = vmatpush1.msra.mxu0 0.0
      %367 = vmatprep.subr.mxu0 0.0
      %368 = vmatpush1.msra.mxu0 0.0
      %369 = vmatprep.mubr.f32.mxu0 0.0
      %370 = vmatmul.mubr.f32.gmra.mrb[0].mxu0 %v303
      %v371 = vpop.f32.mrb[0].mxu0
      %v372 = vadd.f32 0.0, %v371
      %v373 = vpop.f32.mrb[0].mxu0
      %v374 = vadd.f32 0.0, %v373
      %375 = vdwg.mxu0
      %v377 = vsel %vm301, %v207, 0
      %379 = vmatprep.subr.mxu0 %v280
      %380 = vmatpush1.msra.mxu0 %v279
      %381 = vmatprep.subr.mxu0 0.0
      %382 = vmatpush1.msra.mxu0 0.0
      %383 = vmatprep.subr.mxu0 0.0
      %384 = vmatpush1.msra.mxu0 0.0
      %385 = vmatprep.subr.mxu0 0.0
      %386 = vmatpush1.msra.mxu0 0.0
      %387 = vmatprep.subr.mxu0 0.0
      %388 = vmatpush1.msra.mxu0 0.0
      %389 = vmatprep.subr.mxu0 0.0
      %390 = vmatpush1.msra.mxu0 0.0
      %391 = vmatprep.subr.mxu0 0.0
      %392 = vmatpush1.msra.mxu0 0.0
      %393 = vmatprep.subr.mxu0 0.0
      %394 = vmatpush1.msra.mxu0 0.0
      %395 = vmatprep.subr.mxu0 0.0
      %396 = vmatpush1.msra.mxu0 0.0
      %397 = vmatprep.subr.mxu0 0.0
      %398 = vmatpush1.msra.mxu0 0.0
      %399 = vmatprep.subr.mxu0 0.0
      %400 = vmatpush1.msra.mxu0 0.0
      %401 = vmatprep.subr.mxu0 0.0
      %402 = vmatpush1.msra.mxu0 0.0
      %403 = vmatprep.subr.mxu0 0.0
      %404 = vmatpush1.msra.mxu0 0.0
      %405 = vmatprep.subr.mxu0 0.0
      %406 = vmatpush1.msra.mxu0 0.0
      %407 = vmatprep.subr.mxu0 0.0
      %408 = vmatpush1.msra.mxu0 0.0
      %409 = vmatprep.subr.mxu0 0.0
      %410 = vmatpush1.msra.mxu0 0.0
      %411 = vmatprep.subr.mxu0 0.0
      %412 = vmatpush1.msra.mxu0 0.0
      %413 = vmatprep.subr.mxu0 0.0
      %414 = vmatpush1.msra.mxu0 0.0
      %415 = vmatprep.subr.mxu0 0.0
      %416 = vmatpush1.msra.mxu0 0.0
      %417 = vmatprep.subr.mxu0 0.0
      %418 = vmatpush1.msra.mxu0 0.0
      %419 = vmatprep.subr.mxu0 0.0
      %420 = vmatpush1.msra.mxu0 0.0
      %421 = vmatprep.subr.mxu0 0.0
      %422 = vmatpush1.msra.mxu0 0.0
      %423 = vmatprep.subr.mxu0 0.0
      %424 = vmatpush1.msra.mxu0 0.0
      %425 = vmatprep.subr.mxu0 0.0
      %426 = vmatpush1.msra.mxu0 0.0
      %427 = vmatprep.subr.mxu0 0.0
      %428 = vmatpush1.msra.mxu0 0.0
      %429 = vmatprep.subr.mxu0 0.0
      %430 = vmatpush1.msra.mxu0 0.0
      %431 = vmatprep.subr.mxu0 0.0
      %432 = vmatpush1.msra.mxu0 0.0
      %433 = vmatprep.subr.mxu0 0.0
      %434 = vmatpush1.msra.mxu0 0.0
      %435 = vmatprep.subr.mxu0 0.0
      %436 = vmatpush1.msra.mxu0 0.0
      %437 = vmatprep.subr.mxu0 0.0
      %438 = vmatpush1.msra.mxu0 0.0
      %439 = vmatprep.subr.mxu0 0.0
      %440 = vmatpush1.msra.mxu0 0.0
      %441 = vmatprep.subr.mxu0 0.0
      %442 = vmatpush1.msra.mxu0 0.0
      %443 = vmatprep.mubr.f32.mxu0 0.0
      %444 = vmatmul.mubr.f32.gmra.mrb[0].mxu0 %v377
      %v445 = vpop.f32.mrb[0].mxu0
      %v446 = vadd.f32 %v372, %v445
      %v447 = vpop.f32.mrb[0].mxu0
      %v448 = vadd.f32 %v374, %v447
      %449 = vdwg.mxu0
      %450 = vrot.lane.b32.xlu0 %v257, 15
      %v451 = vpop.permute.xlu0 %450
      %452 = vrot.lane.b32.xlu0 %v258, 15
      %v453 = vpop.permute.xlu0 %452
      %vm454 = vcmp.lt.s32.totalorder %v264, 15
      %v455 = vsel %vm454, %v451, %v453
      %v456 = vsel %vm454, %v453, %v451
      %v458 = vlaneseq
      %v459 = vshrl.u32 %v458, 7
      %v460 = vsub.s32 0, %v459
      %v461 = vrot.slane %v246, %v460
      %v462 = vlaneseq
      %v463 = vshrl.u32 %v462, 7
      %v464 = vsub.s32 1, %v463
      %v465 = vrot.slane %v246, %v464
      %v468 = vmul.f32 %v456, %v461
      %v469 = vmul.f32 %v455, %v465
      %v471 = vsel %vm301, %v211, 0
      %473 = vmatprep.subr.mxu0 %v469
      %474 = vmatpush1.msra.mxu0 %v468
      %475 = vmatprep.subr.mxu0 0.0
      %476 = vmatpush1.msra.mxu0 0.0
      %477 = vmatprep.subr.mxu0 0.0
      %478 = vmatpush1.msra.mxu0 0.0
      %479 = vmatprep.subr.mxu0 0.0
      %480 = vmatpush1.msra.mxu0 0.0
      %481 = vmatprep.subr.mxu0 0.0
      %482 = vmatpush1.msra.mxu0 0.0
      %483 = vmatprep.subr.mxu0 0.0
      %484 = vmatpush1.msra.mxu0 0.0
      %485 = vmatprep.subr.mxu0 0.0
      %486 = vmatpush1.msra.mxu0 0.0
      %487 = vmatprep.subr.mxu0 0.0
      %488 = vmatpush1.msra.mxu0 0.0
      %489 = vmatprep.subr.mxu0 0.0
      %490 = vmatpush1.msra.mxu0 0.0
      %491 = vmatprep.subr.mxu0 0.0
      %492 = vmatpush1.msra.mxu0 0.0
      %493 = vmatprep.subr.mxu0 0.0
      %494 = vmatpush1.msra.mxu0 0.0
      %495 = vmatprep.subr.mxu0 0.0
      %496 = vmatpush1.msra.mxu0 0.0
      %497 = vmatprep.subr.mxu0 0.0
      %498 = vmatpush1.msra.mxu0 0.0
      %499 = vmatprep.subr.mxu0 0.0
      %500 = vmatpush1.msra.mxu0 0.0
      %501 = vmatprep.subr.mxu0 0.0
      %502 = vmatpush1.msra.mxu0 0.0
      %503 = vmatprep.subr.mxu0 0.0
      %504 = vmatpush1.msra.mxu0 0.0
      %505 = vmatprep.subr.mxu0 0.0
      %506 = vmatpush1.msra.mxu0 0.0
      %507 = vmatprep.subr.mxu0 0.0
      %508 = vmatpush1.msra.mxu0 0.0
      %509 = vmatprep.subr.mxu0 0.0
      %510 = vmatpush1.msra.mxu0 0.0
      %511 = vmatprep.subr.mxu0 0.0
      %512 = vmatpush1.msra.mxu0 0.0
      %513 = vmatprep.subr.mxu0 0.0
      %514 = vmatpush1.msra.mxu0 0.0
      %515 = vmatprep.subr.mxu0 0.0
      %516 = vmatpush1.msra.mxu0 0.0
      %517 = vmatprep.subr.mxu0 0.0
      %518 = vmatpush1.msra.mxu0 0.0
      %519 = vmatprep.subr.mxu0 0.0
      %520 = vmatpush1.msra.mxu0 0.0
      %521 = vmatprep.subr.mxu0 0.0
      %522 = vmatpush1.msra.mxu0 0.0
      %523 = vmatprep.subr.mxu0 0.0
      %524 = vmatpush1.msra.mxu0 0.0
      %525 = vmatprep.subr.mxu0 0.0
      %526 = vmatpush1.msra.mxu0 0.0
      %527 = vmatprep.subr.mxu0 0.0
      %528 = vmatpush1.msra.mxu0 0.0
      %529 = vmatprep.subr.mxu0 0.0
      %530 = vmatpush1.msra.mxu0 0.0
      %531 = vmatprep.subr.mxu0 0.0
      %532 = vmatpush1.msra.mxu0 0.0
      %533 = vmatprep.subr.mxu0 0.0
      %534 = vmatpush1.msra.mxu0 0.0
      %535 = vmatprep.subr.mxu0 0.0
      %536 = vmatpush1.msra.mxu0 0.0
      %537 = vmatprep.mubr.f32.mxu0 0.0
      %538 = vmatmul.mubr.f32.gmra.mrb[0].mxu0 %v471
      %v539 = vpop.f32.mrb[0].mxu0
      %v540 = vadd.f32 0.0, %v539
      %v541 = vpop.f32.mrb[0].mxu0
      %v542 = vadd.f32 0.0, %v541
      %543 = vdwg.mxu0
      %v544 = vadd.f32 %v446, %v540
      %v545 = vadd.f32 %v448, %v542
      %546 = vrot.lane.b32.xlu0 %v257, 1
      %v547 = vpop.permute.xlu0 %546
      %548 = vrot.lane.b32.xlu0 %v258, 1
      %v549 = vpop.permute.xlu0 %548
      %vm550 = vcmp.lt.s32.totalorder %v264, 1
      %v551 = vsel %vm550, %v547, %v549
      %v552 = vsel %vm550, %v549, %v547
      %v554 = vlaneseq
      %v555 = vshrl.u32 %v554, 7
      %v556 = vsub.s32 0, %v555
      %v557 = vrot.slane %v248, %v556
      %v558 = vlaneseq
      %v559 = vshrl.u32 %v558, 7
      %v560 = vsub.s32 1, %v559
      %v561 = vrot.slane %v248, %v560
      %v564 = vmul.f32 %v552, %v557
      %v565 = vmul.f32 %v551, %v561
      %v567 = vsel %vm301, %v213, 0
      %569 = vmatprep.subr.mxu0 %v565
      %570 = vmatpush1.msra.mxu0 %v564
      %571 = vmatprep.subr.mxu0 0.0
      %572 = vmatpush1.msra.mxu0 0.0
      %573 = vmatprep.subr.mxu0 0.0
      %574 = vmatpush1.msra.mxu0 0.0
      %575 = vmatprep.subr.mxu0 0.0
      %576 = vmatpush1.msra.mxu0 0.0
      %577 = vmatprep.subr.mxu0 0.0
      %578 = vmatpush1.msra.mxu0 0.0
      %579 = vmatprep.subr.mxu0 0.0
      %580 = vmatpush1.msra.mxu0 0.0
      %581 = vmatprep.subr.mxu0 0.0
      %582 = vmatpush1.msra.mxu0 0.0
      %583 = vmatprep.subr.mxu0 0.0
      %584 = vmatpush1.msra.mxu0 0.0
      %585 = vmatprep.subr.mxu0 0.0
      %586 = vmatpush1.msra.mxu0 0.0
      %587 = vmatprep.subr.mxu0 0.0
      %588 = vmatpush1.msra.mxu0 0.0
      %589 = vmatprep.subr.mxu0 0.0
      %590 = vmatpush1.msra.mxu0 0.0
      %591 = vmatprep.subr.mxu0 0.0
      %592 = vmatpush1.msra.mxu0 0.0
      %593 = vmatprep.subr.mxu0 0.0
      %594 = vmatpush1.msra.mxu0 0.0
      %595 = vmatprep.subr.mxu0 0.0
      %596 = vmatpush1.msra.mxu0 0.0
      %597 = vmatprep.subr.mxu0 0.0
      %598 = vmatpush1.msra.mxu0 0.0
      %599 = vmatprep.subr.mxu0 0.0
      %600 = vmatpush1.msra.mxu0 0.0
      %601 = vmatprep.subr.mxu0 0.0
      %602 = vmatpush1.msra.mxu0 0.0
      %603 = vmatprep.subr.mxu0 0.0
      %604 = vmatpush1.msra.mxu0 0.0
      %605 = vmatprep.subr.mxu0 0.0
      %606 = vmatpush1.msra.mxu0 0.0
      %607 = vmatprep.subr.mxu0 0.0
      %608 = vmatpush1.msra.mxu0 0.0
      %609 = vmatprep.subr.mxu0 0.0
      %610 = vmatpush1.msra.mxu0 0.0
      %611 = vmatprep.subr.mxu0 0.0
      %612 = vmatpush1.msra.mxu0 0.0
      %613 = vmatprep.subr.mxu0 0.0
      %614 = vmatpush1.msra.mxu0 0.0
      %615 = vmatprep.subr.mxu0 0.0
      %616 = vmatpush1.msra.mxu0 0.0
      %617 = vmatprep.subr.mxu0 0.0
      %618 = vmatpush1.msra.mxu0 0.0
      %619 = vmatprep.subr.mxu0 0.0
      %620 = vmatpush1.msra.mxu0 0.0
      %621 = vmatprep.subr.mxu0 0.0
      %622 = vmatpush1.msra.mxu0 0.0
      %623 = vmatprep.subr.mxu0 0.0
      %624 = vmatpush1.msra.mxu0 0.0
      %625 = vmatprep.subr.mxu0 0.0
      %626 = vmatpush1.msra.mxu0 0.0
      %627 = vmatprep.subr.mxu0 0.0
      %628 = vmatpush1.msra.mxu0 0.0
      %629 = vmatprep.subr.mxu0 0.0
      %630 = vmatpush1.msra.mxu0 0.0
      %631 = vmatprep.subr.mxu0 0.0
      %632 = vmatpush1.msra.mxu0 0.0
      %633 = vmatprep.mubr.f32.mxu0 0.0
      %634 = vmatmul.mubr.f32.gmra.mrb[0].mxu0 %v567
      %v635 = vpop.f32.mrb[0].mxu0
      %v636 = vadd.f32 0.0, %v635
      %v637 = vpop.f32.mrb[0].mxu0
      %v638 = vadd.f32 0.0, %v637
      %639 = vdwg.mxu0
      %v640 = vadd.f32 %v544, %v636
      %v641 = vadd.f32 %v545, %v638
      %v643 = vsel %vm301, %v215, 0
      %645 = vmatprep.subr.mxu0 %v258
      %646 = vmatpush1.msra.mxu0 %v257
      %647 = vmatprep.subr.mxu0 0.0
      %648 = vmatpush1.msra.mxu0 0.0
      %649 = vmatprep.subr.mxu0 0.0
      %650 = vmatpush1.msra.mxu0 0.0
      %651 = vmatprep.subr.mxu0 0.0
      %652 = vmatpush1.msra.mxu0 0.0
      %653 = vmatprep.subr.mxu0 0.0
      %654 = vmatpush1.msra.mxu0 0.0
      %655 = vmatprep.subr.mxu0 0.0
      %656 = vmatpush1.msra.mxu0 0.0
      %657 = vmatprep.subr.mxu0 0.0
      %658 = vmatpush1.msra.mxu0 0.0
      %659 = vmatprep.subr.mxu0 0.0
      %660 = vmatpush1.msra.mxu0 0.0
      %661 = vmatprep.subr.mxu0 0.0
      %662 = vmatpush1.msra.mxu0 0.0
      %663 = vmatprep.subr.mxu0 0.0
      %664 = vmatpush1.msra.mxu0 0.0
      %665 = vmatprep.subr.mxu0 0.0
      %666 = vmatpush1.msra.mxu0 0.0
      %667 = vmatprep.subr.mxu0 0.0
      %668 = vmatpush1.msra.mxu0 0.0
      %669 = vmatprep.subr.mxu0 0.0
      %670 = vmatpush1.msra.mxu0 0.0
      %671 = vmatprep.subr.mxu0 0.0
      %672 = vmatpush1.msra.mxu0 0.0
      %673 = vmatprep.subr.mxu0 0.0
      %674 = vmatpush1.msra.mxu0 0.0
      %675 = vmatprep.subr.mxu0 0.0
      %676 = vmatpush1.msra.mxu0 0.0
      %677 = vmatprep.subr.mxu0 0.0
      %678 = vmatpush1.msra.mxu0 0.0
      %679 = vmatprep.subr.mxu0 0.0
      %680 = vmatpush1.msra.mxu0 0.0
      %681 = vmatprep.subr.mxu0 0.0
      %682 = vmatpush1.msra.mxu0 0.0
      %683 = vmatprep.subr.mxu0 0.0
      %684 = vmatpush1.msra.mxu0 0.0
      %685 = vmatprep.subr.mxu0 0.0
      %686 = vmatpush1.msra.mxu0 0.0
      %687 = vmatprep.subr.mxu0 0.0
      %688 = vmatpush1.msra.mxu0 0.0
      %689 = vmatprep.subr.mxu0 0.0
      %690 = vmatpush1.msra.mxu0 0.0
      %691 = vmatprep.subr.mxu0 0.0
      %692 = vmatpush1.msra.mxu0 0.0
      %693 = vmatprep.subr.mxu0 0.0
      %694 = vmatpush1.msra.mxu0 0.0
      %695 = vmatprep.subr.mxu0 0.0
      %696 = vmatpush1.msra.mxu0 0.0
      %697 = vmatprep.subr.mxu0 0.0
      %698 = vmatpush1.msra.mxu0 0.0
      %699 = vmatprep.subr.mxu0 0.0
      %700 = vmatpush1.msra.mxu0 0.0
      %701 = vmatprep.subr.mxu0 0.0
      %702 = vmatpush1.msra.mxu0 0.0
      %703 = vmatprep.subr.mxu0 0.0
      %704 = vmatpush1.msra.mxu0 0.0
      %705 = vmatprep.subr.mxu0 0.0
      %706 = vmatpush1.msra.mxu0 0.0
      %707 = vmatprep.subr.mxu0 0.0
      %708 = vmatpush1.msra.mxu0 0.0
      %709 = vmatprep.mubr.f32.mxu0 0.0
      %710 = vmatmul.mubr.f32.gmra.mrb[0].mxu0 %v643
      %v711 = vpop.f32.mrb[0].mxu0
      %v712 = vadd.f32 0.0, %v711
      %v713 = vpop.f32.mrb[0].mxu0
      %v714 = vadd.f32 0.0, %v713
      %715 = vdwg.mxu0
      %v716 = vadd.f32 %v640, %v712
      %v717 = vadd.f32 %v641, %v714
      %718 = vrot.lane.b32.xlu0 %v257, 127
      %v719 = vpop.permute.xlu0 %718
      %720 = vrot.lane.b32.xlu0 %v258, 127
      %v721 = vpop.permute.xlu0 %720
      %vm722 = vcmp.lt.s32.totalorder %v264, 127
      %v723 = vsel %vm722, %v719, %v721
      %v724 = vsel %vm722, %v721, %v719
      %v726 = vlaneseq
      %v727 = vshrl.u32 %v726, 7
      %v728 = vsub.s32 0, %v727
      %v729 = vrot.slane %v250, %v728
      %v730 = vlaneseq
      %v731 = vshrl.u32 %v730, 7
      %v732 = vsub.s32 1, %v731
      %v733 = vrot.slane %v250, %v732
      %v736 = vmul.f32 %v723, %v729
      %v737 = vmul.f32 %v724, %v733
      %v739 = vsel %vm301, %v217, 0
      %741 = vmatprep.subr.mxu0 %v737
      %742 = vmatpush1.msra.mxu0 %v736
      %743 = vmatprep.subr.mxu0 0.0
      %744 = vmatpush1.msra.mxu0 0.0
      %745 = vmatprep.subr.mxu0 0.0
      %746 = vmatpush1.msra.mxu0 0.0
      %747 = vmatprep.subr.mxu0 0.0
      %748 = vmatpush1.msra.mxu0 0.0
      %749 = vmatprep.subr.mxu0 0.0
      %750 = vmatpush1.msra.mxu0 0.0
      %751 = vmatprep.subr.mxu0 0.0
      %752 = vmatpush1.msra.mxu0 0.0
      %753 = vmatprep.subr.mxu0 0.0
      %754 = vmatpush1.msra.mxu0 0.0
      %755 = vmatprep.subr.mxu0 0.0
      %756 = vmatpush1.msra.mxu0 0.0
      %757 = vmatprep.subr.mxu0 0.0
      %758 = vmatpush1.msra.mxu0 0.0
      %759 = vmatprep.subr.mxu0 0.0
      %760 = vmatpush1.msra.mxu0 0.0
      %761 = vmatprep.subr.mxu0 0.0
      %762 = vmatpush1.msra.mxu0 0.0
      %763 = vmatprep.subr.mxu0 0.0
      %764 = vmatpush1.msra.mxu0 0.0
      %765 = vmatprep.subr.mxu0 0.0
      %766 = vmatpush1.msra.mxu0 0.0
      %767 = vmatprep.subr.mxu0 0.0
      %768 = vmatpush1.msra.mxu0 0.0
      %769 = vmatprep.subr.mxu0 0.0
      %770 = vmatpush1.msra.mxu0 0.0
      %771 = vmatprep.subr.mxu0 0.0
      %772 = vmatpush1.msra.mxu0 0.0
      %773 = vmatprep.subr.mxu0 0.0
      %774 = vmatpush1.msra.mxu0 0.0
      %775 = vmatprep.subr.mxu0 0.0
      %776 = vmatpush1.msra.mxu0 0.0
      %777 = vmatprep.subr.mxu0 0.0
      %778 = vmatpush1.msra.mxu0 0.0
      %779 = vmatprep.subr.mxu0 0.0
      %780 = vmatpush1.msra.mxu0 0.0
      %781 = vmatprep.subr.mxu0 0.0
      %782 = vmatpush1.msra.mxu0 0.0
      %783 = vmatprep.subr.mxu0 0.0
      %784 = vmatpush1.msra.mxu0 0.0
      %785 = vmatprep.subr.mxu0 0.0
      %786 = vmatpush1.msra.mxu0 0.0
      %787 = vmatprep.subr.mxu0 0.0
      %788 = vmatpush1.msra.mxu0 0.0
      %789 = vmatprep.subr.mxu0 0.0
      %790 = vmatpush1.msra.mxu0 0.0
      %791 = vmatprep.subr.mxu0 0.0
      %792 = vmatpush1.msra.mxu0 0.0
      %793 = vmatprep.subr.mxu0 0.0
      %794 = vmatpush1.msra.mxu0 0.0
      %795 = vmatprep.subr.mxu0 0.0
      %796 = vmatpush1.msra.mxu0 0.0
      %797 = vmatprep.subr.mxu0 0.0
      %798 = vmatpush1.msra.mxu0 0.0
      %799 = vmatprep.subr.mxu0 0.0
      %800 = vmatpush1.msra.mxu0 0.0
      %801 = vmatprep.subr.mxu0 0.0
      %802 = vmatpush1.msra.mxu0 0.0
      %803 = vmatprep.subr.mxu0 0.0
      %804 = vmatpush1.msra.mxu0 0.0
      %805 = vmatprep.mubr.f32.mxu0 0.0
      %806 = vmatmul.mubr.f32.gmra.mrb[0].mxu0 %v739
      %v807 = vpop.f32.mrb[0].mxu0
      %v808 = vadd.f32 0.0, %v807
      %v809 = vpop.f32.mrb[0].mxu0
      %v810 = vadd.f32 0.0, %v809
      %811 = vdwg.mxu0
      %v812 = vadd.f32 %v716, %v808
      %v813 = vadd.f32 %v717, %v810
      %814 = vrot.lane.b32.xlu0 %v257, 113
      %v815 = vpop.permute.xlu0 %814
      %816 = vrot.lane.b32.xlu0 %v258, 113
      %v817 = vpop.permute.xlu0 %816
      %vm818 = vcmp.lt.s32.totalorder %v264, 113
      %v819 = vsel %vm818, %v815, %v817
      %v820 = vsel %vm818, %v817, %v815
      %v822 = vlaneseq
      %v823 = vshrl.u32 %v822, 7
      %v824 = vsub.s32 0, %v823
      %v825 = vrot.slane %v252, %v824
      %v826 = vlaneseq
      %v827 = vshrl.u32 %v826, 7
      %v828 = vsub.s32 1, %v827
      %v829 = vrot.slane %v252, %v828
      %v832 = vmul.f32 %v819, %v825
      %v833 = vmul.f32 %v820, %v829
      %v835 = vsel %vm301, %v219, 0
      %837 = vmatprep.subr.mxu0 %v833
      %838 = vmatpush1.msra.mxu0 %v832
      %839 = vmatprep.subr.mxu0 0.0
      %840 = vmatpush1.msra.mxu0 0.0
      %841 = vmatprep.subr.mxu0 0.0
      %842 = vmatpush1.msra.mxu0 0.0
      %843 = vmatprep.subr.mxu0 0.0
      %844 = vmatpush1.msra.mxu0 0.0
      %845 = vmatprep.subr.mxu0 0.0
      %846 = vmatpush1.msra.mxu0 0.0
      %847 = vmatprep.subr.mxu0 0.0
      %848 = vmatpush1.msra.mxu0 0.0
      %849 = vmatprep.subr.mxu0 0.0
      %850 = vmatpush1.msra.mxu0 0.0
      %851 = vmatprep.subr.mxu0 0.0
      %852 = vmatpush1.msra.mxu0 0.0
      %853 = vmatprep.subr.mxu0 0.0
      %854 = vmatpush1.msra.mxu0 0.0
      %855 = vmatprep.subr.mxu0 0.0
      %856 = vmatpush1.msra.mxu0 0.0
      %857 = vmatprep.subr.mxu0 0.0
      %858 = vmatpush1.msra.mxu0 0.0
      %859 = vmatprep.subr.mxu0 0.0
      %860 = vmatpush1.msra.mxu0 0.0
      %861 = vmatprep.subr.mxu0 0.0
      %862 = vmatpush1.msra.mxu0 0.0
      %863 = vmatprep.subr.mxu0 0.0
      %864 = vmatpush1.msra.mxu0 0.0
      %865 = vmatprep.subr.mxu0 0.0
      %866 = vmatpush1.msra.mxu0 0.0
      %867 = vmatprep.subr.mxu0 0.0
      %868 = vmatpush1.msra.mxu0 0.0
      %869 = vmatprep.subr.mxu0 0.0
      %870 = vmatpush1.msra.mxu0 0.0
      %871 = vmatprep.subr.mxu0 0.0
      %872 = vmatpush1.msra.mxu0 0.0
      %873 = vmatprep.subr.mxu0 0.0
      %874 = vmatpush1.msra.mxu0 0.0
      %875 = vmatprep.subr.mxu0 0.0
      %876 = vmatpush1.msra.mxu0 0.0
      %877 = vmatprep.subr.mxu0 0.0
      %878 = vmatpush1.msra.mxu0 0.0
      %879 = vmatprep.subr.mxu0 0.0
      %880 = vmatpush1.msra.mxu0 0.0
      %881 = vmatprep.subr.mxu0 0.0
      %882 = vmatpush1.msra.mxu0 0.0
      %883 = vmatprep.subr.mxu0 0.0
      %884 = vmatpush1.msra.mxu0 0.0
      %885 = vmatprep.subr.mxu0 0.0
      %886 = vmatpush1.msra.mxu0 0.0
      %887 = vmatprep.subr.mxu0 0.0
      %888 = vmatpush1.msra.mxu0 0.0
      %889 = vmatprep.subr.mxu0 0.0
      %890 = vmatpush1.msra.mxu0 0.0
      %891 = vmatprep.subr.mxu0 0.0
      %892 = vmatpush1.msra.mxu0 0.0
      %893 = vmatprep.subr.mxu0 0.0
      %894 = vmatpush1.msra.mxu0 0.0
      %895 = vmatprep.subr.mxu0 0.0
      %896 = vmatpush1.msra.mxu0 0.0
      %897 = vmatprep.subr.mxu0 0.0
      %898 = vmatpush1.msra.mxu0 0.0
      %899 = vmatprep.subr.mxu0 0.0
      %900 = vmatpush1.msra.mxu0 0.0
      %901 = vmatprep.mubr.f32.mxu0 0.0
      %902 = vmatmul.mubr.f32.gmra.mrb[0].mxu0 %v835
      %v903 = vpop.f32.mrb[0].mxu0
      %v904 = vadd.f32 0.0, %v903
      %v905 = vpop.f32.mrb[0].mxu0
      %v906 = vadd.f32 0.0, %v905
      %907 = vdwg.mxu0
      %v908 = vadd.f32 %v812, %v904
      %v909 = vadd.f32 %v813, %v906
      %910 = vrot.lane.b32.xlu0 %v257, 112
      %v911 = vpop.permute.xlu0 %910
      %912 = vrot.lane.b32.xlu0 %v258, 112
      %v913 = vpop.permute.xlu0 %912
      %vm914 = vcmp.lt.s32.totalorder %v264, 112
      %v915 = vsel %vm914, %v911, %v913
      %v916 = vsel %vm914, %v913, %v911
      %v918 = vlaneseq
      %v919 = vshrl.u32 %v918, 7
      %v920 = vsub.s32 0, %v919
      %v921 = vrot.slane %v254, %v920
      %v922 = vlaneseq
      %v923 = vshrl.u32 %v922, 7
      %v924 = vsub.s32 1, %v923
      %v925 = vrot.slane %v254, %v924
      %v928 = vmul.f32 %v915, %v921
      %v929 = vmul.f32 %v916, %v925
      %v931 = vsel %vm301, %v221, 0
      %933 = vmatprep.subr.mxu0 %v929
      %934 = vmatpush1.msra.mxu0 %v928
      %935 = vmatprep.subr.mxu0 0.0
      %936 = vmatpush1.msra.mxu0 0.0
      %937 = vmatprep.subr.mxu0 0.0
      %938 = vmatpush1.msra.mxu0 0.0
      %939 = vmatprep.subr.mxu0 0.0
      %940 = vmatpush1.msra.mxu0 0.0
      %941 = vmatprep.subr.mxu0 0.0
      %942 = vmatpush1.msra.mxu0 0.0
      %943 = vmatprep.subr.mxu0 0.0
      %944 = vmatpush1.msra.mxu0 0.0
      %945 = vmatprep.subr.mxu0 0.0
      %946 = vmatpush1.msra.mxu0 0.0
      %947 = vmatprep.subr.mxu0 0.0
      %948 = vmatpush1.msra.mxu0 0.0
      %949 = vmatprep.subr.mxu0 0.0
      %950 = vmatpush1.msra.mxu0 0.0
      %951 = vmatprep.subr.mxu0 0.0
      %952 = vmatpush1.msra.mxu0 0.0
      %953 = vmatprep.subr.mxu0 0.0
      %954 = vmatpush1.msra.mxu0 0.0
      %955 = vmatprep.subr.mxu0 0.0
      %956 = vmatpush1.msra.mxu0 0.0
      %957 = vmatprep.subr.mxu0 0.0
      %958 = vmatpush1.msra.mxu0 0.0
      %959 = vmatprep.subr.mxu0 0.0
      %960 = vmatpush1.msra.mxu0 0.0
      %961 = vmatprep.subr.mxu0 0.0
      %962 = vmatpush1.msra.mxu0 0.0
      %963 = vmatprep.subr.mxu0 0.0
      %964 = vmatpush1.msra.mxu0 0.0
      %965 = vmatprep.subr.mxu0 0.0
      %966 = vmatpush1.msra.mxu0 0.0
      %967 = vmatprep.subr.mxu0 0.0
      %968 = vmatpush1.msra.mxu0 0.0
      %969 = vmatprep.subr.mxu0 0.0
      %970 = vmatpush1.msra.mxu0 0.0
      %971 = vmatprep.subr.mxu0 0.0
      %972 = vmatpush1.msra.mxu0 0.0
      %973 = vmatprep.subr.mxu0 0.0
      %974 = vmatpush1.msra.mxu0 0.0
      %975 = vmatprep.subr.mxu0 0.0
      %976 = vmatpush1.msra.mxu0 0.0
      %977 = vmatprep.subr.mxu0 0.0
      %978 = vmatpush1.msra.mxu0 0.0
      %979 = vmatprep.subr.mxu0 0.0
      %980 = vmatpush1.msra.mxu0 0.0
      %981 = vmatprep.subr.mxu0 0.0
      %982 = vmatpush1.msra.mxu0 0.0
      %983 = vmatprep.subr.mxu0 0.0
      %984 = vmatpush1.msra.mxu0 0.0
      %985 = vmatprep.subr.mxu0 0.0
      %986 = vmatpush1.msra.mxu0 0.0
      %987 = vmatprep.subr.mxu0 0.0
      %988 = vmatpush1.msra.mxu0 0.0
      %989 = vmatprep.subr.mxu0 0.0
      %990 = vmatpush1.msra.mxu0 0.0
      %991 = vmatprep.subr.mxu0 0.0
      %992 = vmatpush1.msra.mxu0 0.0
      %993 = vmatprep.subr.mxu0 0.0
      %994 = vmatpush1.msra.mxu0 0.0
      %995 = vmatprep.subr.mxu0 0.0
      %996 = vmatpush1.msra.mxu0 0.0
      %997 = vmatprep.mubr.f32.mxu0 0.0
      %998 = vmatmul.mubr.f32.gmra.mrb[0].mxu0 %v931
      %v999 = vpop.f32.mrb[0].mxu0
      %v1000 = vadd.f32 0.0, %v999
      %v1001 = vpop.f32.mrb[0].mxu0
      %v1002 = vadd.f32 0.0, %v1001
      %1003 = vdwg.mxu0
      %v1004 = vadd.f32 %v908, %v1000
      %v1005 = vadd.f32 %v909, %v1002
      %1006 = vrot.lane.b32.xlu0 %v257, 111
      %v1007 = vpop.permute.xlu0 %1006
      %1008 = vrot.lane.b32.xlu0 %v258, 111
      %v1009 = vpop.permute.xlu0 %1008
      %vm1010 = vcmp.lt.s32.totalorder %v264, 111
      %v1011 = vsel %vm1010, %v1007, %v1009
      %v1012 = vsel %vm1010, %v1009, %v1007
      %v1014 = vlaneseq
      %v1015 = vshrl.u32 %v1014, 7
      %v1016 = vsub.s32 0, %v1015
      %v1017 = vrot.slane %v256, %v1016
      %v1018 = vlaneseq
      %v1019 = vshrl.u32 %v1018, 7
      %v1020 = vsub.s32 1, %v1019
      %v1021 = vrot.slane %v256, %v1020
      %v1024 = vmul.f32 %v1011, %v1017
      %v1025 = vmul.f32 %v1012, %v1021
      %v1027 = vsel %vm301, %v223, 0
      %1029 = vmatprep.subr.mxu0 %v1025
      %1030 = vmatpush1.msra.mxu0 %v1024
      %1031 = vmatprep.subr.mxu0 0.0
      %1032 = vmatpush1.msra.mxu0 0.0
      %1033 = vmatprep.subr.mxu0 0.0
      %1034 = vmatpush1.msra.mxu0 0.0
      %1035 = vmatprep.subr.mxu0 0.0
      %1036 = vmatpush1.msra.mxu0 0.0
      %1037 = vmatprep.subr.mxu0 0.0
      %1038 = vmatpush1.msra.mxu0 0.0
      %1039 = vmatprep.subr.mxu0 0.0
      %1040 = vmatpush1.msra.mxu0 0.0
      %1041 = vmatprep.subr.mxu0 0.0
      %1042 = vmatpush1.msra.mxu0 0.0
      %1043 = vmatprep.subr.mxu0 0.0
      %1044 = vmatpush1.msra.mxu0 0.0
      %1045 = vmatprep.subr.mxu0 0.0
      %1046 = vmatpush1.msra.mxu0 0.0
      %1047 = vmatprep.subr.mxu0 0.0
      %1048 = vmatpush1.msra.mxu0 0.0
      %1049 = vmatprep.subr.mxu0 0.0
      %1050 = vmatpush1.msra.mxu0 0.0
      %1051 = vmatprep.subr.mxu0 0.0
      %1052 = vmatpush1.msra.mxu0 0.0
      %1053 = vmatprep.subr.mxu0 0.0
      %1054 = vmatpush1.msra.mxu0 0.0
      %1055 = vmatprep.subr.mxu0 0.0
      %1056 = vmatpush1.msra.mxu0 0.0
      %1057 = vmatprep.subr.mxu0 0.0
      %1058 = vmatpush1.msra.mxu0 0.0
      %1059 = vmatprep.subr.mxu0 0.0
      %1060 = vmatpush1.msra.mxu0 0.0
      %1061 = vmatprep.subr.mxu0 0.0
      %1062 = vmatpush1.msra.mxu0 0.0
      %1063 = vmatprep.subr.mxu0 0.0
      %1064 = vmatpush1.msra.mxu0 0.0
      %1065 = vmatprep.subr.mxu0 0.0
      %1066 = vmatpush1.msra.mxu0 0.0
      %1067 = vmatprep.subr.mxu0 0.0
      %1068 = vmatpush1.msra.mxu0 0.0
      %1069 = vmatprep.subr.mxu0 0.0
      %1070 = vmatpush1.msra.mxu0 0.0
      %1071 = vmatprep.subr.mxu0 0.0
      %1072 = vmatpush1.msra.mxu0 0.0
      %1073 = vmatprep.subr.mxu0 0.0
      %1074 = vmatpush1.msra.mxu0 0.0
      %1075 = vmatprep.subr.mxu0 0.0
      %1076 = vmatpush1.msra.mxu0 0.0
      %1077 = vmatprep.subr.mxu0 0.0
      %1078 = vmatpush1.msra.mxu0 0.0
      %1079 = vmatprep.subr.mxu0 0.0
      %1080 = vmatpush1.msra.mxu0 0.0
      %1081 = vmatprep.subr.mxu0 0.0
      %1082 = vmatpush1.msra.mxu0 0.0
      %1083 = vmatprep.subr.mxu0 0.0
      %1084 = vmatpush1.msra.mxu0 0.0
      %1085 = vmatprep.subr.mxu0 0.0
      %1086 = vmatpush1.msra.mxu0 0.0
      %1087 = vmatprep.subr.mxu0 0.0
      %1088 = vmatpush1.msra.mxu0 0.0
      %1089 = vmatprep.subr.mxu0 0.0
      %1090 = vmatpush1.msra.mxu0 0.0
      %1091 = vmatprep.subr.mxu0 0.0
      %1092 = vmatpush1.msra.mxu0 0.0
      %1093 = vmatprep.mubr.f32.mxu0 0.0
      %1094 = vmatmul.mubr.f32.gmra.mrb[0].mxu0 %v1027
      %v1095 = vpop.f32.mrb[0].mxu0
      %v1096 = vadd.f32 0.0, %v1095
      %v1097 = vpop.f32.mrb[0].mxu0
      %v1098 = vadd.f32 0.0, %v1097
      %1099 = vdwg.mxu0
      %v1100 = vadd.f32 %v1004, %v1096
      %v1101 = vadd.f32 %v1005, %v1098
      %1103 = vset.pattern.permute.xlu0 0
      %1104 = vperm.xlu0 %1103, %v206
      %v1105 = vpop.permute.xlu0 %1104
      %v1107 = vmul.f32 %v1100, %v1105
      %v1108 = vmul.f32 %v1101, %v1105
      %1109 = vset.pattern.permute.xlu0 1
      %1110 = vperm.xlu0 %1109, %v206
      %v1111 = vpop.permute.xlu0 %1110
      %v1113 = vadd.f32 %v1107, %v1111
      %v1114 = vadd.f32 %v1108, %v1111
      %v1115 = vmax.f32 %v1113, 0.0
      %v1116 = vmax.f32 %v1114, 0.0
      %1117 = vrot.lane.b32.xlu0 %v1115, 17
      %v1118 = vpop.permute.xlu0 %1117
      %1119 = vrot.lane.b32.xlu0 %v1116, 17
      %v1120 = vpop.permute.xlu0 %1119
      %v1121 = vsel %vm265, %v1118, %v1120
      %v1122 = vsel %vm265, %v1120, %v1118
      %v1123 = vmul.f32 %v1122, %v272
      %v1124 = vmul.f32 %v1121, %v276
      %1125 = vrot.lane.b32.xlu0 %v1115, 16
      %v1126 = vpop.permute.xlu0 %1125
      %1127 = vrot.lane.b32.xlu0 %v1116, 16
      %v1128 = vpop.permute.xlu0 %1127
      %v1129 = vsel %vm285, %v1126, %v1128
      %v1130 = vsel %vm285, %v1128, %v1126
      %v1131 = vmul.f32 %v1130, %v292
      %v1132 = vmul.f32 %v1129, %v296
      %v1134 = vsel %vm301, %v227, 0
      %1136 = vmatprep.subr.mxu0 %v1132
      %1137 = vmatpush1.msra.mxu0 %v1131
      %1138 = vmatprep.subr.mxu0 0.0
      %1139 = vmatpush1.msra.mxu0 0.0
      %1140 = vmatprep.subr.mxu0 0.0
      %1141 = vmatpush1.msra.mxu0 0.0
      %1142 = vmatprep.subr.mxu0 0.0
      %1143 = vmatpush1.msra.mxu0 0.0
      %1144 = vmatprep.subr.mxu0 0.0
      %1145 = vmatpush1.msra.mxu0 0.0
      %1146 = vmatprep.subr.mxu0 0.0
      %1147 = vmatpush1.msra.mxu0 0.0
      %1148 = vmatprep.subr.mxu0 0.0
      %1149 = vmatpush1.msra.mxu0 0.0
      %1150 = vmatprep.subr.mxu0 0.0
      %1151 = vmatpush1.msra.mxu0 0.0
      %1152 = vmatprep.subr.mxu0 0.0
      %1153 = vmatpush1.msra.mxu0 0.0
      %1154 = vmatprep.subr.mxu0 0.0
      %1155 = vmatpush1.msra.mxu0 0.0
      %1156 = vmatprep.subr.mxu0 0.0
      %1157 = vmatpush1.msra.mxu0 0.0
      %1158 = vmatprep.subr.mxu0 0.0
      %1159 = vmatpush1.msra.mxu0 0.0
      %1160 = vmatprep.subr.mxu0 0.0
      %1161 = vmatpush1.msra.mxu0 0.0
      %1162 = vmatprep.subr.mxu0 0.0
      %1163 = vmatpush1.msra.mxu0 0.0
      %1164 = vmatprep.subr.mxu0 0.0
      %1165 = vmatpush1.msra.mxu0 0.0
      %1166 = vmatprep.subr.mxu0 0.0
      %1167 = vmatpush1.msra.mxu0 0.0
      %1168 = vmatprep.subr.mxu0 0.0
      %1169 = vmatpush1.msra.mxu0 0.0
      %1170 = vmatprep.subr.mxu0 0.0
      %1171 = vmatpush1.msra.mxu0 0.0
      %1172 = vmatprep.subr.mxu0 0.0
      %1173 = vmatpush1.msra.mxu0 0.0
      %1174 = vmatprep.subr.mxu0 0.0
      %1175 = vmatpush1.msra.mxu0 0.0
      %1176 = vmatprep.subr.mxu0 0.0
      %1177 = vmatpush1.msra.mxu0 0.0
      %1178 = vmatprep.subr.mxu0 0.0
      %1179 = vmatpush1.msra.mxu0 0.0
      %1180 = vmatprep.subr.mxu0 0.0
      %1181 = vmatpush1.msra.mxu0 0.0
      %1182 = vmatprep.subr.mxu0 0.0
      %1183 = vmatpush1.msra.mxu0 0.0
      %1184 = vmatprep.subr.mxu0 0.0
      %1185 = vmatpush1.msra.mxu0 0.0
      %1186 = vmatprep.subr.mxu0 0.0
      %1187 = vmatpush1.msra.mxu0 0.0
      %1188 = vmatprep.subr.mxu0 0.0
      %1189 = vmatpush1.msra.mxu0 0.0
      %1190 = vmatprep.subr.mxu0 0.0
      %1191 = vmatpush1.msra.mxu0 0.0
      %1192 = vmatprep.subr.mxu0 0.0
      %1193 = vmatpush1.msra.mxu0 0.0
      %1194 = vmatprep.subr.mxu0 0.0
      %1195 = vmatpush1.msra.mxu0 0.0
      %1196 = vmatprep.subr.mxu0 0.0
      %1197 = vmatpush1.msra.mxu0 0.0
      %1198 = vmatprep.subr.mxu0 0.0
      %1199 = vmatpush1.msra.mxu0 0.0
      %1200 = vmatprep.mubr.f32.mxu0 0.0
      %1201 = vmatmul.mubr.f32.gmra.mrb[0].mxu0 %v1134
      %v1202 = vpop.f32.mrb[0].mxu0
      %v1203 = vadd.f32 0.0, %v1202
      %v1204 = vpop.f32.mrb[0].mxu0
      %v1205 = vadd.f32 0.0, %v1204
      %1206 = vdwg.mxu0
      %v1208 = vsel %vm301, %v225, 0
      %1210 = vmatprep.subr.mxu0 %v1124
      %1211 = vmatpush1.msra.mxu0 %v1123
      %1212 = vmatprep.subr.mxu0 0.0
      %1213 = vmatpush1.msra.mxu0 0.0
      %1214 = vmatprep.subr.mxu0 0.0
      %1215 = vmatpush1.msra.mxu0 0.0
      %1216 = vmatprep.subr.mxu0 0.0
      %1217 = vmatpush1.msra.mxu0 0.0
      %1218 = vmatprep.subr.mxu0 0.0
      %1219 = vmatpush1.msra.mxu0 0.0
      %1220 = vmatprep.subr.mxu0 0.0
      %1221 = vmatpush1.msra.mxu0 0.0
      %1222 = vmatprep.subr.mxu0 0.0
      %1223 = vmatpush1.msra.mxu0 0.0
      %1224 = vmatprep.subr.mxu0 0.0
      %1225 = vmatpush1.msra.mxu0 0.0
      %1226 = vmatprep.subr.mxu0 0.0
      %1227 = vmatpush1.msra.mxu0 0.0
      %1228 = vmatprep.subr.mxu0 0.0
      %1229 = vmatpush1.msra.mxu0 0.0
      %1230 = vmatprep.subr.mxu0 0.0
      %1231 = vmatpush1.msra.mxu0 0.0
      %1232 = vmatprep.subr.mxu0 0.0
      %1233 = vmatpush1.msra.mxu0 0.0
      %1234 = vmatprep.subr.mxu0 0.0
      %1235 = vmatpush1.msra.mxu0 0.0
      %1236 = vmatprep.subr.mxu0 0.0
      %1237 = vmatpush1.msra.mxu0 0.0
      %1238 = vmatprep.subr.mxu0 0.0
      %1239 = vmatpush1.msra.mxu0 0.0
      %1240 = vmatprep.subr.mxu0 0.0
      %1241 = vmatpush1.msra.mxu0 0.0
      %1242 = vmatprep.subr.mxu0 0.0
      %1243 = vmatpush1.msra.mxu0 0.0
      %1244 = vmatprep.subr.mxu0 0.0
      %1245 = vmatpush1.msra.mxu0 0.0
      %1246 = vmatprep.subr.mxu0 0.0
      %1247 = vmatpush1.msra.mxu0 0.0
      %1248 = vmatprep.subr.mxu0 0.0
      %1249 = vmatpush1.msra.mxu0 0.0
      %1250 = vmatprep.subr.mxu0 0.0
      %1251 = vmatpush1.msra.mxu0 0.0
      %1252 = vmatprep.subr.mxu0 0.0
      %1253 = vmatpush1.msra.mxu0 0.0
      %1254 = vmatprep.subr.mxu0 0.0
      %1255 = vmatpush1.msra.mxu0 0.0
      %1256 = vmatprep.subr.mxu0 0.0
      %1257 = vmatpush1.msra.mxu0 0.0
      %1258 = vmatprep.subr.mxu0 0.0
      %1259 = vmatpush1.msra.mxu0 0.0
      %1260 = vmatprep.subr.mxu0 0.0
      %1261 = vmatpush1.msra.mxu0 0.0
      %1262 = vmatprep.subr.mxu0 0.0
      %1263 = vmatpush1.msra.mxu0 0.0
      %1264 = vmatprep.subr.mxu0 0.0
      %1265 = vmatpush1.msra.mxu0 0.0
      %1266 = vmatprep.subr.mxu0 0.0
      %1267 = vmatpush1.msra.mxu0 0.0
      %1268 = vmatprep.subr.mxu0 0.0
      %1269 = vmatpush1.msra.mxu0 0.0
      %1270 = vmatprep.subr.mxu0 0.0
      %1271 = vmatpush1.msra.mxu0 0.0
      %1272 = vmatprep.subr.mxu0 0.0
      %1273 = vmatpush1.msra.mxu0 0.0
      %1274 = vmatprep.mubr.f32.mxu0 0.0
      %1275 = vmatmul.mubr.f32.gmra.mrb[0].mxu0 %v1208
      %v1276 = vpop.f32.mrb[0].mxu0
      %v1277 = vadd.f32 %v1203, %v1276
      %v1278 = vpop.f32.mrb[0].mxu0
      %v1279 = vadd.f32 %v1205, %v1278
      %1280 = vdwg.mxu0
      %1281 = vrot.lane.b32.xlu0 %v1115, 15
      %v1282 = vpop.permute.xlu0 %1281
      %1283 = vrot.lane.b32.xlu0 %v1116, 15
      %v1284 = vpop.permute.xlu0 %1283
      %v1285 = vsel %vm454, %v1282, %v1284
      %v1286 = vsel %vm454, %v1284, %v1282
      %v1287 = vmul.f32 %v1286, %v461
      %v1288 = vmul.f32 %v1285, %v465
      %v1290 = vsel %vm301, %v229, 0
      %1292 = vmatprep.subr.mxu0 %v1288
      %1293 = vmatpush1.msra.mxu0 %v1287
      %1294 = vmatprep.subr.mxu0 0.0
      %1295 = vmatpush1.msra.mxu0 0.0
      %1296 = vmatprep.subr.mxu0 0.0
      %1297 = vmatpush1.msra.mxu0 0.0
      %1298 = vmatprep.subr.mxu0 0.0
      %1299 = vmatpush1.msra.mxu0 0.0
      %1300 = vmatprep.subr.mxu0 0.0
      %1301 = vmatpush1.msra.mxu0 0.0
      %1302 = vmatprep.subr.mxu0 0.0
      %1303 = vmatpush1.msra.mxu0 0.0
      %1304 = vmatprep.subr.mxu0 0.0
      %1305 = vmatpush1.msra.mxu0 0.0
      %1306 = vmatprep.subr.mxu0 0.0
      %1307 = vmatpush1.msra.mxu0 0.0
      %1308 = vmatprep.subr.mxu0 0.0
      %1309 = vmatpush1.msra.mxu0 0.0
      %1310 = vmatprep.subr.mxu0 0.0
      %1311 = vmatpush1.msra.mxu0 0.0
      %1312 = vmatprep.subr.mxu0 0.0
      %1313 = vmatpush1.msra.mxu0 0.0
      %1314 = vmatprep.subr.mxu0 0.0
      %1315 = vmatpush1.msra.mxu0 0.0
      %1316 = vmatprep.subr.mxu0 0.0
      %1317 = vmatpush1.msra.mxu0 0.0
      %1318 = vmatprep.subr.mxu0 0.0
      %1319 = vmatpush1.msra.mxu0 0.0
      %1320 = vmatprep.subr.mxu0 0.0
      %1321 = vmatpush1.msra.mxu0 0.0
      %1322 = vmatprep.subr.mxu0 0.0
      %1323 = vmatpush1.msra.mxu0 0.0
      %1324 = vmatprep.subr.mxu0 0.0
      %1325 = vmatpush1.msra.mxu0 0.0
      %1326 = vmatprep.subr.mxu0 0.0
      %1327 = vmatpush1.msra.mxu0 0.0
      %1328 = vmatprep.subr.mxu0 0.0
      %1329 = vmatpush1.msra.mxu0 0.0
      %1330 = vmatprep.subr.mxu0 0.0
      %1331 = vmatpush1.msra.mxu0 0.0
      %1332 = vmatprep.subr.mxu0 0.0
      %1333 = vmatpush1.msra.mxu0 0.0
      %1334 = vmatprep.subr.mxu0 0.0
      %1335 = vmatpush1.msra.mxu0 0.0
      %1336 = vmatprep.subr.mxu0 0.0
      %1337 = vmatpush1.msra.mxu0 0.0
      %1338 = vmatprep.subr.mxu0 0.0
      %1339 = vmatpush1.msra.mxu0 0.0
      %1340 = vmatprep.subr.mxu0 0.0
      %1341 = vmatpush1.msra.mxu0 0.0
      %1342 = vmatprep.subr.mxu0 0.0
      %1343 = vmatpush1.msra.mxu0 0.0
      %1344 = vmatprep.subr.mxu0 0.0
      %1345 = vmatpush1.msra.mxu0 0.0
      %1346 = vmatprep.subr.mxu0 0.0
      %1347 = vmatpush1.msra.mxu0 0.0
      %1348 = vmatprep.subr.mxu0 0.0
      %1349 = vmatpush1.msra.mxu0 0.0
      %1350 = vmatprep.subr.mxu0 0.0
      %1351 = vmatpush1.msra.mxu0 0.0
      %1352 = vmatprep.subr.mxu0 0.0
      %1353 = vmatpush1.msra.mxu0 0.0
      %1354 = vmatprep.subr.mxu0 0.0
      %1355 = vmatpush1.msra.mxu0 0.0
      %1356 = vmatprep.mubr.f32.mxu0 0.0
      %1357 = vmatmul.mubr.f32.gmra.mrb[0].mxu0 %v1290
      %v1358 = vpop.f32.mrb[0].mxu0
      %v1359 = vadd.f32 0.0, %v1358
      %v1360 = vpop.f32.mrb[0].mxu0
      %v1361 = vadd.f32 0.0, %v1360
      %1362 = vdwg.mxu0
      %v1363 = vadd.f32 %v1277, %v1359
      %v1364 = vadd.f32 %v1279, %v1361
      %1365 = vrot.lane.b32.xlu0 %v1115, 1
      %v1366 = vpop.permute.xlu0 %1365
      %1367 = vrot.lane.b32.xlu0 %v1116, 1
      %v1368 = vpop.permute.xlu0 %1367
      %v1369 = vsel %vm550, %v1366, %v1368
      %v1370 = vsel %vm550, %v1368, %v1366
      %v1371 = vmul.f32 %v1370, %v557
      %v1372 = vmul.f32 %v1369, %v561
      %v1374 = vsel %vm301, %v231, 0
      %1376 = vmatprep.subr.mxu0 %v1372
      %1377 = vmatpush1.msra.mxu0 %v1371
      %1378 = vmatprep.subr.mxu0 0.0
      %1379 = vmatpush1.msra.mxu0 0.0
      %1380 = vmatprep.subr.mxu0 0.0
      %1381 = vmatpush1.msra.mxu0 0.0
      %1382 = vmatprep.subr.mxu0 0.0
      %1383 = vmatpush1.msra.mxu0 0.0
      %1384 = vmatprep.subr.mxu0 0.0
      %1385 = vmatpush1.msra.mxu0 0.0
      %1386 = vmatprep.subr.mxu0 0.0
      %1387 = vmatpush1.msra.mxu0 0.0
      %1388 = vmatprep.subr.mxu0 0.0
      %1389 = vmatpush1.msra.mxu0 0.0
      %1390 = vmatprep.subr.mxu0 0.0
      %1391 = vmatpush1.msra.mxu0 0.0
      %1392 = vmatprep.subr.mxu0 0.0
      %1393 = vmatpush1.msra.mxu0 0.0
      %1394 = vmatprep.subr.mxu0 0.0
      %1395 = vmatpush1.msra.mxu0 0.0
      %1396 = vmatprep.subr.mxu0 0.0
      %1397 = vmatpush1.msra.mxu0 0.0
      %1398 = vmatprep.subr.mxu0 0.0
      %1399 = vmatpush1.msra.mxu0 0.0
      %1400 = vmatprep.subr.mxu0 0.0
      %1401 = vmatpush1.msra.mxu0 0.0
      %1402 = vmatprep.subr.mxu0 0.0
      %1403 = vmatpush1.msra.mxu0 0.0
      %1404 = vmatprep.subr.mxu0 0.0
      %1405 = vmatpush1.msra.mxu0 0.0
      %1406 = vmatprep.subr.mxu0 0.0
      %1407 = vmatpush1.msra.mxu0 0.0
      %1408 = vmatprep.subr.mxu0 0.0
      %1409 = vmatpush1.msra.mxu0 0.0
      %1410 = vmatprep.subr.mxu0 0.0
      %1411 = vmatpush1.msra.mxu0 0.0
      %1412 = vmatprep.subr.mxu0 0.0
      %1413 = vmatpush1.msra.mxu0 0.0
      %1414 = vmatprep.subr.mxu0 0.0
      %1415 = vmatpush1.msra.mxu0 0.0
      %1416 = vmatprep.subr.mxu0 0.0
      %1417 = vmatpush1.msra.mxu0 0.0
      %1418 = vmatprep.subr.mxu0 0.0
      %1419 = vmatpush1.msra.mxu0 0.0
      %1420 = vmatprep.subr.mxu0 0.0
      %1421 = vmatpush1.msra.mxu0 0.0
      %1422 = vmatprep.subr.mxu0 0.0
      %1423 = vmatpush1.msra.mxu0 0.0
      %1424 = vmatprep.subr.mxu0 0.0
      %1425 = vmatpush1.msra.mxu0 0.0
      %1426 = vmatprep.subr.mxu0 0.0
      %1427 = vmatpush1.msra.mxu0 0.0
      %1428 = vmatprep.subr.mxu0 0.0
      %1429 = vmatpush1.msra.mxu0 0.0
      %1430 = vmatprep.subr.mxu0 0.0
      %1431 = vmatpush1.msra.mxu0 0.0
      %1432 = vmatprep.subr.mxu0 0.0
      %1433 = vmatpush1.msra.mxu0 0.0
      %1434 = vmatprep.subr.mxu0 0.0
      %1435 = vmatpush1.msra.mxu0 0.0
      %1436 = vmatprep.subr.mxu0 0.0
      %1437 = vmatpush1.msra.mxu0 0.0
      %1438 = vmatprep.subr.mxu0 0.0
      %1439 = vmatpush1.msra.mxu0 0.0
      %1440 = vmatprep.mubr.f32.mxu0 0.0
      %1441 = vmatmul.mubr.f32.gmra.mrb[0].mxu0 %v1374
      %v1442 = vpop.f32.mrb[0].mxu0
      %v1443 = vadd.f32 0.0, %v1442
      %v1444 = vpop.f32.mrb[0].mxu0
      %v1445 = vadd.f32 0.0, %v1444
      %1446 = vdwg.mxu0
      %v1447 = vadd.f32 %v1363, %v1443
      %v1448 = vadd.f32 %v1364, %v1445
      %v1450 = vsel %vm301, %v233, 0
      %1452 = vmatprep.subr.mxu0 %v1116
      %1453 = vmatpush1.msra.mxu0 %v1115
      %1454 = vmatprep.subr.mxu0 0.0
      %1455 = vmatpush1.msra.mxu0 0.0
      %1456 = vmatprep.subr.mxu0 0.0
      %1457 = vmatpush1.msra.mxu0 0.0
      %1458 = vmatprep.subr.mxu0 0.0
      %1459 = vmatpush1.msra.mxu0 0.0
      %1460 = vmatprep.subr.mxu0 0.0
      %1461 = vmatpush1.msra.mxu0 0.0
      %1462 = vmatprep.subr.mxu0 0.0
      %1463 = vmatpush1.msra.mxu0 0.0
      %1464 = vmatprep.subr.mxu0 0.0
      %1465 = vmatpush1.msra.mxu0 0.0
      %1466 = vmatprep.subr.mxu0 0.0
      %1467 = vmatpush1.msra.mxu0 0.0
      %1468 = vmatprep.subr.mxu0 0.0
      %1469 = vmatpush1.msra.mxu0 0.0
      %1470 = vmatprep.subr.mxu0 0.0
      %1471 = vmatpush1.msra.mxu0 0.0
      %1472 = vmatprep.subr.mxu0 0.0
      %1473 = vmatpush1.msra.mxu0 0.0
      %1474 = vmatprep.subr.mxu0 0.0
      %1475 = vmatpush1.msra.mxu0 0.0
      %1476 = vmatprep.subr.mxu0 0.0
      %1477 = vmatpush1.msra.mxu0 0.0
      %1478 = vmatprep.subr.mxu0 0.0
      %1479 = vmatpush1.msra.mxu0 0.0
      %1480 = vmatprep.subr.mxu0 0.0
      %1481 = vmatpush1.msra.mxu0 0.0
      %1482 = vmatprep.subr.mxu0 0.0
      %1483 = vmatpush1.msra.mxu0 0.0
      %1484 = vmatprep.subr.mxu0 0.0
      %1485 = vmatpush1.msra.mxu0 0.0
      %1486 = vmatprep.subr.mxu0 0.0
      %1487 = vmatpush1.msra.mxu0 0.0
      %1488 = vmatprep.subr.mxu0 0.0
      %1489 = vmatpush1.msra.mxu0 0.0
      %1490 = vmatprep.subr.mxu0 0.0
      %1491 = vmatpush1.msra.mxu0 0.0
      %1492 = vmatprep.subr.mxu0 0.0
      %1493 = vmatpush1.msra.mxu0 0.0
      %1494 = vmatprep.subr.mxu0 0.0
      %1495 = vmatpush1.msra.mxu0 0.0
      %1496 = vmatprep.subr.mxu0 0.0
      %1497 = vmatpush1.msra.mxu0 0.0
      %1498 = vmatprep.subr.mxu0 0.0
      %1499 = vmatpush1.msra.mxu0 0.0
      %1500 = vmatprep.subr.mxu0 0.0
      %1501 = vmatpush1.msra.mxu0 0.0
      %1502 = vmatprep.subr.mxu0 0.0
      %1503 = vmatpush1.msra.mxu0 0.0
      %1504 = vmatprep.subr.mxu0 0.0
      %1505 = vmatpush1.msra.mxu0 0.0
      %1506 = vmatprep.subr.mxu0 0.0
      %1507 = vmatpush1.msra.mxu0 0.0
      %1508 = vmatprep.subr.mxu0 0.0
      %1509 = vmatpush1.msra.mxu0 0.0
      %1510 = vmatprep.subr.mxu0 0.0
      %1511 = vmatpush1.msra.mxu0 0.0
      %1512 = vmatprep.subr.mxu0 0.0
      %1513 = vmatpush1.msra.mxu0 0.0
      %1514 = vmatprep.subr.mxu0 0.0
      %1515 = vmatpush1.msra.mxu0 0.0
      %1516 = vmatprep.mubr.f32.mxu0 0.0
      %1517 = vmatmul.mubr.f32.gmra.mrb[0].mxu0 %v1450
      %v1518 = vpop.f32.mrb[0].mxu0
      %v1519 = vadd.f32 0.0, %v1518
      %v1520 = vpop.f32.mrb[0].mxu0
      %v1521 = vadd.f32 0.0, %v1520
      %1522 = vdwg.mxu0
      %v1523 = vadd.f32 %v1447, %v1519
      %v1524 = vadd.f32 %v1448, %v1521
      %1525 = vrot.lane.b32.xlu0 %v1115, 127
      %v1526 = vpop.permute.xlu0 %1525
      %1527 = vrot.lane.b32.xlu0 %v1116, 127
      %v1528 = vpop.permute.xlu0 %1527
      %v1529 = vsel %vm722, %v1526, %v1528
      %v1530 = vsel %vm722, %v1528, %v1526
      %v1531 = vmul.f32 %v1529, %v729
      %v1532 = vmul.f32 %v1530, %v733
      %v1534 = vsel %vm301, %v235, 0
      %1536 = vmatprep.subr.mxu0 %v1532
      %1537 = vmatpush1.msra.mxu0 %v1531
      %1538 = vmatprep.subr.mxu0 0.0
      %1539 = vmatpush1.msra.mxu0 0.0
      %1540 = vmatprep.subr.mxu0 0.0
      %1541 = vmatpush1.msra.mxu0 0.0
      %1542 = vmatprep.subr.mxu0 0.0
      %1543 = vmatpush1.msra.mxu0 0.0
      %1544 = vmatprep.subr.mxu0 0.0
      %1545 = vmatpush1.msra.mxu0 0.0
      %1546 = vmatprep.subr.mxu0 0.0
      %1547 = vmatpush1.msra.mxu0 0.0
      %1548 = vmatprep.subr.mxu0 0.0
      %1549 = vmatpush1.msra.mxu0 0.0
      %1550 = vmatprep.subr.mxu0 0.0
      %1551 = vmatpush1.msra.mxu0 0.0
      %1552 = vmatprep.subr.mxu0 0.0
      %1553 = vmatpush1.msra.mxu0 0.0
      %1554 = vmatprep.subr.mxu0 0.0
      %1555 = vmatpush1.msra.mxu0 0.0
      %1556 = vmatprep.subr.mxu0 0.0
      %1557 = vmatpush1.msra.mxu0 0.0
      %1558 = vmatprep.subr.mxu0 0.0
      %1559 = vmatpush1.msra.mxu0 0.0
      %1560 = vmatprep.subr.mxu0 0.0
      %1561 = vmatpush1.msra.mxu0 0.0
      %1562 = vmatprep.subr.mxu0 0.0
      %1563 = vmatpush1.msra.mxu0 0.0
      %1564 = vmatprep.subr.mxu0 0.0
      %1565 = vmatpush1.msra.mxu0 0.0
      %1566 = vmatprep.subr.mxu0 0.0
      %1567 = vmatpush1.msra.mxu0 0.0
      %1568 = vmatprep.subr.mxu0 0.0
      %1569 = vmatpush1.msra.mxu0 0.0
      %1570 = vmatprep.subr.mxu0 0.0
      %1571 = vmatpush1.msra.mxu0 0.0
      %1572 = vmatprep.subr.mxu0 0.0
      %1573 = vmatpush1.msra.mxu0 0.0
      %1574 = vmatprep.subr.mxu0 0.0
      %1575 = vmatpush1.msra.mxu0 0.0
      %1576 = vmatprep.subr.mxu0 0.0
      %1577 = vmatpush1.msra.mxu0 0.0
      %1578 = vmatprep.subr.mxu0 0.0
      %1579 = vmatpush1.msra.mxu0 0.0
      %1580 = vmatprep.subr.mxu0 0.0
      %1581 = vmatpush1.msra.mxu0 0.0
      %1582 = vmatprep.subr.mxu0 0.0
      %1583 = vmatpush1.msra.mxu0 0.0
      %1584 = vmatprep.subr.mxu0 0.0
      %1585 = vmatpush1.msra.mxu0 0.0
      %1586 = vmatprep.subr.mxu0 0.0
      %1587 = vmatpush1.msra.mxu0 0.0
      %1588 = vmatprep.subr.mxu0 0.0
      %1589 = vmatpush1.msra.mxu0 0.0
      %1590 = vmatprep.subr.mxu0 0.0
      %1591 = vmatpush1.msra.mxu0 0.0
      %1592 = vmatprep.subr.mxu0 0.0
      %1593 = vmatpush1.msra.mxu0 0.0
      %1594 = vmatprep.subr.mxu0 0.0
      %1595 = vmatpush1.msra.mxu0 0.0
      %1596 = vmatprep.subr.mxu0 0.0
      %1597 = vmatpush1.msra.mxu0 0.0
      %1598 = vmatprep.subr.mxu0 0.0
      %1599 = vmatpush1.msra.mxu0 0.0
      %1600 = vmatprep.mubr.f32.mxu0 0.0
      %1601 = vmatmul.mubr.f32.gmra.mrb[0].mxu0 %v1534
      %v1602 = vpop.f32.mrb[0].mxu0
      %v1603 = vadd.f32 0.0, %v1602
      %v1604 = vpop.f32.mrb[0].mxu0
      %v1605 = vadd.f32 0.0, %v1604
      %1606 = vdwg.mxu0
      %v1607 = vadd.f32 %v1523, %v1603
      %v1608 = vadd.f32 %v1524, %v1605
      %1609 = vrot.lane.b32.xlu0 %v1115, 113
      %v1610 = vpop.permute.xlu0 %1609
      %1611 = vrot.lane.b32.xlu0 %v1116, 113
      %v1612 = vpop.permute.xlu0 %1611
      %v1613 = vsel %vm818, %v1610, %v1612
      %v1614 = vsel %vm818, %v1612, %v1610
      %v1615 = vmul.f32 %v1613, %v825
      %v1616 = vmul.f32 %v1614, %v829
      %v1618 = vsel %vm301, %v237, 0
      %1620 = vmatprep.subr.mxu0 %v1616
      %1621 = vmatpush1.msra.mxu0 %v1615
      %1622 = vmatprep.subr.mxu0 0.0
      %1623 = vmatpush1.msra.mxu0 0.0
      %1624 = vmatprep.subr.mxu0 0.0
      %1625 = vmatpush1.msra.mxu0 0.0
      %1626 = vmatprep.subr.mxu0 0.0
      %1627 = vmatpush1.msra.mxu0 0.0
      %1628 = vmatprep.subr.mxu0 0.0
      %1629 = vmatpush1.msra.mxu0 0.0
      %1630 = vmatprep.subr.mxu0 0.0
      %1631 = vmatpush1.msra.mxu0 0.0
      %1632 = vmatprep.subr.mxu0 0.0
      %1633 = vmatpush1.msra.mxu0 0.0
      %1634 = vmatprep.subr.mxu0 0.0
      %1635 = vmatpush1.msra.mxu0 0.0
      %1636 = vmatprep.subr.mxu0 0.0
      %1637 = vmatpush1.msra.mxu0 0.0
      %1638 = vmatprep.subr.mxu0 0.0
      %1639 = vmatpush1.msra.mxu0 0.0
      %1640 = vmatprep.subr.mxu0 0.0
      %1641 = vmatpush1.msra.mxu0 0.0
      %1642 = vmatprep.subr.mxu0 0.0
      %1643 = vmatpush1.msra.mxu0 0.0
      %1644 = vmatprep.subr.mxu0 0.0
      %1645 = vmatpush1.msra.mxu0 0.0
      %1646 = vmatprep.subr.mxu0 0.0
      %1647 = vmatpush1.msra.mxu0 0.0
      %1648 = vmatprep.subr.mxu0 0.0
      %1649 = vmatpush1.msra.mxu0 0.0
      %1650 = vmatprep.subr.mxu0 0.0
      %1651 = vmatpush1.msra.mxu0 0.0
      %1652 = vmatprep.subr.mxu0 0.0
      %1653 = vmatpush1.msra.mxu0 0.0
      %1654 = vmatprep.subr.mxu0 0.0
      %1655 = vmatpush1.msra.mxu0 0.0
      %1656 = vmatprep.subr.mxu0 0.0
      %1657 = vmatpush1.msra.mxu0 0.0
      %1658 = vmatprep.subr.mxu0 0.0
      %1659 = vmatpush1.msra.mxu0 0.0
      %1660 = vmatprep.subr.mxu0 0.0
      %1661 = vmatpush1.msra.mxu0 0.0
      %1662 = vmatprep.subr.mxu0 0.0
      %1663 = vmatpush1.msra.mxu0 0.0
      %1664 = vmatprep.subr.mxu0 0.0
      %1665 = vmatpush1.msra.mxu0 0.0
      %1666 = vmatprep.subr.mxu0 0.0
      %1667 = vmatpush1.msra.mxu0 0.0
      %1668 = vmatprep.subr.mxu0 0.0
      %1669 = vmatpush1.msra.mxu0 0.0
      %1670 = vmatprep.subr.mxu0 0.0
      %1671 = vmatpush1.msra.mxu0 0.0
      %1672 = vmatprep.subr.mxu0 0.0
      %1673 = vmatpush1.msra.mxu0 0.0
      %1674 = vmatprep.subr.mxu0 0.0
      %1675 = vmatpush1.msra.mxu0 0.0
      %1676 = vmatprep.subr.mxu0 0.0
      %1677 = vmatpush1.msra.mxu0 0.0
      %1678 = vmatprep.subr.mxu0 0.0
      %1679 = vmatpush1.msra.mxu0 0.0
      %1680 = vmatprep.subr.mxu0 0.0
      %1681 = vmatpush1.msra.mxu0 0.0
      %1682 = vmatprep.subr.mxu0 0.0
      %1683 = vmatpush1.msra.mxu0 0.0
      %1684 = vmatprep.mubr.f32.mxu0 0.0
      %1685 = vmatmul.mubr.f32.gmra.mrb[0].mxu0 %v1618
      %v1686 = vpop.f32.mrb[0].mxu0
      %v1687 = vadd.f32 0.0, %v1686
      %v1688 = vpop.f32.mrb[0].mxu0
      %v1689 = vadd.f32 0.0, %v1688
      %1690 = vdwg.mxu0
      %v1691 = vadd.f32 %v1607, %v1687
      %v1692 = vadd.f32 %v1608, %v1689
      %1693 = vrot.lane.b32.xlu0 %v1115, 112
      %v1694 = vpop.permute.xlu0 %1693
      %1695 = vrot.lane.b32.xlu0 %v1116, 112
      %v1696 = vpop.permute.xlu0 %1695
      %v1697 = vsel %vm914, %v1694, %v1696
      %v1698 = vsel %vm914, %v1696, %v1694
      %v1699 = vmul.f32 %v1697, %v921
      %v1700 = vmul.f32 %v1698, %v925
      %v1702 = vsel %vm301, %v239, 0
      %1704 = vmatprep.subr.mxu0 %v1700
      %1705 = vmatpush1.msra.mxu0 %v1699
      %1706 = vmatprep.subr.mxu0 0.0
      %1707 = vmatpush1.msra.mxu0 0.0
      %1708 = vmatprep.subr.mxu0 0.0
      %1709 = vmatpush1.msra.mxu0 0.0
      %1710 = vmatprep.subr.mxu0 0.0
      %1711 = vmatpush1.msra.mxu0 0.0
      %1712 = vmatprep.subr.mxu0 0.0
      %1713 = vmatpush1.msra.mxu0 0.0
      %1714 = vmatprep.subr.mxu0 0.0
      %1715 = vmatpush1.msra.mxu0 0.0
      %1716 = vmatprep.subr.mxu0 0.0
      %1717 = vmatpush1.msra.mxu0 0.0
      %1718 = vmatprep.subr.mxu0 0.0
      %1719 = vmatpush1.msra.mxu0 0.0
      %1720 = vmatprep.subr.mxu0 0.0
      %1721 = vmatpush1.msra.mxu0 0.0
      %1722 = vmatprep.subr.mxu0 0.0
      %1723 = vmatpush1.msra.mxu0 0.0
      %1724 = vmatprep.subr.mxu0 0.0
      %1725 = vmatpush1.msra.mxu0 0.0
      %1726 = vmatprep.subr.mxu0 0.0
      %1727 = vmatpush1.msra.mxu0 0.0
      %1728 = vmatprep.subr.mxu0 0.0
      %1729 = vmatpush1.msra.mxu0 0.0
      %1730 = vmatprep.subr.mxu0 0.0
      %1731 = vmatpush1.msra.mxu0 0.0
      %1732 = vmatprep.subr.mxu0 0.0
      %1733 = vmatpush1.msra.mxu0 0.0
      %1734 = vmatprep.subr.mxu0 0.0
      %1735 = vmatpush1.msra.mxu0 0.0
      %1736 = vmatprep.subr.mxu0 0.0
      %1737 = vmatpush1.msra.mxu0 0.0
      %1738 = vmatprep.subr.mxu0 0.0
      %1739 = vmatpush1.msra.mxu0 0.0
      %1740 = vmatprep.subr.mxu0 0.0
      %1741 = vmatpush1.msra.mxu0 0.0
      %1742 = vmatprep.subr.mxu0 0.0
      %1743 = vmatpush1.msra.mxu0 0.0
      %1744 = vmatprep.subr.mxu0 0.0
      %1745 = vmatpush1.msra.mxu0 0.0
      %1746 = vmatprep.subr.mxu0 0.0
      %1747 = vmatpush1.msra.mxu0 0.0
      %1748 = vmatprep.subr.mxu0 0.0
      %1749 = vmatpush1.msra.mxu0 0.0
      %1750 = vmatprep.subr.mxu0 0.0
      %1751 = vmatpush1.msra.mxu0 0.0
      %1752 = vmatprep.subr.mxu0 0.0
      %1753 = vmatpush1.msra.mxu0 0.0
      %1754 = vmatprep.subr.mxu0 0.0
      %1755 = vmatpush1.msra.mxu0 0.0
      %1756 = vmatprep.subr.mxu0 0.0
      %1757 = vmatpush1.msra.mxu0 0.0
      %1758 = vmatprep.subr.mxu0 0.0
      %1759 = vmatpush1.msra.mxu0 0.0
      %1760 = vmatprep.subr.mxu0 0.0
      %1761 = vmatpush1.msra.mxu0 0.0
      %1762 = vmatprep.subr.mxu0 0.0
      %1763 = vmatpush1.msra.mxu0 0.0
      %1764 = vmatprep.subr.mxu0 0.0
      %1765 = vmatpush1.msra.mxu0 0.0
      %1766 = vmatprep.subr.mxu0 0.0
      %1767 = vmatpush1.msra.mxu0 0.0
      %1768 = vmatprep.mubr.f32.mxu0 0.0
      %1769 = vmatmul.mubr.f32.gmra.mrb[0].mxu0 %v1702
      %v1770 = vpop.f32.mrb[0].mxu0
      %v1771 = vadd.f32 0.0, %v1770
      %v1772 = vpop.f32.mrb[0].mxu0
      %v1773 = vadd.f32 0.0, %v1772
      %1774 = vdwg.mxu0
      %v1775 = vadd.f32 %v1691, %v1771
      %v1776 = vadd.f32 %v1692, %v1773
      %1777 = vrot.lane.b32.xlu0 %v1115, 111
      %v1778 = vpop.permute.xlu0 %1777
      %1779 = vrot.lane.b32.xlu0 %v1116, 111
      %v1780 = vpop.permute.xlu0 %1779
      %v1781 = vsel %vm1010, %v1778, %v1780
      %v1782 = vsel %vm1010, %v1780, %v1778
      %v1783 = vmul.f32 %v1781, %v1017
      %v1784 = vmul.f32 %v1782, %v1021
      %v1786 = vsel %vm301, %v241, 0
      %1788 = vmatprep.subr.mxu0 %v1784
      %1789 = vmatpush1.msra.mxu0 %v1783
      %1790 = vmatprep.subr.mxu0 0.0
      %1791 = vmatpush1.msra.mxu0 0.0
      %1792 = vmatprep.subr.mxu0 0.0
      %1793 = vmatpush1.msra.mxu0 0.0
      %1794 = vmatprep.subr.mxu0 0.0
      %1795 = vmatpush1.msra.mxu0 0.0
      %1796 = vmatprep.subr.mxu0 0.0
      %1797 = vmatpush1.msra.mxu0 0.0
      %1798 = vmatprep.subr.mxu0 0.0
      %1799 = vmatpush1.msra.mxu0 0.0
      %1800 = vmatprep.subr.mxu0 0.0
      %1801 = vmatpush1.msra.mxu0 0.0
      %1802 = vmatprep.subr.mxu0 0.0
      %1803 = vmatpush1.msra.mxu0 0.0
      %1804 = vmatprep.subr.mxu0 0.0
      %1805 = vmatpush1.msra.mxu0 0.0
      %1806 = vmatprep.subr.mxu0 0.0
      %1807 = vmatpush1.msra.mxu0 0.0
      %1808 = vmatprep.subr.mxu0 0.0
      %1809 = vmatpush1.msra.mxu0 0.0
      %1810 = vmatprep.subr.mxu0 0.0
      %1811 = vmatpush1.msra.mxu0 0.0
      %1812 = vmatprep.subr.mxu0 0.0
      %1813 = vmatpush1.msra.mxu0 0.0
      %1814 = vmatprep.subr.mxu0 0.0
      %1815 = vmatpush1.msra.mxu0 0.0
      %1816 = vmatprep.subr.mxu0 0.0
      %1817 = vmatpush1.msra.mxu0 0.0
      %1818 = vmatprep.subr.mxu0 0.0
      %1819 = vmatpush1.msra.mxu0 0.0
      %1820 = vmatprep.subr.mxu0 0.0
      %1821 = vmatpush1.msra.mxu0 0.0
      %1822 = vmatprep.subr.mxu0 0.0
      %1823 = vmatpush1.msra.mxu0 0.0
      %1824 = vmatprep.subr.mxu0 0.0
      %1825 = vmatpush1.msra.mxu0 0.0
      %1826 = vmatprep.subr.mxu0 0.0
      %1827 = vmatpush1.msra.mxu0 0.0
      %1828 = vmatprep.subr.mxu0 0.0
      %1829 = vmatpush1.msra.mxu0 0.0
      %1830 = vmatprep.subr.mxu0 0.0
      %1831 = vmatpush1.msra.mxu0 0.0
      %1832 = vmatprep.subr.mxu0 0.0
      %1833 = vmatpush1.msra.mxu0 0.0
      %1834 = vmatprep.subr.mxu0 0.0
      %1835 = vmatpush1.msra.mxu0 0.0
      %1836 = vmatprep.subr.mxu0 0.0
      %1837 = vmatpush1.msra.mxu0 0.0
      %1838 = vmatprep.subr.mxu0 0.0
      %1839 = vmatpush1.msra.mxu0 0.0
      %1840 = vmatprep.subr.mxu0 0.0
      %1841 = vmatpush1.msra.mxu0 0.0
      %1842 = vmatprep.subr.mxu0 0.0
      %1843 = vmatpush1.msra.mxu0 0.0
      %1844 = vmatprep.subr.mxu0 0.0
      %1845 = vmatpush1.msra.mxu0 0.0
      %1846 = vmatprep.subr.mxu0 0.0
      %1847 = vmatpush1.msra.mxu0 0.0
      %1848 = vmatprep.subr.mxu0 0.0
      %1849 = vmatpush1.msra.mxu0 0.0
      %1850 = vmatprep.subr.mxu0 0.0
      %1851 = vmatpush1.msra.mxu0 0.0
      %1852 = vmatprep.mubr.f32.mxu0 0.0
      %1853 = vmatmul.mubr.f32.gmra.mrb[0].mxu0 %v1786
      %v1854 = vpop.f32.mrb[0].mxu0
      %v1855 = vadd.f32 0.0, %v1854
      %v1856 = vpop.f32.mrb[0].mxu0
      %v1857 = vadd.f32 0.0, %v1856
      %1858 = vdwg.mxu0
      %v1859 = vadd.f32 %v1775, %v1855
      %v1860 = vadd.f32 %v1776, %v1857
      %v1861 = vadd.f32 %v257, %v1859
      %v1862 = vadd.f32 %v258, %v1860
      %1863 = vset.pattern.permute.xlu0 2
      %1864 = vperm.xlu0 %1863, %v206
      %v1865 = vpop.permute.xlu0 %1864
      %v1867 = vadd.f32 %v1861, %v1865
      %v1868 = vadd.f32 %v1862, %v1865
      %1869 = vst [vmem:[%s204] sm:$0xff] %v1867
      %1870 = vst [vmem:[%s204 + $0x8] sm:$0xff] %v1868
      %s1871 = scalar_lea.vmem %s197, 16
      %v1872 = vld [vmem:[%s1871] sm:$0xff]
      %v1873 = vld [vmem:[%s1871 + $0x8] sm:$0xff]
      %1874 = vrot.lane.b32.xlu0 %v1872, 17
      %v1875 = vpop.permute.xlu0 %1874
      %1876 = vrot.lane.b32.xlu0 %v1873, 17
      %v1877 = vpop.permute.xlu0 %1876
      %v1878 = vsel %vm265, %v1875, %v1877
      %v1879 = vsel %vm265, %v1877, %v1875
      %v1880 = vmul.f32 %v1879, %v272
      %v1881 = vmul.f32 %v1878, %v276
      %1882 = vrot.lane.b32.xlu0 %v1872, 16
      %v1883 = vpop.permute.xlu0 %1882
      %1884 = vrot.lane.b32.xlu0 %v1873, 16
      %v1885 = vpop.permute.xlu0 %1884
      %v1886 = vsel %vm285, %v1883, %v1885
      %v1887 = vsel %vm285, %v1885, %v1883
      %v1888 = vmul.f32 %v1887, %v292
      %v1889 = vmul.f32 %v1886, %v296
      %1890 = vmatprep.subr.mxu0 %v1889
      %1891 = vmatpush1.msra.mxu0 %v1888
      %1892 = vmatprep.subr.mxu0 0.0
      %1893 = vmatpush1.msra.mxu0 0.0
      %1894 = vmatprep.subr.mxu0 0.0
      %1895 = vmatpush1.msra.mxu0 0.0
      %1896 = vmatprep.subr.mxu0 0.0
      %1897 = vmatpush1.msra.mxu0 0.0
      %1898 = vmatprep.subr.mxu0 0.0
      %1899 = vmatpush1.msra.mxu0 0.0
      %1900 = vmatprep.subr.mxu0 0.0
      %1901 = vmatpush1.msra.mxu0 0.0
      %1902 = vmatprep.subr.mxu0 0.0
      %1903 = vmatpush1.msra.mxu0 0.0
      %1904 = vmatprep.subr.mxu0 0.0
      %1905 = vmatpush1.msra.mxu0 0.0
      %1906 = vmatprep.subr.mxu0 0.0
      %1907 = vmatpush1.msra.mxu0 0.0
      %1908 = vmatprep.subr.mxu0 0.0
      %1909 = vmatpush1.msra.mxu0 0.0
      %1910 = vmatprep.subr.mxu0 0.0
      %1911 = vmatpush1.msra.mxu0 0.0
      %1912 = vmatprep.subr.mxu0 0.0
      %1913 = vmatpush1.msra.mxu0 0.0
      %1914 = vmatprep.subr.mxu0 0.0
      %1915 = vmatpush1.msra.mxu0 0.0
      %1916 = vmatprep.subr.mxu0 0.0
      %1917 = vmatpush1.msra.mxu0 0.0
      %1918 = vmatprep.subr.mxu0 0.0
      %1919 = vmatpush1.msra.mxu0 0.0
      %1920 = vmatprep.subr.mxu0 0.0
      %1921 = vmatpush1.msra.mxu0 0.0
      %1922 = vmatprep.subr.mxu0 0.0
      %1923 = vmatpush1.msra.mxu0 0.0
      %1924 = vmatprep.subr.mxu0 0.0
      %1925 = vmatpush1.msra.mxu0 0.0
      %1926 = vmatprep.subr.mxu0 0.0
      %1927 = vmatpush1.msra.mxu0 0.0
      %1928 = vmatprep.subr.mxu0 0.0
      %1929 = vmatpush1.msra.mxu0 0.0
      %1930 = vmatprep.subr.mxu0 0.0
      %1931 = vmatpush1.msra.mxu0 0.0
      %1932 = vmatprep.subr.mxu0 0.0
      %1933 = vmatpush1.msra.mxu0 0.0
      %1934 = vmatprep.subr.mxu0 0.0
      %1935 = vmatpush1.msra.mxu0 0.0
      %1936 = vmatprep.subr.mxu0 0.0
      %1937 = vmatpush1.msra.mxu0 0.0
      %1938 = vmatprep.subr.mxu0 0.0
      %1939 = vmatpush1.msra.mxu0 0.0
      %1940 = vmatprep.subr.mxu0 0.0
      %1941 = vmatpush1.msra.mxu0 0.0
      %1942 = vmatprep.subr.mxu0 0.0
      %1943 = vmatpush1.msra.mxu0 0.0
      %1944 = vmatprep.subr.mxu0 0.0
      %1945 = vmatpush1.msra.mxu0 0.0
      %1946 = vmatprep.subr.mxu0 0.0
      %1947 = vmatpush1.msra.mxu0 0.0
      %1948 = vmatprep.subr.mxu0 0.0
      %1949 = vmatpush1.msra.mxu0 0.0
      %1950 = vmatprep.subr.mxu0 0.0
      %1951 = vmatpush1.msra.mxu0 0.0
      %1952 = vmatprep.subr.mxu0 0.0
      %1953 = vmatpush1.msra.mxu0 0.0
      %1954 = vmatprep.mubr.f32.mxu0 0.0
      %1955 = vmatmul.mubr.f32.gmra.mrb[0].mxu0 %v303
      %v1956 = vpop.f32.mrb[0].mxu0
      %v1957 = vadd.f32 0.0, %v1956
      %v1958 = vpop.f32.mrb[0].mxu0
      %v1959 = vadd.f32 0.0, %v1958
      %1960 = vdwg.mxu0
      %1961 = vmatprep.subr.mxu0 %v1881
      %1962 = vmatpush1.msra.mxu0 %v1880
      %1963 = vmatprep.subr.mxu0 0.0
      %1964 = vmatpush1.msra.mxu0 0.0
      %1965 = vmatprep.subr.mxu0 0.0
      %1966 = vmatpush1.msra.mxu0 0.0
      %1967 = vmatprep.subr.mxu0 0.0
      %1968 = vmatpush1.msra.mxu0 0.0
      %1969 = vmatprep.subr.mxu0 0.0
      %1970 = vmatpush1.msra.mxu0 0.0
      %1971 = vmatprep.subr.mxu0 0.0
      %1972 = vmatpush1.msra.mxu0 0.0
      %1973 = vmatprep.subr.mxu0 0.0
      %1974 = vmatpush1.msra.mxu0 0.0
      %1975 = vmatprep.subr.mxu0 0.0
      %1976 = vmatpush1.msra.mxu0 0.0
      %1977 = vmatprep.subr.mxu0 0.0
      %1978 = vmatpush1.msra.mxu0 0.0
      %1979 = vmatprep.subr.mxu0 0.0
      %1980 = vmatpush1.msra.mxu0 0.0
      %1981 = vmatprep.subr.mxu0 0.0
      %1982 = vmatpush1.msra.mxu0 0.0
      %1983 = vmatprep.subr.mxu0 0.0
      %1984 = vmatpush1.msra.mxu0 0.0
      %1985 = vmatprep.subr.mxu0 0.0
      %1986 = vmatpush1.msra.mxu0 0.0
      %1987 = vmatprep.subr.mxu0 0.0
      %1988 = vmatpush1.msra.mxu0 0.0
      %1989 = vmatprep.subr.mxu0 0.0
      %1990 = vmatpush1.msra.mxu0 0.0
      %1991 = vmatprep.subr.mxu0 0.0
      %1992 = vmatpush1.msra.mxu0 0.0
      %1993 = vmatprep.subr.mxu0 0.0
      %1994 = vmatpush1.msra.mxu0 0.0
      %1995 = vmatprep.subr.mxu0 0.0
      %1996 = vmatpush1.msra.mxu0 0.0
      %1997 = vmatprep.subr.mxu0 0.0
      %1998 = vmatpush1.msra.mxu0 0.0
      %1999 = vmatprep.subr.mxu0 0.0
      %2000 = vmatpush1.msra.mxu0 0.0
      %2001 = vmatprep.subr.mxu0 0.0
      %2002 = vmatpush1.msra.mxu0 0.0
      %2003 = vmatprep.subr.mxu0 0.0
      %2004 = vmatpush1.msra.mxu0 0.0
      %2005 = vmatprep.subr.mxu0 0.0
      %2006 = vmatpush1.msra.mxu0 0.0
      %2007 = vmatprep.subr.mxu0 0.0
      %2008 = vmatpush1.msra.mxu0 0.0
      %2009 = vmatprep.subr.mxu0 0.0
      %2010 = vmatpush1.msra.mxu0 0.0
      %2011 = vmatprep.subr.mxu0 0.0
      %2012 = vmatpush1.msra.mxu0 0.0
      %2013 = vmatprep.subr.mxu0 0.0
      %2014 = vmatpush1.msra.mxu0 0.0
      %2015 = vmatprep.subr.mxu0 0.0
      %2016 = vmatpush1.msra.mxu0 0.0
      %2017 = vmatprep.subr.mxu0 0.0
      %2018 = vmatpush1.msra.mxu0 0.0
      %2019 = vmatprep.subr.mxu0 0.0
      %2020 = vmatpush1.msra.mxu0 0.0
      %2021 = vmatprep.subr.mxu0 0.0
      %2022 = vmatpush1.msra.mxu0 0.0
      %2023 = vmatprep.subr.mxu0 0.0
      %2024 = vmatpush1.msra.mxu0 0.0
      %2025 = vmatprep.mubr.f32.mxu0 0.0
      %2026 = vmatmul.mubr.f32.gmra.mrb[0].mxu0 %v377
      %v2027 = vpop.f32.mrb[0].mxu0
      %v2028 = vadd.f32 %v1957, %v2027
      %v2029 = vpop.f32.mrb[0].mxu0
      %v2030 = vadd.f32 %v1959, %v2029
      %2031 = vdwg.mxu0
      %2032 = vrot.lane.b32.xlu0 %v1872, 15
      %v2033 = vpop.permute.xlu0 %2032
      %2034 = vrot.lane.b32.xlu0 %v1873, 15
      %v2035 = vpop.permute.xlu0 %2034
      %v2036 = vsel %vm454, %v2033, %v2035
      %v2037 = vsel %vm454, %v2035, %v2033
      %v2038 = vmul.f32 %v2037, %v461
      %v2039 = vmul.f32 %v2036, %v465
      %2040 = vmatprep.subr.mxu0 %v2039
      %2041 = vmatpush1.msra.mxu0 %v2038
      %2042 = vmatprep.subr.mxu0 0.0
      %2043 = vmatpush1.msra.mxu0 0.0
      %2044 = vmatprep.subr.mxu0 0.0
      %2045 = vmatpush1.msra.mxu0 0.0
      %2046 = vmatprep.subr.mxu0 0.0
      %2047 = vmatpush1.msra.mxu0 0.0
      %2048 = vmatprep.subr.mxu0 0.0
      %2049 = vmatpush1.msra.mxu0 0.0
      %2050 = vmatprep.subr.mxu0 0.0
      %2051 = vmatpush1.msra.mxu0 0.0
      %2052 = vmatprep.subr.mxu0 0.0
      %2053 = vmatpush1.msra.mxu0 0.0
      %2054 = vmatprep.subr.mxu0 0.0
      %2055 = vmatpush1.msra.mxu0 0.0
      %2056 = vmatprep.subr.mxu0 0.0
      %2057 = vmatpush1.msra.mxu0 0.0
      %2058 = vmatprep.subr.mxu0 0.0
      %2059 = vmatpush1.msra.mxu0 0.0
      %2060 = vmatprep.subr.mxu0 0.0
      %2061 = vmatpush1.msra.mxu0 0.0
      %2062 = vmatprep.subr.mxu0 0.0
      %2063 = vmatpush1.msra.mxu0 0.0
      %2064 = vmatprep.subr.mxu0 0.0
      %2065 = vmatpush1.msra.mxu0 0.0
      %2066 = vmatprep.subr.mxu0 0.0
      %2067 = vmatpush1.msra.mxu0 0.0
      %2068 = vmatprep.subr.mxu0 0.0
      %2069 = vmatpush1.msra.mxu0 0.0
      %2070 = vmatprep.subr.mxu0 0.0
      %2071 = vmatpush1.msra.mxu0 0.0
      %2072 = vmatprep.subr.mxu0 0.0
      %2073 = vmatpush1.msra.mxu0 0.0
      %2074 = vmatprep.subr.mxu0 0.0
      %2075 = vmatpush1.msra.mxu0 0.0
      %2076 = vmatprep.subr.mxu0 0.0
      %2077 = vmatpush1.msra.mxu0 0.0
      %2078 = vmatprep.subr.mxu0 0.0
      %2079 = vmatpush1.msra.mxu0 0.0
      %2080 = vmatprep.subr.mxu0 0.0
      %2081 = vmatpush1.msra.mxu0 0.0
      %2082 = vmatprep.subr.mxu0 0.0
      %2083 = vmatpush1.msra.mxu0 0.0
      %2084 = vmatprep.subr.mxu0 0.0
      %2085 = vmatpush1.msra.mxu0 0.0
      %2086 = vmatprep.subr.mxu0 0.0
      %2087 = vmatpush1.msra.mxu0 0.0
      %2088 = vmatprep.subr.mxu0 0.0
      %2089 = vmatpush1.msra.mxu0 0.0
      %2090 = vmatprep.subr.mxu0 0.0
      %2091 = vmatpush1.msra.mxu0 0.0
      %2092 = vmatprep.subr.mxu0 0.0
      %2093 = vmatpush1.msra.mxu0 0.0
      %2094 = vmatprep.subr.mxu0 0.0
      %2095 = vmatpush1.msra.mxu0 0.0
      %2096 = vmatprep.subr.mxu0 0.0
      %2097 = vmatpush1.msra.mxu0 0.0
      %2098 = vmatprep.subr.mxu0 0.0
      %2099 = vmatpush1.msra.mxu0 0.0
      %2100 = vmatprep.subr.mxu0 0.0
      %2101 = vmatpush1.msra.mxu0 0.0
      %2102 = vmatprep.subr.mxu0 0.0
      %2103 = vmatpush1.msra.mxu0 0.0
      %2104 = vmatprep.mubr.f32.mxu0 0.0
      %2105 = vmatmul.mubr.f32.gmra.mrb[0].mxu0 %v471
      %v2106 = vpop.f32.mrb[0].mxu0
      %v2107 = vadd.f32 0.0, %v2106
      %v2108 = vpop.f32.mrb[0].mxu0
      %v2109 = vadd.f32 0.0, %v2108
      %2110 = vdwg.mxu0
      %v2111 = vadd.f32 %v2028, %v2107
      %v2112 = vadd.f32 %v2030, %v2109
      %2113 = vrot.lane.b32.xlu0 %v1872, 1
      %v2114 = vpop.permute.xlu0 %2113
      %2115 = vrot.lane.b32.xlu0 %v1873, 1
      %v2116 = vpop.permute.xlu0 %2115
      %v2117 = vsel %vm550, %v2114, %v2116
      %v2118 = vsel %vm550, %v2116, %v2114
      %v2119 = vmul.f32 %v2118, %v557
      %v2120 = vmul.f32 %v2117, %v561
      %2121 = vmatprep.subr.mxu0 %v2120
      %2122 = vmatpush1.msra.mxu0 %v2119
      %2123 = vmatprep.subr.mxu0 0.0
      %2124 = vmatpush1.msra.mxu0 0.0
      %2125 = vmatprep.subr.mxu0 0.0
      %2126 = vmatpush1.msra.mxu0 0.0
      %2127 = vmatprep.subr.mxu0 0.0
      %2128 = vmatpush1.msra.mxu0 0.0
      %2129 = vmatprep.subr.mxu0 0.0
      %2130 = vmatpush1.msra.mxu0 0.0
      %2131 = vmatprep.subr.mxu0 0.0
      %2132 = vmatpush1.msra.mxu0 0.0
      %2133 = vmatprep.subr.mxu0 0.0
      %2134 = vmatpush1.msra.mxu0 0.0
      %2135 = vmatprep.subr.mxu0 0.0
      %2136 = vmatpush1.msra.mxu0 0.0
      %2137 = vmatprep.subr.mxu0 0.0
      %2138 = vmatpush1.msra.mxu0 0.0
      %2139 = vmatprep.subr.mxu0 0.0
      %2140 = vmatpush1.msra.mxu0 0.0
      %2141 = vmatprep.subr.mxu0 0.0
      %2142 = vmatpush1.msra.mxu0 0.0
      %2143 = vmatprep.subr.mxu0 0.0
      %2144 = vmatpush1.msra.mxu0 0.0
      %2145 = vmatprep.subr.mxu0 0.0
      %2146 = vmatpush1.msra.mxu0 0.0
      %2147 = vmatprep.subr.mxu0 0.0
      %2148 = vmatpush1.msra.mxu0 0.0
      %2149 = vmatprep.subr.mxu0 0.0
      %2150 = vmatpush1.msra.mxu0 0.0
      %2151 = vmatprep.subr.mxu0 0.0
      %2152 = vmatpush1.msra.mxu0 0.0
      %2153 = vmatprep.subr.mxu0 0.0
      %2154 = vmatpush1.msra.mxu0 0.0
      %2155 = vmatprep.subr.mxu0 0.0
      %2156 = vmatpush1.msra.mxu0 0.0
      %2157 = vmatprep.subr.mxu0 0.0
      %2158 = vmatpush1.msra.mxu0 0.0
      %2159 = vmatprep.subr.mxu0 0.0
      %2160 = vmatpush1.msra.mxu0 0.0
      %2161 = vmatprep.subr.mxu0 0.0
      %2162 = vmatpush1.msra.mxu0 0.0
      %2163 = vmatprep.subr.mxu0 0.0
      %2164 = vmatpush1.msra.mxu0 0.0
      %2165 = vmatprep.subr.mxu0 0.0
      %2166 = vmatpush1.msra.mxu0 0.0
      %2167 = vmatprep.subr.mxu0 0.0
      %2168 = vmatpush1.msra.mxu0 0.0
      %2169 = vmatprep.subr.mxu0 0.0
      %2170 = vmatpush1.msra.mxu0 0.0
      %2171 = vmatprep.subr.mxu0 0.0
      %2172 = vmatpush1.msra.mxu0 0.0
      %2173 = vmatprep.subr.mxu0 0.0
      %2174 = vmatpush1.msra.mxu0 0.0
      %2175 = vmatprep.subr.mxu0 0.0
      %2176 = vmatpush1.msra.mxu0 0.0
      %2177 = vmatprep.subr.mxu0 0.0
      %2178 = vmatpush1.msra.mxu0 0.0
      %2179 = vmatprep.subr.mxu0 0.0
      %2180 = vmatpush1.msra.mxu0 0.0
      %2181 = vmatprep.subr.mxu0 0.0
      %2182 = vmatpush1.msra.mxu0 0.0
      %2183 = vmatprep.subr.mxu0 0.0
      %2184 = vmatpush1.msra.mxu0 0.0
      %2185 = vmatprep.mubr.f32.mxu0 0.0
      %2186 = vmatmul.mubr.f32.gmra.mrb[0].mxu0 %v567
      %v2187 = vpop.f32.mrb[0].mxu0
      %v2188 = vadd.f32 0.0, %v2187
      %v2189 = vpop.f32.mrb[0].mxu0
      %v2190 = vadd.f32 0.0, %v2189
      %2191 = vdwg.mxu0
      %v2192 = vadd.f32 %v2111, %v2188
      %v2193 = vadd.f32 %v2112, %v2190
      %2194 = vmatprep.subr.mxu0 %v1873
      %2195 = vmatpush1.msra.mxu0 %v1872
      %2196 = vmatprep.subr.mxu0 0.0
      %2197 = vmatpush1.msra.mxu0 0.0
      %2198 = vmatprep.subr.mxu0 0.0
      %2199 = vmatpush1.msra.mxu0 0.0
      %2200 = vmatprep.subr.mxu0 0.0
      %2201 = vmatpush1.msra.mxu0 0.0
      %2202 = vmatprep.subr.mxu0 0.0
      %2203 = vmatpush1.msra.mxu0 0.0
      %2204 = vmatprep.subr.mxu0 0.0
      %2205 = vmatpush1.msra.mxu0 0.0
      %2206 = vmatprep.subr.mxu0 0.0
      %2207 = vmatpush1.msra.mxu0 0.0
      %2208 = vmatprep.subr.mxu0 0.0
      %2209 = vmatpush1.msra.mxu0 0.0
      %2210 = vmatprep.subr.mxu0 0.0
      %2211 = vmatpush1.msra.mxu0 0.0
      %2212 = vmatprep.subr.mxu0 0.0
      %2213 = vmatpush1.msra.mxu0 0.0
      %2214 = vmatprep.subr.mxu0 0.0
      %2215 = vmatpush1.msra.mxu0 0.0
      %2216 = vmatprep.subr.mxu0 0.0
      %2217 = vmatpush1.msra.mxu0 0.0
      %2218 = vmatprep.subr.mxu0 0.0
      %2219 = vmatpush1.msra.mxu0 0.0
      %2220 = vmatprep.subr.mxu0 0.0
      %2221 = vmatpush1.msra.mxu0 0.0
      %2222 = vmatprep.subr.mxu0 0.0
      %2223 = vmatpush1.msra.mxu0 0.0
      %2224 = vmatprep.subr.mxu0 0.0
      %2225 = vmatpush1.msra.mxu0 0.0
      %2226 = vmatprep.subr.mxu0 0.0
      %2227 = vmatpush1.msra.mxu0 0.0
      %2228 = vmatprep.subr.mxu0 0.0
      %2229 = vmatpush1.msra.mxu0 0.0
      %2230 = vmatprep.subr.mxu0 0.0
      %2231 = vmatpush1.msra.mxu0 0.0
      %2232 = vmatprep.subr.mxu0 0.0
      %2233 = vmatpush1.msra.mxu0 0.0
      %2234 = vmatprep.subr.mxu0 0.0
      %2235 = vmatpush1.msra.mxu0 0.0
      %2236 = vmatprep.subr.mxu0 0.0
      %2237 = vmatpush1.msra.mxu0 0.0
      %2238 = vmatprep.subr.mxu0 0.0
      %2239 = vmatpush1.msra.mxu0 0.0
      %2240 = vmatprep.subr.mxu0 0.0
      %2241 = vmatpush1.msra.mxu0 0.0
      %2242 = vmatprep.subr.mxu0 0.0
      %2243 = vmatpush1.msra.mxu0 0.0
      %2244 = vmatprep.subr.mxu0 0.0
      %2245 = vmatpush1.msra.mxu0 0.0
      %2246 = vmatprep.subr.mxu0 0.0
      %2247 = vmatpush1.msra.mxu0 0.0
      %2248 = vmatprep.subr.mxu0 0.0
      %2249 = vmatpush1.msra.mxu0 0.0
      %2250 = vmatprep.subr.mxu0 0.0
      %2251 = vmatpush1.msra.mxu0 0.0
      %2252 = vmatprep.subr.mxu0 0.0
      %2253 = vmatpush1.msra.mxu0 0.0
      %2254 = vmatprep.subr.mxu0 0.0
      %2255 = vmatpush1.msra.mxu0 0.0
      %2256 = vmatprep.subr.mxu0 0.0
      %2257 = vmatpush1.msra.mxu0 0.0
      %2258 = vmatprep.mubr.f32.mxu0 0.0
      %2259 = vmatmul.mubr.f32.gmra.mrb[0].mxu0 %v643
      %v2260 = vpop.f32.mrb[0].mxu0
      %v2261 = vadd.f32 0.0, %v2260
      %v2262 = vpop.f32.mrb[0].mxu0
      %v2263 = vadd.f32 0.0, %v2262
      %2264 = vdwg.mxu0
      %v2265 = vadd.f32 %v2192, %v2261
      %v2266 = vadd.f32 %v2193, %v2263
      %2267 = vrot.lane.b32.xlu0 %v1872, 127
      %v2268 = vpop.permute.xlu0 %2267
      %2269 = vrot.lane.b32.xlu0 %v1873, 127
      %v2270 = vpop.permute.xlu0 %2269
      %v2271 = vsel %vm722, %v2268, %v2270
      %v2272 = vsel %vm722, %v2270, %v2268
      %v2273 = vmul.f32 %v2271, %v729
      %v2274 = vmul.f32 %v2272, %v733
      %2275 = vmatprep.subr.mxu0 %v2274
      %2276 = vmatpush1.msra.mxu0 %v2273
      %2277 = vmatprep.subr.mxu0 0.0
      %2278 = vmatpush1.msra.mxu0 0.0
      %2279 = vmatprep.subr.mxu0 0.0
      %2280 = vmatpush1.msra.mxu0 0.0
      %2281 = vmatprep.subr.mxu0 0.0
      %2282 = vmatpush1.msra.mxu0 0.0
      %2283 = vmatprep.subr.mxu0 0.0
      %2284 = vmatpush1.msra.mxu0 0.0
      %2285 = vmatprep.subr.mxu0 0.0
      %2286 = vmatpush1.msra.mxu0 0.0
      %2287 = vmatprep.subr.mxu0 0.0
      %2288 = vmatpush1.msra.mxu0 0.0
      %2289 = vmatprep.subr.mxu0 0.0
      %2290 = vmatpush1.msra.mxu0 0.0
      %2291 = vmatprep.subr.mxu0 0.0
      %2292 = vmatpush1.msra.mxu0 0.0
      %2293 = vmatprep.subr.mxu0 0.0
      %2294 = vmatpush1.msra.mxu0 0.0
      %2295 = vmatprep.subr.mxu0 0.0
      %2296 = vmatpush1.msra.mxu0 0.0
      %2297 = vmatprep.subr.mxu0 0.0
      %2298 = vmatpush1.msra.mxu0 0.0
      %2299 = vmatprep.subr.mxu0 0.0
      %2300 = vmatpush1.msra.mxu0 0.0
      %2301 = vmatprep.subr.mxu0 0.0
      %2302 = vmatpush1.msra.mxu0 0.0
      %2303 = vmatprep.subr.mxu0 0.0
      %2304 = vmatpush1.msra.mxu0 0.0
      %2305 = vmatprep.subr.mxu0 0.0
      %2306 = vmatpush1.msra.mxu0 0.0
      %2307 = vmatprep.subr.mxu0 0.0
      %2308 = vmatpush1.msra.mxu0 0.0
      %2309 = vmatprep.subr.mxu0 0.0
      %2310 = vmatpush1.msra.mxu0 0.0
      %2311 = vmatprep.subr.mxu0 0.0
      %2312 = vmatpush1.msra.mxu0 0.0
      %2313 = vmatprep.subr.mxu0 0.0
      %2314 = vmatpush1.msra.mxu0 0.0
      %2315 = vmatprep.subr.mxu0 0.0
      %2316 = vmatpush1.msra.mxu0 0.0
      %2317 = vmatprep.subr.mxu0 0.0
      %2318 = vmatpush1.msra.mxu0 0.0
      %2319 = vmatprep.subr.mxu0 0.0
      %2320 = vmatpush1.msra.mxu0 0.0
      %2321 = vmatprep.subr.mxu0 0.0
      %2322 = vmatpush1.msra.mxu0 0.0
      %2323 = vmatprep.subr.mxu0 0.0
      %2324 = vmatpush1.msra.mxu0 0.0
      %2325 = vmatprep.subr.mxu0 0.0
      %2326 = vmatpush1.msra.mxu0 0.0
      %2327 = vmatprep.subr.mxu0 0.0
      %2328 = vmatpush1.msra.mxu0 0.0
      %2329 = vmatprep.subr.mxu0 0.0
      %2330 = vmatpush1.msra.mxu0 0.0
      %2331 = vmatprep.subr.mxu0 0.0
      %2332 = vmatpush1.msra.mxu0 0.0
      %2333 = vmatprep.subr.mxu0 0.0
      %2334 = vmatpush1.msra.mxu0 0.0
      %2335 = vmatprep.subr.mxu0 0.0
      %2336 = vmatpush1.msra.mxu0 0.0
      %2337 = vmatprep.subr.mxu0 0.0
      %2338 = vmatpush1.msra.mxu0 0.0
      %2339 = vmatprep.mubr.f32.mxu0 0.0
      %2340 = vmatmul.mubr.f32.gmra.mrb[0].mxu0 %v739
      %v2341 = vpop.f32.mrb[0].mxu0
      %v2342 = vadd.f32 0.0, %v2341
      %v2343 = vpop.f32.mrb[0].mxu0
      %v2344 = vadd.f32 0.0, %v2343
      %2345 = vdwg.mxu0
      %v2346 = vadd.f32 %v2265, %v2342
      %v2347 = vadd.f32 %v2266, %v2344
      %2348 = vrot.lane.b32.xlu0 %v1872, 113
      %v2349 = vpop.permute.xlu0 %2348
      %2350 = vrot.lane.b32.xlu0 %v1873, 113
      %v2351 = vpop.permute.xlu0 %2350
      %v2352 = vsel %vm818, %v2349, %v2351
      %v2353 = vsel %vm818, %v2351, %v2349
      %v2354 = vmul.f32 %v2352, %v825
      %v2355 = vmul.f32 %v2353, %v829
      %2356 = vmatprep.subr.mxu0 %v2355
      %2357 = vmatpush1.msra.mxu0 %v2354
      %2358 = vmatprep.subr.mxu0 0.0
      %2359 = vmatpush1.msra.mxu0 0.0
      %2360 = vmatprep.subr.mxu0 0.0
      %2361 = vmatpush1.msra.mxu0 0.0
      %2362 = vmatprep.subr.mxu0 0.0
      %2363 = vmatpush1.msra.mxu0 0.0
      %2364 = vmatprep.subr.mxu0 0.0
      %2365 = vmatpush1.msra.mxu0 0.0
      %2366 = vmatprep.subr.mxu0 0.0
      %2367 = vmatpush1.msra.mxu0 0.0
      %2368 = vmatprep.subr.mxu0 0.0
      %2369 = vmatpush1.msra.mxu0 0.0
      %2370 = vmatprep.subr.mxu0 0.0
      %2371 = vmatpush1.msra.mxu0 0.0
      %2372 = vmatprep.subr.mxu0 0.0
      %2373 = vmatpush1.msra.mxu0 0.0
      %2374 = vmatprep.subr.mxu0 0.0
      %2375 = vmatpush1.msra.mxu0 0.0
      %2376 = vmatprep.subr.mxu0 0.0
      %2377 = vmatpush1.msra.mxu0 0.0
      %2378 = vmatprep.subr.mxu0 0.0
      %2379 = vmatpush1.msra.mxu0 0.0
      %2380 = vmatprep.subr.mxu0 0.0
      %2381 = vmatpush1.msra.mxu0 0.0
      %2382 = vmatprep.subr.mxu0 0.0
      %2383 = vmatpush1.msra.mxu0 0.0
      %2384 = vmatprep.subr.mxu0 0.0
      %2385 = vmatpush1.msra.mxu0 0.0
      %2386 = vmatprep.subr.mxu0 0.0
      %2387 = vmatpush1.msra.mxu0 0.0
      %2388 = vmatprep.subr.mxu0 0.0
      %2389 = vmatpush1.msra.mxu0 0.0
      %2390 = vmatprep.subr.mxu0 0.0
      %2391 = vmatpush1.msra.mxu0 0.0
      %2392 = vmatprep.subr.mxu0 0.0
      %2393 = vmatpush1.msra.mxu0 0.0
      %2394 = vmatprep.subr.mxu0 0.0
      %2395 = vmatpush1.msra.mxu0 0.0
      %2396 = vmatprep.subr.mxu0 0.0
      %2397 = vmatpush1.msra.mxu0 0.0
      %2398 = vmatprep.subr.mxu0 0.0
      %2399 = vmatpush1.msra.mxu0 0.0
      %2400 = vmatprep.subr.mxu0 0.0
      %2401 = vmatpush1.msra.mxu0 0.0
      %2402 = vmatprep.subr.mxu0 0.0
      %2403 = vmatpush1.msra.mxu0 0.0
      %2404 = vmatprep.subr.mxu0 0.0
      %2405 = vmatpush1.msra.mxu0 0.0
      %2406 = vmatprep.subr.mxu0 0.0
      %2407 = vmatpush1.msra.mxu0 0.0
      %2408 = vmatprep.subr.mxu0 0.0
      %2409 = vmatpush1.msra.mxu0 0.0
      %2410 = vmatprep.subr.mxu0 0.0
      %2411 = vmatpush1.msra.mxu0 0.0
      %2412 = vmatprep.subr.mxu0 0.0
      %2413 = vmatpush1.msra.mxu0 0.0
      %2414 = vmatprep.subr.mxu0 0.0
      %2415 = vmatpush1.msra.mxu0 0.0
      %2416 = vmatprep.subr.mxu0 0.0
      %2417 = vmatpush1.msra.mxu0 0.0
      %2418 = vmatprep.subr.mxu0 0.0
      %2419 = vmatpush1.msra.mxu0 0.0
      %2420 = vmatprep.mubr.f32.mxu0 0.0
      %2421 = vmatmul.mubr.f32.gmra.mrb[0].mxu0 %v835
      %v2422 = vpop.f32.mrb[0].mxu0
      %v2423 = vadd.f32 0.0, %v2422
      %v2424 = vpop.f32.mrb[0].mxu0
      %v2425 = vadd.f32 0.0, %v2424
      %2426 = vdwg.mxu0
      %v2427 = vadd.f32 %v2346, %v2423
      %v2428 = vadd.f32 %v2347, %v2425
      %2429 = vrot.lane.b32.xlu0 %v1872, 112
      %v2430 = vpop.permute.xlu0 %2429
      %2431 = vrot.lane.b32.xlu0 %v1873, 112
      %v2432 = vpop.permute.xlu0 %2431
      %v2433 = vsel %vm914, %v2430, %v2432
      %v2434 = vsel %vm914, %v2432, %v2430
      %v2435 = vmul.f32 %v2433, %v921
      %v2436 = vmul.f32 %v2434, %v925
      %2437 = vmatprep.subr.mxu0 %v2436
      %2438 = vmatpush1.msra.mxu0 %v2435
      %2439 = vmatprep.subr.mxu0 0.0
      %2440 = vmatpush1.msra.mxu0 0.0
      %2441 = vmatprep.subr.mxu0 0.0
      %2442 = vmatpush1.msra.mxu0 0.0
      %2443 = vmatprep.subr.mxu0 0.0
      %2444 = vmatpush1.msra.mxu0 0.0
      %2445 = vmatprep.subr.mxu0 0.0
      %2446 = vmatpush1.msra.mxu0 0.0
      %2447 = vmatprep.subr.mxu0 0.0
      %2448 = vmatpush1.msra.mxu0 0.0
      %2449 = vmatprep.subr.mxu0 0.0
      %2450 = vmatpush1.msra.mxu0 0.0
      %2451 = vmatprep.subr.mxu0 0.0
      %2452 = vmatpush1.msra.mxu0 0.0
      %2453 = vmatprep.subr.mxu0 0.0
      %2454 = vmatpush1.msra.mxu0 0.0
      %2455 = vmatprep.subr.mxu0 0.0
      %2456 = vmatpush1.msra.mxu0 0.0
      %2457 = vmatprep.subr.mxu0 0.0
      %2458 = vmatpush1.msra.mxu0 0.0
      %2459 = vmatprep.subr.mxu0 0.0
      %2460 = vmatpush1.msra.mxu0 0.0
      %2461 = vmatprep.subr.mxu0 0.0
      %2462 = vmatpush1.msra.mxu0 0.0
      %2463 = vmatprep.subr.mxu0 0.0
      %2464 = vmatpush1.msra.mxu0 0.0
      %2465 = vmatprep.subr.mxu0 0.0
      %2466 = vmatpush1.msra.mxu0 0.0
      %2467 = vmatprep.subr.mxu0 0.0
      %2468 = vmatpush1.msra.mxu0 0.0
      %2469 = vmatprep.subr.mxu0 0.0
      %2470 = vmatpush1.msra.mxu0 0.0
      %2471 = vmatprep.subr.mxu0 0.0
      %2472 = vmatpush1.msra.mxu0 0.0
      %2473 = vmatprep.subr.mxu0 0.0
      %2474 = vmatpush1.msra.mxu0 0.0
      %2475 = vmatprep.subr.mxu0 0.0
      %2476 = vmatpush1.msra.mxu0 0.0
      %2477 = vmatprep.subr.mxu0 0.0
      %2478 = vmatpush1.msra.mxu0 0.0
      %2479 = vmatprep.subr.mxu0 0.0
      %2480 = vmatpush1.msra.mxu0 0.0
      %2481 = vmatprep.subr.mxu0 0.0
      %2482 = vmatpush1.msra.mxu0 0.0
      %2483 = vmatprep.subr.mxu0 0.0
      %2484 = vmatpush1.msra.mxu0 0.0
      %2485 = vmatprep.subr.mxu0 0.0
      %2486 = vmatpush1.msra.mxu0 0.0
      %2487 = vmatprep.subr.mxu0 0.0
      %2488 = vmatpush1.msra.mxu0 0.0
      %2489 = vmatprep.subr.mxu0 0.0
      %2490 = vmatpush1.msra.mxu0 0.0
      %2491 = vmatprep.subr.mxu0 0.0
      %2492 = vmatpush1.msra.mxu0 0.0
      %2493 = vmatprep.subr.mxu0 0.0
      %2494 = vmatpush1.msra.mxu0 0.0
      %2495 = vmatprep.subr.mxu0 0.0
      %2496 = vmatpush1.msra.mxu0 0.0
      %2497 = vmatprep.subr.mxu0 0.0
      %2498 = vmatpush1.msra.mxu0 0.0
      %2499 = vmatprep.subr.mxu0 0.0
      %2500 = vmatpush1.msra.mxu0 0.0
      %2501 = vmatprep.mubr.f32.mxu0 0.0
      %2502 = vmatmul.mubr.f32.gmra.mrb[0].mxu0 %v931
      %v2503 = vpop.f32.mrb[0].mxu0
      %v2504 = vadd.f32 0.0, %v2503
      %v2505 = vpop.f32.mrb[0].mxu0
      %v2506 = vadd.f32 0.0, %v2505
      %2507 = vdwg.mxu0
      %v2508 = vadd.f32 %v2427, %v2504
      %v2509 = vadd.f32 %v2428, %v2506
      %2510 = vrot.lane.b32.xlu0 %v1872, 111
      %v2511 = vpop.permute.xlu0 %2510
      %2512 = vrot.lane.b32.xlu0 %v1873, 111
      %v2513 = vpop.permute.xlu0 %2512
      %v2514 = vsel %vm1010, %v2511, %v2513
      %v2515 = vsel %vm1010, %v2513, %v2511
      %v2516 = vmul.f32 %v2514, %v1017
      %v2517 = vmul.f32 %v2515, %v1021
      %2518 = vmatprep.subr.mxu0 %v2517
      %2519 = vmatpush1.msra.mxu0 %v2516
      %2520 = vmatprep.subr.mxu0 0.0
      %2521 = vmatpush1.msra.mxu0 0.0
      %2522 = vmatprep.subr.mxu0 0.0
      %2523 = vmatpush1.msra.mxu0 0.0
      %2524 = vmatprep.subr.mxu0 0.0
      %2525 = vmatpush1.msra.mxu0 0.0
      %2526 = vmatprep.subr.mxu0 0.0
      %2527 = vmatpush1.msra.mxu0 0.0
      %2528 = vmatprep.subr.mxu0 0.0
      %2529 = vmatpush1.msra.mxu0 0.0
      %2530 = vmatprep.subr.mxu0 0.0
      %2531 = vmatpush1.msra.mxu0 0.0
      %2532 = vmatprep.subr.mxu0 0.0
      %2533 = vmatpush1.msra.mxu0 0.0
      %2534 = vmatprep.subr.mxu0 0.0
      %2535 = vmatpush1.msra.mxu0 0.0
      %2536 = vmatprep.subr.mxu0 0.0
      %2537 = vmatpush1.msra.mxu0 0.0
      %2538 = vmatprep.subr.mxu0 0.0
      %2539 = vmatpush1.msra.mxu0 0.0
      %2540 = vmatprep.subr.mxu0 0.0
      %2541 = vmatpush1.msra.mxu0 0.0
      %2542 = vmatprep.subr.mxu0 0.0
      %2543 = vmatpush1.msra.mxu0 0.0
      %2544 = vmatprep.subr.mxu0 0.0
      %2545 = vmatpush1.msra.mxu0 0.0
      %2546 = vmatprep.subr.mxu0 0.0
      %2547 = vmatpush1.msra.mxu0 0.0
      %2548 = vmatprep.subr.mxu0 0.0
      %2549 = vmatpush1.msra.mxu0 0.0
      %2550 = vmatprep.subr.mxu0 0.0
      %2551 = vmatpush1.msra.mxu0 0.0
      %2552 = vmatprep.subr.mxu0 0.0
      %2553 = vmatpush1.msra.mxu0 0.0
      %2554 = vmatprep.subr.mxu0 0.0
      %2555 = vmatpush1.msra.mxu0 0.0
      %2556 = vmatprep.subr.mxu0 0.0
      %2557 = vmatpush1.msra.mxu0 0.0
      %2558 = vmatprep.subr.mxu0 0.0
      %2559 = vmatpush1.msra.mxu0 0.0
      %2560 = vmatprep.subr.mxu0 0.0
      %2561 = vmatpush1.msra.mxu0 0.0
      %2562 = vmatprep.subr.mxu0 0.0
      %2563 = vmatpush1.msra.mxu0 0.0
      %2564 = vmatprep.subr.mxu0 0.0
      %2565 = vmatpush1.msra.mxu0 0.0
      %2566 = vmatprep.subr.mxu0 0.0
      %2567 = vmatpush1.msra.mxu0 0.0
      %2568 = vmatprep.subr.mxu0 0.0
      %2569 = vmatpush1.msra.mxu0 0.0
      %2570 = vmatprep.subr.mxu0 0.0
      %2571 = vmatpush1.msra.mxu0 0.0
      %2572 = vmatprep.subr.mxu0 0.0
      %2573 = vmatpush1.msra.mxu0 0.0
      %2574 = vmatprep.subr.mxu0 0.0
      %2575 = vmatpush1.msra.mxu0 0.0
      %2576 = vmatprep.subr.mxu0 0.0
      %2577 = vmatpush1.msra.mxu0 0.0
      %2578 = vmatprep.subr.mxu0 0.0
      %2579 = vmatpush1.msra.mxu0 0.0
      %2580 = vmatprep.subr.mxu0 0.0
      %2581 = vmatpush1.msra.mxu0 0.0
      %2582 = vmatprep.mubr.f32.mxu0 0.0
      %2583 = vmatmul.mubr.f32.gmra.mrb[0].mxu0 %v1027
      %v2584 = vpop.f32.mrb[0].mxu0
      %v2585 = vadd.f32 0.0, %v2584
      %v2586 = vpop.f32.mrb[0].mxu0
      %v2587 = vadd.f32 0.0, %v2586
      %2588 = vdwg.mxu0
      %v2589 = vadd.f32 %v2508, %v2585
      %v2590 = vadd.f32 %v2509, %v2587
      %v2591 = vmul.f32 %v2589, %v1105
      %v2592 = vmul.f32 %v2590, %v1105
      %v2593 = vadd.f32 %v2591, %v1111
      %v2594 = vadd.f32 %v2592, %v1111
      %v2595 = vmax.f32 %v2593, 0.0
      %v2596 = vmax.f32 %v2594, 0.0
      %2597 = vrot.lane.b32.xlu0 %v2595, 17
      %v2598 = vpop.permute.xlu0 %2597
      %2599 = vrot.lane.b32.xlu0 %v2596, 17
      %v2600 = vpop.permute.xlu0 %2599
      %v2601 = vsel %vm265, %v2598, %v2600
      %v2602 = vsel %vm265, %v2600, %v2598
      %v2603 = vmul.f32 %v2602, %v272
      %v2604 = vmul.f32 %v2601, %v276
      %2605 = vrot.lane.b32.xlu0 %v2595, 16
      %v2606 = vpop.permute.xlu0 %2605
      %2607 = vrot.lane.b32.xlu0 %v2596, 16
      %v2608 = vpop.permute.xlu0 %2607
      %v2609 = vsel %vm285, %v2606, %v2608
      %v2610 = vsel %vm285, %v2608, %v2606
      %v2611 = vmul.f32 %v2610, %v292
      %v2612 = vmul.f32 %v2609, %v296
      %2613 = vmatprep.subr.mxu0 %v2612
      %2614 = vmatpush1.msra.mxu0 %v2611
      %2615 = vmatprep.subr.mxu0 0.0
      %2616 = vmatpush1.msra.mxu0 0.0
      %2617 = vmatprep.subr.mxu0 0.0
      %2618 = vmatpush1.msra.mxu0 0.0
      %2619 = vmatprep.subr.mxu0 0.0
      %2620 = vmatpush1.msra.mxu0 0.0
      %2621 = vmatprep.subr.mxu0 0.0
      %2622 = vmatpush1.msra.mxu0 0.0
      %2623 = vmatprep.subr.mxu0 0.0
      %2624 = vmatpush1.msra.mxu0 0.0
      %2625 = vmatprep.subr.mxu0 0.0
      %2626 = vmatpush1.msra.mxu0 0.0
      %2627 = vmatprep.subr.mxu0 0.0
      %2628 = vmatpush1.msra.mxu0 0.0
      %2629 = vmatprep.subr.mxu0 0.0
      %2630 = vmatpush1.msra.mxu0 0.0
      %2631 = vmatprep.subr.mxu0 0.0
      %2632 = vmatpush1.msra.mxu0 0.0
      %2633 = vmatprep.subr.mxu0 0.0
      %2634 = vmatpush1.msra.mxu0 0.0
      %2635 = vmatprep.subr.mxu0 0.0
      %2636 = vmatpush1.msra.mxu0 0.0
      %2637 = vmatprep.subr.mxu0 0.0
      %2638 = vmatpush1.msra.mxu0 0.0
      %2639 = vmatprep.subr.mxu0 0.0
      %2640 = vmatpush1.msra.mxu0 0.0
      %2641 = vmatprep.subr.mxu0 0.0
      %2642 = vmatpush1.msra.mxu0 0.0
      %2643 = vmatprep.subr.mxu0 0.0
      %2644 = vmatpush1.msra.mxu0 0.0
      %2645 = vmatprep.subr.mxu0 0.0
      %2646 = vmatpush1.msra.mxu0 0.0
      %2647 = vmatprep.subr.mxu0 0.0
      %2648 = vmatpush1.msra.mxu0 0.0
      %2649 = vmatprep.subr.mxu0 0.0
      %2650 = vmatpush1.msra.mxu0 0.0
      %2651 = vmatprep.subr.mxu0 0.0
      %2652 = vmatpush1.msra.mxu0 0.0
      %2653 = vmatprep.subr.mxu0 0.0
      %2654 = vmatpush1.msra.mxu0 0.0
      %2655 = vmatprep.subr.mxu0 0.0
      %2656 = vmatpush1.msra.mxu0 0.0
      %2657 = vmatprep.subr.mxu0 0.0
      %2658 = vmatpush1.msra.mxu0 0.0
      %2659 = vmatprep.subr.mxu0 0.0
      %2660 = vmatpush1.msra.mxu0 0.0
      %2661 = vmatprep.subr.mxu0 0.0
      %2662 = vmatpush1.msra.mxu0 0.0
      %2663 = vmatprep.subr.mxu0 0.0
      %2664 = vmatpush1.msra.mxu0 0.0
      %2665 = vmatprep.subr.mxu0 0.0
      %2666 = vmatpush1.msra.mxu0 0.0
      %2667 = vmatprep.subr.mxu0 0.0
      %2668 = vmatpush1.msra.mxu0 0.0
      %2669 = vmatprep.subr.mxu0 0.0
      %2670 = vmatpush1.msra.mxu0 0.0
      %2671 = vmatprep.subr.mxu0 0.0
      %2672 = vmatpush1.msra.mxu0 0.0
      %2673 = vmatprep.subr.mxu0 0.0
      %2674 = vmatpush1.msra.mxu0 0.0
      %2675 = vmatprep.subr.mxu0 0.0
      %2676 = vmatpush1.msra.mxu0 0.0
      %2677 = vmatprep.mubr.f32.mxu0 0.0
      %2678 = vmatmul.mubr.f32.gmra.mrb[0].mxu0 %v1134
      %v2679 = vpop.f32.mrb[0].mxu0
      %v2680 = vadd.f32 0.0, %v2679
      %v2681 = vpop.f32.mrb[0].mxu0
      %v2682 = vadd.f32 0.0, %v2681
      %2683 = vdwg.mxu0
      %2684 = vmatprep.subr.mxu0 %v2604
      %2685 = vmatpush1.msra.mxu0 %v2603
      %2686 = vmatprep.subr.mxu0 0.0
      %2687 = vmatpush1.msra.mxu0 0.0
      %2688 = vmatprep.subr.mxu0 0.0
      %2689 = vmatpush1.msra.mxu0 0.0
      %2690 = vmatprep.subr.mxu0 0.0
      %2691 = vmatpush1.msra.mxu0 0.0
      %2692 = vmatprep.subr.mxu0 0.0
      %2693 = vmatpush1.msra.mxu0 0.0
      %2694 = vmatprep.subr.mxu0 0.0
      %2695 = vmatpush1.msra.mxu0 0.0
      %2696 = vmatprep.subr.mxu0 0.0
      %2697 = vmatpush1.msra.mxu0 0.0
      %2698 = vmatprep.subr.mxu0 0.0
      %2699 = vmatpush1.msra.mxu0 0.0
      %2700 = vmatprep.subr.mxu0 0.0
      %2701 = vmatpush1.msra.mxu0 0.0
      %2702 = vmatprep.subr.mxu0 0.0
      %2703 = vmatpush1.msra.mxu0 0.0
      %2704 = vmatprep.subr.mxu0 0.0
      %2705 = vmatpush1.msra.mxu0 0.0
      %2706 = vmatprep.subr.mxu0 0.0
      %2707 = vmatpush1.msra.mxu0 0.0
      %2708 = vmatprep.subr.mxu0 0.0
      %2709 = vmatpush1.msra.mxu0 0.0
      %2710 = vmatprep.subr.mxu0 0.0
      %2711 = vmatpush1.msra.mxu0 0.0
      %2712 = vmatprep.subr.mxu0 0.0
      %2713 = vmatpush1.msra.mxu0 0.0
      %2714 = vmatprep.subr.mxu0 0.0
      %2715 = vmatpush1.msra.mxu0 0.0
      %2716 = vmatprep.subr.mxu0 0.0
      %2717 = vmatpush1.msra.mxu0 0.0
      %2718 = vmatprep.subr.mxu0 0.0
      %2719 = vmatpush1.msra.mxu0 0.0
      %2720 = vmatprep.subr.mxu0 0.0
      %2721 = vmatpush1.msra.mxu0 0.0
      %2722 = vmatprep.subr.mxu0 0.0
      %2723 = vmatpush1.msra.mxu0 0.0
      %2724 = vmatprep.subr.mxu0 0.0
      %2725 = vmatpush1.msra.mxu0 0.0
      %2726 = vmatprep.subr.mxu0 0.0
      %2727 = vmatpush1.msra.mxu0 0.0
      %2728 = vmatprep.subr.mxu0 0.0
      %2729 = vmatpush1.msra.mxu0 0.0
      %2730 = vmatprep.subr.mxu0 0.0
      %2731 = vmatpush1.msra.mxu0 0.0
      %2732 = vmatprep.subr.mxu0 0.0
      %2733 = vmatpush1.msra.mxu0 0.0
      %2734 = vmatprep.subr.mxu0 0.0
      %2735 = vmatpush1.msra.mxu0 0.0
      %2736 = vmatprep.subr.mxu0 0.0
      %2737 = vmatpush1.msra.mxu0 0.0
      %2738 = vmatprep.subr.mxu0 0.0
      %2739 = vmatpush1.msra.mxu0 0.0
      %2740 = vmatprep.subr.mxu0 0.0
      %2741 = vmatpush1.msra.mxu0 0.0
      %2742 = vmatprep.subr.mxu0 0.0
      %2743 = vmatpush1.msra.mxu0 0.0
      %2744 = vmatprep.subr.mxu0 0.0
      %2745 = vmatpush1.msra.mxu0 0.0
      %2746 = vmatprep.subr.mxu0 0.0
      %2747 = vmatpush1.msra.mxu0 0.0
      %2748 = vmatprep.mubr.f32.mxu0 0.0
      %2749 = vmatmul.mubr.f32.gmra.mrb[0].mxu0 %v1208
      %v2750 = vpop.f32.mrb[0].mxu0
      %v2751 = vadd.f32 %v2680, %v2750
      %v2752 = vpop.f32.mrb[0].mxu0
      %v2753 = vadd.f32 %v2682, %v2752
      %2754 = vdwg.mxu0
      %2755 = vrot.lane.b32.xlu0 %v2595, 15
      %v2756 = vpop.permute.xlu0 %2755
      %2757 = vrot.lane.b32.xlu0 %v2596, 15
      %v2758 = vpop.permute.xlu0 %2757
      %v2759 = vsel %vm454, %v2756, %v2758
      %v2760 = vsel %vm454, %v2758, %v2756
      %v2761 = vmul.f32 %v2760, %v461
      %v2762 = vmul.f32 %v2759, %v465
      %2763 = vmatprep.subr.mxu0 %v2762
      %2764 = vmatpush1.msra.mxu0 %v2761
      %2765 = vmatprep.subr.mxu0 0.0
      %2766 = vmatpush1.msra.mxu0 0.0
      %2767 = vmatprep.subr.mxu0 0.0
      %2768 = vmatpush1.msra.mxu0 0.0
      %2769 = vmatprep.subr.mxu0 0.0
      %2770 = vmatpush1.msra.mxu0 0.0
      %2771 = vmatprep.subr.mxu0 0.0
      %2772 = vmatpush1.msra.mxu0 0.0
      %2773 = vmatprep.subr.mxu0 0.0
      %2774 = vmatpush1.msra.mxu0 0.0
      %2775 = vmatprep.subr.mxu0 0.0
      %2776 = vmatpush1.msra.mxu0 0.0
      %2777 = vmatprep.subr.mxu0 0.0
      %2778 = vmatpush1.msra.mxu0 0.0
      %2779 = vmatprep.subr.mxu0 0.0
      %2780 = vmatpush1.msra.mxu0 0.0
      %2781 = vmatprep.subr.mxu0 0.0
      %2782 = vmatpush1.msra.mxu0 0.0
      %2783 = vmatprep.subr.mxu0 0.0
      %2784 = vmatpush1.msra.mxu0 0.0
      %2785 = vmatprep.subr.mxu0 0.0
      %2786 = vmatpush1.msra.mxu0 0.0
      %2787 = vmatprep.subr.mxu0 0.0
      %2788 = vmatpush1.msra.mxu0 0.0
      %2789 = vmatprep.subr.mxu0 0.0
      %2790 = vmatpush1.msra.mxu0 0.0
      %2791 = vmatprep.subr.mxu0 0.0
      %2792 = vmatpush1.msra.mxu0 0.0
      %2793 = vmatprep.subr.mxu0 0.0
      %2794 = vmatpush1.msra.mxu0 0.0
      %2795 = vmatprep.subr.mxu0 0.0
      %2796 = vmatpush1.msra.mxu0 0.0
      %2797 = vmatprep.subr.mxu0 0.0
      %2798 = vmatpush1.msra.mxu0 0.0
      %2799 = vmatprep.subr.mxu0 0.0
      %2800 = vmatpush1.msra.mxu0 0.0
      %2801 = vmatprep.subr.mxu0 0.0
      %2802 = vmatpush1.msra.mxu0 0.0
      %2803 = vmatprep.subr.mxu0 0.0
      %2804 = vmatpush1.msra.mxu0 0.0
      %2805 = vmatprep.subr.mxu0 0.0
      %2806 = vmatpush1.msra.mxu0 0.0
      %2807 = vmatprep.subr.mxu0 0.0
      %2808 = vmatpush1.msra.mxu0 0.0
      %2809 = vmatprep.subr.mxu0 0.0
      %2810 = vmatpush1.msra.mxu0 0.0
      %2811 = vmatprep.subr.mxu0 0.0
      %2812 = vmatpush1.msra.mxu0 0.0
      %2813 = vmatprep.subr.mxu0 0.0
      %2814 = vmatpush1.msra.mxu0 0.0
      %2815 = vmatprep.subr.mxu0 0.0
      %2816 = vmatpush1.msra.mxu0 0.0
      %2817 = vmatprep.subr.mxu0 0.0
      %2818 = vmatpush1.msra.mxu0 0.0
      %2819 = vmatprep.subr.mxu0 0.0
      %2820 = vmatpush1.msra.mxu0 0.0
      %2821 = vmatprep.subr.mxu0 0.0
      %2822 = vmatpush1.msra.mxu0 0.0
      %2823 = vmatprep.subr.mxu0 0.0
      %2824 = vmatpush1.msra.mxu0 0.0
      %2825 = vmatprep.subr.mxu0 0.0
      %2826 = vmatpush1.msra.mxu0 0.0
      %2827 = vmatprep.mubr.f32.mxu0 0.0
      %2828 = vmatmul.mubr.f32.gmra.mrb[0].mxu0 %v1290
      %v2829 = vpop.f32.mrb[0].mxu0
      %v2830 = vadd.f32 0.0, %v2829
      %v2831 = vpop.f32.mrb[0].mxu0
      %v2832 = vadd.f32 0.0, %v2831
      %2833 = vdwg.mxu0
      %v2834 = vadd.f32 %v2751, %v2830
      %v2835 = vadd.f32 %v2753, %v2832
      %2836 = vrot.lane.b32.xlu0 %v2595, 1
      %v2837 = vpop.permute.xlu0 %2836
      %2838 = vrot.lane.b32.xlu0 %v2596, 1
      %v2839 = vpop.permute.xlu0 %2838
      %v2840 = vsel %vm550, %v2837, %v2839
      %v2841 = vsel %vm550, %v2839, %v2837
      %v2842 = vmul.f32 %v2841, %v557
      %v2843 = vmul.f32 %v2840, %v561
      %2844 = vmatprep.subr.mxu0 %v2843
      %2845 = vmatpush1.msra.mxu0 %v2842
      %2846 = vmatprep.subr.mxu0 0.0
      %2847 = vmatpush1.msra.mxu0 0.0
      %2848 = vmatprep.subr.mxu0 0.0
      %2849 = vmatpush1.msra.mxu0 0.0
      %2850 = vmatprep.subr.mxu0 0.0
      %2851 = vmatpush1.msra.mxu0 0.0
      %2852 = vmatprep.subr.mxu0 0.0
      %2853 = vmatpush1.msra.mxu0 0.0
      %2854 = vmatprep.subr.mxu0 0.0
      %2855 = vmatpush1.msra.mxu0 0.0
      %2856 = vmatprep.subr.mxu0 0.0
      %2857 = vmatpush1.msra.mxu0 0.0
      %2858 = vmatprep.subr.mxu0 0.0
      %2859 = vmatpush1.msra.mxu0 0.0
      %2860 = vmatprep.subr.mxu0 0.0
      %2861 = vmatpush1.msra.mxu0 0.0
      %2862 = vmatprep.subr.mxu0 0.0
      %2863 = vmatpush1.msra.mxu0 0.0
      %2864 = vmatprep.subr.mxu0 0.0
      %2865 = vmatpush1.msra.mxu0 0.0
      %2866 = vmatprep.subr.mxu0 0.0
      %2867 = vmatpush1.msra.mxu0 0.0
      %2868 = vmatprep.subr.mxu0 0.0
      %2869 = vmatpush1.msra.mxu0 0.0
      %2870 = vmatprep.subr.mxu0 0.0
      %2871 = vmatpush1.msra.mxu0 0.0
      %2872 = vmatprep.subr.mxu0 0.0
      %2873 = vmatpush1.msra.mxu0 0.0
      %2874 = vmatprep.subr.mxu0 0.0
      %2875 = vmatpush1.msra.mxu0 0.0
      %2876 = vmatprep.subr.mxu0 0.0
      %2877 = vmatpush1.msra.mxu0 0.0
      %2878 = vmatprep.subr.mxu0 0.0
      %2879 = vmatpush1.msra.mxu0 0.0
      %2880 = vmatprep.subr.mxu0 0.0
      %2881 = vmatpush1.msra.mxu0 0.0
      %2882 = vmatprep.subr.mxu0 0.0
      %2883 = vmatpush1.msra.mxu0 0.0
      %2884 = vmatprep.subr.mxu0 0.0
      %2885 = vmatpush1.msra.mxu0 0.0
      %2886 = vmatprep.subr.mxu0 0.0
      %2887 = vmatpush1.msra.mxu0 0.0
      %2888 = vmatprep.subr.mxu0 0.0
      %2889 = vmatpush1.msra.mxu0 0.0
      %2890 = vmatprep.subr.mxu0 0.0
      %2891 = vmatpush1.msra.mxu0 0.0
      %2892 = vmatprep.subr.mxu0 0.0
      %2893 = vmatpush1.msra.mxu0 0.0
      %2894 = vmatprep.subr.mxu0 0.0
      %2895 = vmatpush1.msra.mxu0 0.0
      %2896 = vmatprep.subr.mxu0 0.0
      %2897 = vmatpush1.msra.mxu0 0.0
      %2898 = vmatprep.subr.mxu0 0.0
      %2899 = vmatpush1.msra.mxu0 0.0
      %2900 = vmatprep.subr.mxu0 0.0
      %2901 = vmatpush1.msra.mxu0 0.0
      %2902 = vmatprep.subr.mxu0 0.0
      %2903 = vmatpush1.msra.mxu0 0.0
      %2904 = vmatprep.subr.mxu0 0.0
      %2905 = vmatpush1.msra.mxu0 0.0
      %2906 = vmatprep.subr.mxu0 0.0
      %2907 = vmatpush1.msra.mxu0 0.0
      %2908 = vmatprep.mubr.f32.mxu0 0.0
      %2909 = vmatmul.mubr.f32.gmra.mrb[0].mxu0 %v1374
      %v2910 = vpop.f32.mrb[0].mxu0
      %v2911 = vadd.f32 0.0, %v2910
      %v2912 = vpop.f32.mrb[0].mxu0
      %v2913 = vadd.f32 0.0, %v2912
      %2914 = vdwg.mxu0
      %v2915 = vadd.f32 %v2834, %v2911
      %v2916 = vadd.f32 %v2835, %v2913
      %2917 = vmatprep.subr.mxu0 %v2596
      %2918 = vmatpush1.msra.mxu0 %v2595
      %2919 = vmatprep.subr.mxu0 0.0
      %2920 = vmatpush1.msra.mxu0 0.0
      %2921 = vmatprep.subr.mxu0 0.0
      %2922 = vmatpush1.msra.mxu0 0.0
      %2923 = vmatprep.subr.mxu0 0.0
      %2924 = vmatpush1.msra.mxu0 0.0
      %2925 = vmatprep.subr.mxu0 0.0
      %2926 = vmatpush1.msra.mxu0 0.0
      %2927 = vmatprep.subr.mxu0 0.0
      %2928 = vmatpush1.msra.mxu0 0.0
      %2929 = vmatprep.subr.mxu0 0.0
      %2930 = vmatpush1.msra.mxu0 0.0
      %2931 = vmatprep.subr.mxu0 0.0
      %2932 = vmatpush1.msra.mxu0 0.0
      %2933 = vmatprep.subr.mxu0 0.0
      %2934 = vmatpush1.msra.mxu0 0.0
      %2935 = vmatprep.subr.mxu0 0.0
      %2936 = vmatpush1.msra.mxu0 0.0
      %2937 = vmatprep.subr.mxu0 0.0
      %2938 = vmatpush1.msra.mxu0 0.0
      %2939 = vmatprep.subr.mxu0 0.0
      %2940 = vmatpush1.msra.mxu0 0.0
      %2941 = vmatprep.subr.mxu0 0.0
      %2942 = vmatpush1.msra.mxu0 0.0
      %2943 = vmatprep.subr.mxu0 0.0
      %2944 = vmatpush1.msra.mxu0 0.0
      %2945 = vmatprep.subr.mxu0 0.0
      %2946 = vmatpush1.msra.mxu0 0.0
      %2947 = vmatprep.subr.mxu0 0.0
      %2948 = vmatpush1.msra.mxu0 0.0
      %2949 = vmatprep.subr.mxu0 0.0
      %2950 = vmatpush1.msra.mxu0 0.0
      %2951 = vmatprep.subr.mxu0 0.0
      %2952 = vmatpush1.msra.mxu0 0.0
      %2953 = vmatprep.subr.mxu0 0.0
      %2954 = vmatpush1.msra.mxu0 0.0
      %2955 = vmatprep.subr.mxu0 0.0
      %2956 = vmatpush1.msra.mxu0 0.0
      %2957 = vmatprep.subr.mxu0 0.0
      %2958 = vmatpush1.msra.mxu0 0.0
      %2959 = vmatprep.subr.mxu0 0.0
      %2960 = vmatpush1.msra.mxu0 0.0
      %2961 = vmatprep.subr.mxu0 0.0
      %2962 = vmatpush1.msra.mxu0 0.0
      %2963 = vmatprep.subr.mxu0 0.0
      %2964 = vmatpush1.msra.mxu0 0.0
      %2965 = vmatprep.subr.mxu0 0.0
      %2966 = vmatpush1.msra.mxu0 0.0
      %2967 = vmatprep.subr.mxu0 0.0
      %2968 = vmatpush1.msra.mxu0 0.0
      %2969 = vmatprep.subr.mxu0 0.0
      %2970 = vmatpush1.msra.mxu0 0.0
      %2971 = vmatprep.subr.mxu0 0.0
      %2972 = vmatpush1.msra.mxu0 0.0
      %2973 = vmatprep.subr.mxu0 0.0
      %2974 = vmatpush1.msra.mxu0 0.0
      %2975 = vmatprep.subr.mxu0 0.0
      %2976 = vmatpush1.msra.mxu0 0.0
      %2977 = vmatprep.subr.mxu0 0.0
      %2978 = vmatpush1.msra.mxu0 0.0
      %2979 = vmatprep.subr.mxu0 0.0
      %2980 = vmatpush1.msra.mxu0 0.0
      %2981 = vmatprep.mubr.f32.mxu0 0.0
      %2982 = vmatmul.mubr.f32.gmra.mrb[0].mxu0 %v1450
      %v2983 = vpop.f32.mrb[0].mxu0
      %v2984 = vadd.f32 0.0, %v2983
      %v2985 = vpop.f32.mrb[0].mxu0
      %v2986 = vadd.f32 0.0, %v2985
      %2987 = vdwg.mxu0
      %v2988 = vadd.f32 %v2915, %v2984
      %v2989 = vadd.f32 %v2916, %v2986
      %2990 = vrot.lane.b32.xlu0 %v2595, 127
      %v2991 = vpop.permute.xlu0 %2990
      %2992 = vrot.lane.b32.xlu0 %v2596, 127
      %v2993 = vpop.permute.xlu0 %2992
      %v2994 = vsel %vm722, %v2991, %v2993
      %v2995 = vsel %vm722, %v2993, %v2991
      %v2996 = vmul.f32 %v2994, %v729
      %v2997 = vmul.f32 %v2995, %v733
      %2998 = vmatprep.subr.mxu0 %v2997
      %2999 = vmatpush1.msra.mxu0 %v2996
      %3000 = vmatprep.subr.mxu0 0.0
      %3001 = vmatpush1.msra.mxu0 0.0
      %3002 = vmatprep.subr.mxu0 0.0
      %3003 = vmatpush1.msra.mxu0 0.0
      %3004 = vmatprep.subr.mxu0 0.0
      %3005 = vmatpush1.msra.mxu0 0.0
      %3006 = vmatprep.subr.mxu0 0.0
      %3007 = vmatpush1.msra.mxu0 0.0
      %3008 = vmatprep.subr.mxu0 0.0
      %3009 = vmatpush1.msra.mxu0 0.0
      %3010 = vmatprep.subr.mxu0 0.0
      %3011 = vmatpush1.msra.mxu0 0.0
      %3012 = vmatprep.subr.mxu0 0.0
      %3013 = vmatpush1.msra.mxu0 0.0
      %3014 = vmatprep.subr.mxu0 0.0
      %3015 = vmatpush1.msra.mxu0 0.0
      %3016 = vmatprep.subr.mxu0 0.0
      %3017 = vmatpush1.msra.mxu0 0.0
      %3018 = vmatprep.subr.mxu0 0.0
      %3019 = vmatpush1.msra.mxu0 0.0
      %3020 = vmatprep.subr.mxu0 0.0
      %3021 = vmatpush1.msra.mxu0 0.0
      %3022 = vmatprep.subr.mxu0 0.0
      %3023 = vmatpush1.msra.mxu0 0.0
      %3024 = vmatprep.subr.mxu0 0.0
      %3025 = vmatpush1.msra.mxu0 0.0
      %3026 = vmatprep.subr.mxu0 0.0
      %3027 = vmatpush1.msra.mxu0 0.0
      %3028 = vmatprep.subr.mxu0 0.0
      %3029 = vmatpush1.msra.mxu0 0.0
      %3030 = vmatprep.subr.mxu0 0.0
      %3031 = vmatpush1.msra.mxu0 0.0
      %3032 = vmatprep.subr.mxu0 0.0
      %3033 = vmatpush1.msra.mxu0 0.0
      %3034 = vmatprep.subr.mxu0 0.0
      %3035 = vmatpush1.msra.mxu0 0.0
      %3036 = vmatprep.subr.mxu0 0.0
      %3037 = vmatpush1.msra.mxu0 0.0
      %3038 = vmatprep.subr.mxu0 0.0
      %3039 = vmatpush1.msra.mxu0 0.0
      %3040 = vmatprep.subr.mxu0 0.0
      %3041 = vmatpush1.msra.mxu0 0.0
      %3042 = vmatprep.subr.mxu0 0.0
      %3043 = vmatpush1.msra.mxu0 0.0
      %3044 = vmatprep.subr.mxu0 0.0
      %3045 = vmatpush1.msra.mxu0 0.0
      %3046 = vmatprep.subr.mxu0 0.0
      %3047 = vmatpush1.msra.mxu0 0.0
      %3048 = vmatprep.subr.mxu0 0.0
      %3049 = vmatpush1.msra.mxu0 0.0
      %3050 = vmatprep.subr.mxu0 0.0
      %3051 = vmatpush1.msra.mxu0 0.0
      %3052 = vmatprep.subr.mxu0 0.0
      %3053 = vmatpush1.msra.mxu0 0.0
      %3054 = vmatprep.subr.mxu0 0.0
      %3055 = vmatpush1.msra.mxu0 0.0
      %3056 = vmatprep.subr.mxu0 0.0
      %3057 = vmatpush1.msra.mxu0 0.0
      %3058 = vmatprep.subr.mxu0 0.0
      %3059 = vmatpush1.msra.mxu0 0.0
      %3060 = vmatprep.subr.mxu0 0.0
      %3061 = vmatpush1.msra.mxu0 0.0
      %3062 = vmatprep.mubr.f32.mxu0 0.0
      %3063 = vmatmul.mubr.f32.gmra.mrb[0].mxu0 %v1534
      %v3064 = vpop.f32.mrb[0].mxu0
      %v3065 = vadd.f32 0.0, %v3064
      %v3066 = vpop.f32.mrb[0].mxu0
      %v3067 = vadd.f32 0.0, %v3066
      %3068 = vdwg.mxu0
      %v3069 = vadd.f32 %v2988, %v3065
      %v3070 = vadd.f32 %v2989, %v3067
      %3071 = vrot.lane.b32.xlu0 %v2595, 113
      %v3072 = vpop.permute.xlu0 %3071
      %3073 = vrot.lane.b32.xlu0 %v2596, 113
      %v3074 = vpop.permute.xlu0 %3073
      %v3075 = vsel %vm818, %v3072, %v3074
      %v3076 = vsel %vm818, %v3074, %v3072
      %v3077 = vmul.f32 %v3075, %v825
      %v3078 = vmul.f32 %v3076, %v829
      %3079 = vmatprep.subr.mxu0 %v3078
      %3080 = vmatpush1.msra.mxu0 %v3077
      %3081 = vmatprep.subr.mxu0 0.0
      %3082 = vmatpush1.msra.mxu0 0.0
      %3083 = vmatprep.subr.mxu0 0.0
      %3084 = vmatpush1.msra.mxu0 0.0
      %3085 = vmatprep.subr.mxu0 0.0
      %3086 = vmatpush1.msra.mxu0 0.0
      %3087 = vmatprep.subr.mxu0 0.0
      %3088 = vmatpush1.msra.mxu0 0.0
      %3089 = vmatprep.subr.mxu0 0.0
      %3090 = vmatpush1.msra.mxu0 0.0
      %3091 = vmatprep.subr.mxu0 0.0
      %3092 = vmatpush1.msra.mxu0 0.0
      %3093 = vmatprep.subr.mxu0 0.0
      %3094 = vmatpush1.msra.mxu0 0.0
      %3095 = vmatprep.subr.mxu0 0.0
      %3096 = vmatpush1.msra.mxu0 0.0
      %3097 = vmatprep.subr.mxu0 0.0
      %3098 = vmatpush1.msra.mxu0 0.0
      %3099 = vmatprep.subr.mxu0 0.0
      %3100 = vmatpush1.msra.mxu0 0.0
      %3101 = vmatprep.subr.mxu0 0.0
      %3102 = vmatpush1.msra.mxu0 0.0
      %3103 = vmatprep.subr.mxu0 0.0
      %3104 = vmatpush1.msra.mxu0 0.0
      %3105 = vmatprep.subr.mxu0 0.0
      %3106 = vmatpush1.msra.mxu0 0.0
      %3107 = vmatprep.subr.mxu0 0.0
      %3108 = vmatpush1.msra.mxu0 0.0
      %3109 = vmatprep.subr.mxu0 0.0
      %3110 = vmatpush1.msra.mxu0 0.0
      %3111 = vmatprep.subr.mxu0 0.0
      %3112 = vmatpush1.msra.mxu0 0.0
      %3113 = vmatprep.subr.mxu0 0.0
      %3114 = vmatpush1.msra.mxu0 0.0
      %3115 = vmatprep.subr.mxu0 0.0
      %3116 = vmatpush1.msra.mxu0 0.0
      %3117 = vmatprep.subr.mxu0 0.0
      %3118 = vmatpush1.msra.mxu0 0.0
      %3119 = vmatprep.subr.mxu0 0.0
      %3120 = vmatpush1.msra.mxu0 0.0
      %3121 = vmatprep.subr.mxu0 0.0
      %3122 = vmatpush1.msra.mxu0 0.0
      %3123 = vmatprep.subr.mxu0 0.0
      %3124 = vmatpush1.msra.mxu0 0.0
      %3125 = vmatprep.subr.mxu0 0.0
      %3126 = vmatpush1.msra.mxu0 0.0
      %3127 = vmatprep.subr.mxu0 0.0
      %3128 = vmatpush1.msra.mxu0 0.0
      %3129 = vmatprep.subr.mxu0 0.0
      %3130 = vmatpush1.msra.mxu0 0.0
      %3131 = vmatprep.subr.mxu0 0.0
      %3132 = vmatpush1.msra.mxu0 0.0
      %3133 = vmatprep.subr.mxu0 0.0
      %3134 = vmatpush1.msra.mxu0 0.0
      %3135 = vmatprep.subr.mxu0 0.0
      %3136 = vmatpush1.msra.mxu0 0.0
      %3137 = vmatprep.subr.mxu0 0.0
      %3138 = vmatpush1.msra.mxu0 0.0
      %3139 = vmatprep.subr.mxu0 0.0
      %3140 = vmatpush1.msra.mxu0 0.0
      %3141 = vmatprep.subr.mxu0 0.0
      %3142 = vmatpush1.msra.mxu0 0.0
      %3143 = vmatprep.mubr.f32.mxu0 0.0
      %3144 = vmatmul.mubr.f32.gmra.mrb[0].mxu0 %v1618
      %v3145 = vpop.f32.mrb[0].mxu0
      %v3146 = vadd.f32 0.0, %v3145
      %v3147 = vpop.f32.mrb[0].mxu0
      %v3148 = vadd.f32 0.0, %v3147
      %3149 = vdwg.mxu0
      %v3150 = vadd.f32 %v3069, %v3146
      %v3151 = vadd.f32 %v3070, %v3148
      %3152 = vrot.lane.b32.xlu0 %v2595, 112
      %v3153 = vpop.permute.xlu0 %3152
      %3154 = vrot.lane.b32.xlu0 %v2596, 112
      %v3155 = vpop.permute.xlu0 %3154
      %v3156 = vsel %vm914, %v3153, %v3155
      %v3157 = vsel %vm914, %v3155, %v3153
      %v3158 = vmul.f32 %v3156, %v921
      %v3159 = vmul.f32 %v3157, %v925
      %3160 = vmatprep.subr.mxu0 %v3159
      %3161 = vmatpush1.msra.mxu0 %v3158
      %3162 = vmatprep.subr.mxu0 0.0
      %3163 = vmatpush1.msra.mxu0 0.0
      %3164 = vmatprep.subr.mxu0 0.0
      %3165 = vmatpush1.msra.mxu0 0.0
      %3166 = vmatprep.subr.mxu0 0.0
      %3167 = vmatpush1.msra.mxu0 0.0
      %3168 = vmatprep.subr.mxu0 0.0
      %3169 = vmatpush1.msra.mxu0 0.0
      %3170 = vmatprep.subr.mxu0 0.0
      %3171 = vmatpush1.msra.mxu0 0.0
      %3172 = vmatprep.subr.mxu0 0.0
      %3173 = vmatpush1.msra.mxu0 0.0
      %3174 = vmatprep.subr.mxu0 0.0
      %3175 = vmatpush1.msra.mxu0 0.0
      %3176 = vmatprep.subr.mxu0 0.0
      %3177 = vmatpush1.msra.mxu0 0.0
      %3178 = vmatprep.subr.mxu0 0.0
      %3179 = vmatpush1.msra.mxu0 0.0
      %3180 = vmatprep.subr.mxu0 0.0
      %3181 = vmatpush1.msra.mxu0 0.0
      %3182 = vmatprep.subr.mxu0 0.0
      %3183 = vmatpush1.msra.mxu0 0.0
      %3184 = vmatprep.subr.mxu0 0.0
      %3185 = vmatpush1.msra.mxu0 0.0
      %3186 = vmatprep.subr.mxu0 0.0
      %3187 = vmatpush1.msra.mxu0 0.0
      %3188 = vmatprep.subr.mxu0 0.0
      %3189 = vmatpush1.msra.mxu0 0.0
      %3190 = vmatprep.subr.mxu0 0.0
      %3191 = vmatpush1.msra.mxu0 0.0
      %3192 = vmatprep.subr.mxu0 0.0
      %3193 = vmatpush1.msra.mxu0 0.0
      %3194 = vmatprep.subr.mxu0 0.0
      %3195 = vmatpush1.msra.mxu0 0.0
      %3196 = vmatprep.subr.mxu0 0.0
      %3197 = vmatpush1.msra.mxu0 0.0
      %3198 = vmatprep.subr.mxu0 0.0
      %3199 = vmatpush1.msra.mxu0 0.0
      %3200 = vmatprep.subr.mxu0 0.0
      %3201 = vmatpush1.msra.mxu0 0.0
      %3202 = vmatprep.subr.mxu0 0.0
      %3203 = vmatpush1.msra.mxu0 0.0
      %3204 = vmatprep.subr.mxu0 0.0
      %3205 = vmatpush1.msra.mxu0 0.0
      %3206 = vmatprep.subr.mxu0 0.0
      %3207 = vmatpush1.msra.mxu0 0.0
      %3208 = vmatprep.subr.mxu0 0.0
      %3209 = vmatpush1.msra.mxu0 0.0
      %3210 = vmatprep.subr.mxu0 0.0
      %3211 = vmatpush1.msra.mxu0 0.0
      %3212 = vmatprep.subr.mxu0 0.0
      %3213 = vmatpush1.msra.mxu0 0.0
      %3214 = vmatprep.subr.mxu0 0.0
      %3215 = vmatpush1.msra.mxu0 0.0
      %3216 = vmatprep.subr.mxu0 0.0
      %3217 = vmatpush1.msra.mxu0 0.0
      %3218 = vmatprep.subr.mxu0 0.0
      %3219 = vmatpush1.msra.mxu0 0.0
      %3220 = vmatprep.subr.mxu0 0.0
      %3221 = vmatpush1.msra.mxu0 0.0
      %3222 = vmatprep.subr.mxu0 0.0
      %3223 = vmatpush1.msra.mxu0 0.0
      %3224 = vmatprep.mubr.f32.mxu0 0.0
      %3225 = vmatmul.mubr.f32.gmra.mrb[0].mxu0 %v1702
      %v3226 = vpop.f32.mrb[0].mxu0
      %v3227 = vadd.f32 0.0, %v3226
      %v3228 = vpop.f32.mrb[0].mxu0
      %v3229 = vadd.f32 0.0, %v3228
      %3230 = vdwg.mxu0
      %v3231 = vadd.f32 %v3150, %v3227
      %v3232 = vadd.f32 %v3151, %v3229
      %3233 = vrot.lane.b32.xlu0 %v2595, 111
      %v3234 = vpop.permute.xlu0 %3233
      %3235 = vrot.lane.b32.xlu0 %v2596, 111
      %v3236 = vpop.permute.xlu0 %3235
      %v3237 = vsel %vm1010, %v3234, %v3236
      %v3238 = vsel %vm1010, %v3236, %v3234
      %v3239 = vmul.f32 %v3237, %v1017
      %v3240 = vmul.f32 %v3238, %v1021
      %3241 = vmatprep.subr.mxu0 %v3240
      %3242 = vmatpush1.msra.mxu0 %v3239
      %3243 = vmatprep.subr.mxu0 0.0
      %3244 = vmatpush1.msra.mxu0 0.0
      %3245 = vmatprep.subr.mxu0 0.0
      %3246 = vmatpush1.msra.mxu0 0.0
      %3247 = vmatprep.subr.mxu0 0.0
      %3248 = vmatpush1.msra.mxu0 0.0
      %3249 = vmatprep.subr.mxu0 0.0
      %3250 = vmatpush1.msra.mxu0 0.0
      %3251 = vmatprep.subr.mxu0 0.0
      %3252 = vmatpush1.msra.mxu0 0.0
      %3253 = vmatprep.subr.mxu0 0.0
      %3254 = vmatpush1.msra.mxu0 0.0
      %3255 = vmatprep.subr.mxu0 0.0
      %3256 = vmatpush1.msra.mxu0 0.0
      %3257 = vmatprep.subr.mxu0 0.0
      %3258 = vmatpush1.msra.mxu0 0.0
      %3259 = vmatprep.subr.mxu0 0.0
      %3260 = vmatpush1.msra.mxu0 0.0
      %3261 = vmatprep.subr.mxu0 0.0
      %3262 = vmatpush1.msra.mxu0 0.0
      %3263 = vmatprep.subr.mxu0 0.0
      %3264 = vmatpush1.msra.mxu0 0.0
      %3265 = vmatprep.subr.mxu0 0.0
      %3266 = vmatpush1.msra.mxu0 0.0
      %3267 = vmatprep.subr.mxu0 0.0
      %3268 = vmatpush1.msra.mxu0 0.0
      %3269 = vmatprep.subr.mxu0 0.0
      %3270 = vmatpush1.msra.mxu0 0.0
      %3271 = vmatprep.subr.mxu0 0.0
      %3272 = vmatpush1.msra.mxu0 0.0
      %3273 = vmatprep.subr.mxu0 0.0
      %3274 = vmatpush1.msra.mxu0 0.0
      %3275 = vmatprep.subr.mxu0 0.0
      %3276 = vmatpush1.msra.mxu0 0.0
      %3277 = vmatprep.subr.mxu0 0.0
      %3278 = vmatpush1.msra.mxu0 0.0
      %3279 = vmatprep.subr.mxu0 0.0
      %3280 = vmatpush1.msra.mxu0 0.0
      %3281 = vmatprep.subr.mxu0 0.0
      %3282 = vmatpush1.msra.mxu0 0.0
      %3283 = vmatprep.subr.mxu0 0.0
      %3284 = vmatpush1.msra.mxu0 0.0
      %3285 = vmatprep.subr.mxu0 0.0
      %3286 = vmatpush1.msra.mxu0 0.0
      %3287 = vmatprep.subr.mxu0 0.0
      %3288 = vmatpush1.msra.mxu0 0.0
      %3289 = vmatprep.subr.mxu0 0.0
      %3290 = vmatpush1.msra.mxu0 0.0
      %3291 = vmatprep.subr.mxu0 0.0
      %3292 = vmatpush1.msra.mxu0 0.0
      %3293 = vmatprep.subr.mxu0 0.0
      %3294 = vmatpush1.msra.mxu0 0.0
      %3295 = vmatprep.subr.mxu0 0.0
      %3296 = vmatpush1.msra.mxu0 0.0
      %3297 = vmatprep.subr.mxu0 0.0
      %3298 = vmatpush1.msra.mxu0 0.0
      %3299 = vmatprep.subr.mxu0 0.0
      %3300 = vmatpush1.msra.mxu0 0.0
      %3301 = vmatprep.subr.mxu0 0.0
      %3302 = vmatpush1.msra.mxu0 0.0
      %3303 = vmatprep.subr.mxu0 0.0
      %3304 = vmatpush1.msra.mxu0 0.0
      %3305 = vmatprep.mubr.f32.mxu0 0.0
      %3306 = vmatmul.mubr.f32.gmra.mrb[0].mxu0 %v1786
      %v3307 = vpop.f32.mrb[0].mxu0
      %v3308 = vadd.f32 0.0, %v3307
      %v3309 = vpop.f32.mrb[0].mxu0
      %v3310 = vadd.f32 0.0, %v3309
      %3311 = vdwg.mxu0
      %v3312 = vadd.f32 %v3231, %v3308
      %v3313 = vadd.f32 %v3232, %v3310
      %v3314 = vadd.f32 %v1872, %v3312
      %v3315 = vadd.f32 %v1873, %v3313
      %v3316 = vadd.f32 %v3314, %v1865
      %v3317 = vadd.f32 %v3315, %v1865
      %s3318 = scalar_lea.vmem %s204, 16
      %3319 = vst [vmem:[%s3318] sm:$0xff] %v3316
      %3320 = vst [vmem:[%s3318 + $0x8] sm:$0xff] %v3317
      %s3321 = smul.u32 2, %s15
      %p3322 = scmp.lt.s32.totalorder %s3321, 7
      %s3323 = scalar_select %p3322, %s3321, 7
      %s3324 = smul.addr %s3323, 2
      %s3325 = smul.addr %s3324, 8
      %s3326 = scalar_lea.vmem %s4, %s3325
      // Predicated region
      $region37: #{_lambda_.1} parent=35 // pred_check
        %p3327 = pneg %p122
      $region38: #{_lambda_.1} parent=35 // pred_check_branch
        %3329 = sbr.rel (%p3327) target = $region40
      $region39: #{_lambda_.1} parent=35 // pred_region
        %s3330 = smul.u32 2, %s15
      $region40: #{_lambda_.1} parent=35 // pred_fallthru
        _
    $region36: #{_lambda_.1} parent=5 // pred_fallthru
      _
    %p3331 = scmp.le.s32.totalorder 2, %s10
    // Predicated region
    $region41: #{_lambda_.1} parent=5 // pred_check
      %p3332 = pneg %p3331
    $region42: #{_lambda_.1} parent=5 // pred_check_branch
      %3334 = sbr.rel (%p3332) target = $region44
    $region43: #{_lambda_.1} parent=5 // pred_region
      %s3335 = ssub.s32 %s10, 2
      // Predicated region
      $region45: #{_lambda_.1} parent=43 // pred_check
        %p3336 = pneg %p128
      $region46: #{_lambda_.1} parent=43 // pred_check_branch
        %3338 = sbr.rel (%p3336) target = $region48
      $region47: #{_lambda_.1} parent=43 // pred_region
        %s3339 = smul.u32 2, %s16
        %p3340 = scmp.lt.s32.totalorder %s3339, 7
        %s3341 = scalar_select %p3340, %s3339, 7
        %s3342 = smul.addr %s3341, 2
        %s3343 = smul.addr %s3342, 8
        %s3344 = scalar_lea.vmem %s4, %s3343
      $region48: #{_lambda_.1} parent=43 // pred_fallthru
        _
    $region44: #{_lambda_.1} parent=5 // pred_fallthru
      _
  $region6: #{_lambda_.1} parent=0 // loop_footer
    %s14 = sadd.s32 1, %s10
  $region7: #{_lambda_.1} parent=0 // loop_footer_branch
    %9 = sbr.rel target = $region3
  $region8: #{_lambda_.1} parent=0 // loop_exit
    _

</llo_original>
